<compile_context>
chip_gen: v7x
topology: tpu7x:2x2x1
jax: 0.10.0
libtpu: 0.0.40
codegen_flags: <defaults>
</compile_context>

<pallas_src>
import functools

import jax
import jax.numpy as jnp
from jax import lax
from jax.experimental import pallas as pl
from jax.experimental.pallas import tpu as pltpu

LANE = 128
SUBLANE = 8


def _round_up(x, m):
    return ((x + m - 1) // m) * m


# ------------------------------ fused kernel --------------------------------


def _gru_forward_kernel(n_layers, num_dirs, T, Bp, H, Hp, Gp,
                        x_ref, len_ref, *refs):
    """Fused forward: per-layer input projection + (bi)dir recurrence + FC.

    x_ref:   (T*Bp, Ep) bf16   time-major embedded input (row t*Bp+b)
    len_ref: (Bp, 1)   int32   sequence lengths (0 for padded batch rows)
    per layer: wih (in_p, num_dirs*Gp) bf16, bih (1, num_dirs*Gp) f32,
               num_dirs x whh (Hp, Gp) bf16, num_dirs x bhn (1, Gp) f32
    fc_w:    (num_dirs*Hp, Fp) bf16, fc_b (1, Fp) f32
    pred_ref:(Bp, Fp) f32 output
    seq_ref: (T*Bp, num_dirs*Hp) f32 VMEM scratch (inter-layer activations)
    """
    # ---- unpack refs -------------------------------------------------------
    layers = []
    idx = 0
    for _ in range(n_layers):
        wih = refs[idx]
        bih = refs[idx + 1]
        whh = refs[idx + 2: idx + 2 + num_dirs]
        bhn = refs[idx + 2 + num_dirs: idx + 2 + 2 * num_dirs]
        layers.append((wih, bih, whh, bhn))
        idx += 2 + 2 * num_dirs
    fcw_ref = refs[idx]
    fcb_ref = refs[idx + 1]
    pred_ref = refs[idx + 2]
    seq_ref = refs[idx + 3] if n_layers > 1 else None

    lens = len_ref[...]                                        # (Bp, 1) int32
    # mask of real hidden lanes (keeps pad lanes exactly zero every step)
    hmask = lax.broadcasted_iota(jnp.int32, (Bp, Hp), 1) < H   # (Bp, Hp) bool

    # packed-gate lane rotations: gates live at offsets [0,H)=r, [H,2H)=z,
    # [2H,3H)=n inside the Gp-lane tile.
    sh_r_to_n = (2 * H) % Gp        # align r with the n lanes
    sh_z_to_0 = (Gp - H) % Gp       # align z to lane 0
    sh_n_to_0 = (Gp - 2 * H) % Gp   # align n to lane 0

    h_last = []
    for l, (wih_ref, bih_ref, whh_refs, bhn_refs) in enumerate(layers):
        if l == 0:
            xin = x_ref[...]                                   # bf16
        else:
            xin = seq_ref[...].astype(jnp.bfloat16)
        # Hoisted input projection: every timestep x every direction in one
        # MXU pass.  b_ih (+ folded b_hr, b_hz) already in bih.
        gx = jnp.dot(xin, wih_ref[...],
                     preferred_element_type=jnp.float32) + bih_ref[...]

        h_last = []
        for d in range(num_dirs):
            whh = whh_refs[d][...]                             # (Hp, Gp) bf16
            # b_hn broadcast hoisted out of the unrolled time loop
            bhn = jnp.broadcast_to(bhn_refs[d][...], (Bp, Gp)) # (Bp, Gp) f32
            h = jnp.zeros((Bp, Hp), jnp.float32)

            # TODO(synk): for long sequences switch to a time-chunk grid axis
            # (pipelined gx loads / seq stores); at T=8 a static unroll with
            # everything VMEM-resident is cheapest.
            for s in range(T):
                t = s if d == 0 else T - 1 - s
                gx_t = gx[t * Bp:(t + 1) * Bp, d * Gp:(d + 1) * Gp]
                # TODO(synk): could stage whh in MXU weight regs across steps
                # via pltpu.matmul_push_rhs/acc_lhs/pop.
                gh = jnp.dot(h.astype(jnp.bfloat16), whh,
                             preferred_element_type=jnp.float32) + bhn
                a = jax.nn.sigmoid(gx_t + gh)       # r @ [0,H), z @ [H,2H)
                r_at_n = pltpu.roll(a, sh_r_to_n, axis=1)
                n_full = jnp.tanh(gx_t + r_at_n * gh)          # n @ [2H,3H)
                z0 = pltpu.roll(a, sh_z_to_0, axis=1)[:, :Hp]
                n0 = pltpu.roll(n_full, sh_n_to_0, axis=1)[:, :Hp]
                h_new = (1.0 - z0) * n0 + z0 * h
                # update only valid timesteps and real hidden lanes
                h = jnp.where(jnp.logical_and(hmask, t < lens), h_new, h)
                if l < n_layers - 1:
                    # direct lane/sublane-aligned per-step store; last layer's
                    # per-step outputs are never consumed -> skipped.
                    seq_ref[t * Bp:(t + 1) * Bp, d * Hp:(d + 1) * Hp] = h
            h_last.append(h)

    # final linear on [fwd final | bwd final] (== torch.cat([hidden[-2], hidden[-1]]))
    pred = jnp.broadcast_to(fcb_ref[...], (Bp, fcb_ref.shape[-1]))
    for d in range(num_dirs):
        pred = pred + jnp.dot(h_last[d].astype(jnp.bfloat16),
                              fcw_ref[d * Hp:(d + 1) * Hp, :],
                              preferred_element_type=jnp.float32)
    pred_ref[...] = pred


# ------------------------------ params --------------------------------------


def init_params(key, vocab_size, embedding_dim, hidden_dim, output_dim,
                n_layers, bidirectional, pad_index):
    num_dirs = 2 if bidirectional else 1
    H = hidden_dim
    Hp = _round_up(H, LANE)
    Gp = _round_up(3 * H, LANE)          # packed gates: [r|z|n] in one tile
    Ep = _round_up(embedding_dim, LANE)
    Fp = _round_up(output_dim, LANE)
    scale = 1.0 / float(H) ** 0.5

    keys = iter(jax.random.split(key, 3 + 4 * n_layers * num_dirs))

    emb = 0.1 * jax.random.normal(next(keys), (vocab_size, embedding_dim),
                                  jnp.float32)
    emb = emb.at[pad_index].set(0.0)                 # padding_idx row is zero
    emb_p = jnp.zeros((vocab_size, Ep), jnp.float32).at[:, :embedding_dim].set(emb)

    def uniform(shape, s=scale):
        return jax.random.uniform(next(keys), shape, jnp.float32, -s, s)

    gru_layers = []
    for layer in range(n_layers):
        in_dim = embedding_dim if layer == 0 else H * num_dirs
        in_p = Ep if layer == 0 else num_dirs * Hp
        wih_cat = jnp.zeros((in_p, num_dirs * Gp), jnp.float32)
        bih_cat = jnp.zeros((1, num_dirs * Gp), jnp.float32)
        whh_l, bhn_l = [], []
        for d in range(num_dirs):
            w_ih = uniform((3 * H, in_dim))          # torch layout, gates [r,z,n]
            w_hh = uniform((3 * H, H))
            b_ih = uniform((3 * H,))
            b_hh = uniform((3 * H,))

            wih_t = w_ih.T                           # (in_dim, 3H)
            col0 = d * Gp
            for g in range(3):
                blk = wih_t[:, g * H:(g + 1) * H]
                if layer == 0:
                    wih_cat = wih_cat.at[:in_dim,
                                         col0 + g * H: col0 + (g + 1) * H].set(blk)
                else:
                    # input rows are the previous layer's [fwd | bwd] hidden,
                    # each direction lane-padded to Hp
                    for dd in range(num_dirs):
                        wih_cat = wih_cat.at[dd * Hp: dd * Hp + H,
                                             col0 + g * H: col0 + (g + 1) * H].set(
                            blk[dd * H:(dd + 1) * H, :])
                bg = b_ih[g * H:(g + 1) * H]
                if g < 2:                            # fold b_hr / b_hz into bih
                    bg = bg + b_hh[g * H:(g + 1) * H]
                bih_cat = bih_cat.at[0, col0 + g * H: col0 + (g + 1) * H].set(bg)

            whh_p = jnp.zeros((Hp, Gp), jnp.float32).at[:H, :3 * H].set(w_hh.T)
            whh_l.append(whh_p.astype(jnp.bfloat16))
            bhn_p = jnp.zeros((1, Gp), jnp.float32)
            bhn_p = bhn_p.at[0, 2 * H:3 * H].set(b_hh[2 * H:3 * H])  # b_hn only
            bhn_l.append(bhn_p)

        gru_layers.append({
            "wih": wih_cat.astype(jnp.bfloat16),     # (in_p, num_dirs*Gp)
            "bih": bih_cat,                          # (1,    num_dirs*Gp) f32
            "whh": whh_l,                            # num_dirs x (Hp, Gp) bf16
            "bhn": bhn_l,                            # num_dirs x (1, Gp)  f32
        })

    fc_in = H * num_dirs
    fc_scale = 1.0 / float(fc_in) ** 0.5
    fc_w = uniform((output_dim, fc_in), fc_scale)
    fc_b = uniform((output_dim,), fc_scale)
    fc_w_p = jnp.zeros((num_dirs * Hp, Fp), jnp.float32)
    for d in range(num_dirs):
        fc_w_p = fc_w_p.at[d * Hp: d * Hp + H, :output_dim].set(
            fc_w.T[d * H:(d + 1) * H, :])
    fc_b_p = jnp.zeros((1, Fp), jnp.float32).at[0, :output_dim].set(fc_b)

    return {"embedding": emb_p, "gru": gru_layers,
            "fc_w": fc_w_p.astype(jnp.bfloat16), "fc_b": fc_b_p}


# ------------------------------ wrapper --------------------------------------


@functools.partial(jax.jit, static_argnames=("n_layers", "bidirectional",
                                             "hidden_dim", "output_dim"))
def gru_forward(params, ids, length, *, n_layers, bidirectional, hidden_dim,
                output_dim):
    """ids: (B, T) int32, length: (B,) int32 -> prediction (B, output_dim)."""
    num_dirs = 2 if bidirectional else 1
    B, T = ids.shape
    Bp = _round_up(B, SUBLANE)
    H = hidden_dim
    Hp = _round_up(H, LANE)
    Gp = _round_up(3 * H, LANE)
    Ep = params["embedding"].shape[1]
    Fp = params["fc_b"].shape[1]

    # Embedding gather straight from the lane-padded table, already time-major.
    # Dropout is eval-mode identity.
    # TODO(synk): could move the gather in-kernel via scalar-prefetched ids.
    x = params["embedding"][ids.T]                         # (T, B, Ep)
    x = jnp.pad(x, ((0, 0), (0, Bp - B), (0, 0)))          # sublane-pad batch
    x2d = x.reshape(T * Bp, Ep).astype(jnp.bfloat16)
    lens = jnp.pad(length.astype(jnp.int32), (0, Bp - B)).reshape(Bp, 1)

    ins = [x2d, lens]
    in_specs = [pl.BlockSpec((T * Bp, Ep), lambda: (0, 0)),
                pl.BlockSpec((Bp, 1), lambda: (0, 0))]
    for lp in params["gru"]:
        ins += [lp["wih"], lp["bih"]] + list(lp["whh"]) + list(lp["bhn"])
        in_specs += [pl.BlockSpec(lp["wih"].shape, lambda: (0, 0)),
                     pl.BlockSpec(lp["bih"].shape, lambda: (0, 0))]
        in_specs += [pl.BlockSpec((Hp, Gp), lambda: (0, 0))
                     for _ in range(num_dirs)]
        in_specs += [pl.BlockSpec((1, Gp), lambda: (0, 0))
                     for _ in range(num_dirs)]
    ins += [params["fc_w"], params["fc_b"]]
    in_specs += [pl.BlockSpec(params["fc_w"].shape, lambda: (0, 0)),
                 pl.BlockSpec(params["fc_b"].shape, lambda: (0, 0))]

    scratch = ([pltpu.VMEM((T * Bp, num_dirs * Hp), jnp.float32)]
               if n_layers > 1 else [])

    # TODO(synk): on v7x the two directions could be split across both
    # TensorCores (parallel grid axis) at the cost of un-fusing the layers.
    pred_p = pl.pallas_call(
        functools.partial(_gru_forward_kernel, n_layers, num_dirs, T, Bp,
                          H, Hp, Gp),
        out_shape=jax.ShapeDtypeStruct((Bp, Fp), jnp.float32),
        in_specs=in_specs,
        out_specs=pl.BlockSpec((Bp, Fp), lambda: (0, 0)),
        scratch_shapes=scratch,
        grid=(),
    )(*ins)
    return pred_p[:B, :output_dim]


# --------------------------------- main --------------------------------------

if __name__ == "__main__":
    vocab_size = 50
    embedding_dim = 16
    hidden_dim = 32
    output_dim = 4
    n_layers = 2
    bidirectional = True
    dropout_rate = 0.0   # eval mode -> identity
    pad_index = 0

    B, T = 2, 8

    key = jax.random.PRNGKey(0)
    pkey, ikey = jax.random.split(key)
    params = init_params(pkey, vocab_size, embedding_dim, hidden_dim,
                         output_dim, n_layers, bidirectional, pad_index)

    length = jnp.array([8, 5], dtype=jnp.int32)
    ids = jax.random.randint(ikey, (B, T), 1, vocab_size, dtype=jnp.int32)
    # zero-out padded positions with pad_index (as a padded batch would have)
    pad_mask = jnp.arange(T)[None, :] < length[:, None]
    ids = jnp.where(pad_mask, ids, pad_index)

    pred = gru_forward(params, ids, length, n_layers=n_layers,
                       bidirectional=bidirectional, hidden_dim=hidden_dim,
                       output_dim=output_dim)
    jax.block_until_ready(pred)
    assert pred.shape == (B, output_dim)
    assert bool(jnp.all(jnp.isfinite(pred)))
    print("KERNEL_OK")
</pallas_src>

<mosaic_0001>
module attributes {stable_mosaic.version = 11 : i64} {
  func.func @_gru_forward_kernel(%arg0: memref<64x128xbf16, #tpu.memory_space<vmem>>, %arg1: memref<8x1xi32, #tpu.memory_space<vmem>>, %arg2: memref<128x256xbf16, #tpu.memory_space<vmem>>, %arg3: memref<1x256xf32, #tpu.memory_space<vmem>>, %arg4: memref<128x128xbf16, #tpu.memory_space<vmem>>, %arg5: memref<128x128xbf16, #tpu.memory_space<vmem>>, %arg6: memref<1x128xf32, #tpu.memory_space<vmem>>, %arg7: memref<1x128xf32, #tpu.memory_space<vmem>>, %arg8: memref<256x256xbf16, #tpu.memory_space<vmem>>, %arg9: memref<1x256xf32, #tpu.memory_space<vmem>>, %arg10: memref<128x128xbf16, #tpu.memory_space<vmem>>, %arg11: memref<128x128xbf16, #tpu.memory_space<vmem>>, %arg12: memref<1x128xf32, #tpu.memory_space<vmem>>, %arg13: memref<1x128xf32, #tpu.memory_space<vmem>>, %arg14: memref<256x128xbf16, #tpu.memory_space<vmem>>, %arg15: memref<1x128xf32, #tpu.memory_space<vmem>>, %arg16: memref<8x128xf32, #tpu.memory_space<vmem>>, %arg17: memref<64x256xf32, #tpu.memory_space<vmem>>) attributes {dimension_semantics = [], scalar_prefetch = 0 : i64, scratch_operands = 1 : i64, tpu.core_type = #tpu.core_type<tc>} {
    %c0 = arith.constant 0 : index
    %c0_0 = arith.constant 0 : index
    %0 = vector.load %arg1[%c0, %c0_0] : memref<8x1xi32, #tpu.memory_space<vmem>>, vector<8x1xi32>
    %1 = tpu.iota {dimensions = array<i32: 1>} : vector<8x128xi32>
    %c32_i32 = arith.constant 32 : i32
    %2 = vector.broadcast %c32_i32 : i32 to vector<8x128xi32>
    %3 = arith.cmpi slt, %1, %2 : vector<8x128xi32>
    %c0_1 = arith.constant 0 : index
    %c0_2 = arith.constant 0 : index
    %4 = vector.load %arg0[%c0_1, %c0_2] : memref<64x128xbf16, #tpu.memory_space<vmem>>, vector<64x128xbf16>
    %c0_3 = arith.constant 0 : index
    %c0_4 = arith.constant 0 : index
    %5 = vector.load %arg2[%c0_3, %c0_4] : memref<128x256xbf16, #tpu.memory_space<vmem>>, vector<128x256xbf16>
    %cst = arith.constant dense<0.000000e+00> : vector<64x256xf32>
    %6 = tpu.matmul %4, %5, %cst {dimension_numbers = #tpu.dot_dimension_numbers<[1], [0], [0], [1], [0, 0, 1, 1], [], []>} : vector<64x128xbf16>, vector<128x256xbf16>, vector<64x256xf32> -> vector<64x256xf32>
    %c0_5 = arith.constant 0 : index
    %c0_6 = arith.constant 0 : index
    %7 = vector.load %arg3[%c0_5, %c0_6] : memref<1x256xf32, #tpu.memory_space<vmem>>, vector<1x256xf32>
    %8 = vector.broadcast %7 : vector<1x256xf32> to vector<64x256xf32>
    %9 = arith.addf %6, %8 : vector<64x256xf32>
    %c0_7 = arith.constant 0 : index
    %c0_8 = arith.constant 0 : index
    %10 = vector.load %arg4[%c0_7, %c0_8] : memref<128x128xbf16, #tpu.memory_space<vmem>>, vector<128x128xbf16>
    %c0_9 = arith.constant 0 : index
    %c0_10 = arith.constant 0 : index
    %11 = vector.load %arg6[%c0_9, %c0_10] : memref<1x128xf32, #tpu.memory_space<vmem>>, vector<1x128xf32>
    %12 = vector.shape_cast %11 : vector<1x128xf32> to vector<1x128xf32>
    %13 = vector.broadcast %12 : vector<1x128xf32> to vector<8x128xf32>
    %cst_11 = arith.constant 0.000000e+00 : f32
    %14 = vector.broadcast %cst_11 : f32 to vector<8x128xf32>
    %15 = vector.extract_strided_slice %9 {offsets = [0, 0], sizes = [8, 128], strides = [1, 1]} : vector<64x256xf32> to vector<8x128xf32>
    %16 = arith.truncf %14 : vector<8x128xf32> to vector<8x128xbf16>
    %cst_12 = arith.constant dense<0.000000e+00> : vector<8x128xf32>
    %17 = tpu.matmul %16, %10, %cst_12 {dimension_numbers = #tpu.dot_dimension_numbers<[1], [0], [0], [1], [0, 0, 1, 1], [], []>} : vector<8x128xbf16>, vector<128x128xbf16>, vector<8x128xf32> -> vector<8x128xf32>
    %18 = arith.addf %17, %13 : vector<8x128xf32>
    %19 = arith.addf %15, %18 : vector<8x128xf32>
    %20 = arith.negf %19 : vector<8x128xf32>
    %21 = math.exp %20 : vector<8x128xf32>
    %cst_13 = arith.constant 1.000000e+00 : f32
    %22 = vector.broadcast %cst_13 : f32 to vector<8x128xf32>
    %23 = arith.addf %22, %21 : vector<8x128xf32>
    %24 = arith.divf %22, %23 : vector<8x128xf32>
    %c64_i32 = arith.constant 64 : i32
    %25 = tpu.dynamic_rotate %24 by %c64_i32 dim 1 : vector<8x128xf32>, i32 -> vector<8x128xf32>
    %26 = arith.mulf %25, %18 : vector<8x128xf32>
    %27 = arith.addf %15, %26 : vector<8x128xf32>
    %28 = math.tanh %27 : vector<8x128xf32>
    %c96_i32 = arith.constant 96 : i32
    %29 = tpu.dynamic_rotate %24 by %c96_i32 dim 1 : vector<8x128xf32>, i32 -> vector<8x128xf32>
    %c64_i32_14 = arith.constant 64 : i32
    %30 = tpu.dynamic_rotate %28 by %c64_i32_14 dim 1 : vector<8x128xf32>, i32 -> vector<8x128xf32>
    %cst_15 = arith.constant 1.000000e+00 : f32
    %31 = vector.broadcast %cst_15 : f32 to vector<8x128xf32>
    %32 = arith.subf %31, %29 : vector<8x128xf32>
    %33 = arith.mulf %32, %30 : vector<8x128xf32>
    %34 = arith.mulf %29, %14 : vector<8x128xf32>
    %35 = arith.addf %33, %34 : vector<8x128xf32>
    %c0_i32 = arith.constant 0 : i32
    %36 = vector.broadcast %c0_i32 : i32 to vector<8x1xi32>
    %37 = arith.cmpi sgt, %0, %36 : vector<8x1xi32>
    %38 = vector.broadcast %37 : vector<8x1xi1> to vector<8x128xi1>
    %39 = arith.andi %3, %38 : vector<8x128xi1>
    %40 = arith.select %39, %35, %14 : vector<8x128xi1>, vector<8x128xf32>
    %c0_16 = arith.constant 0 : index
    %c0_17 = arith.constant 0 : index
    %41 = vector.load %arg17[%c0_16, %c0_17] : memref<64x256xf32, #tpu.memory_space<vmem>>, vector<8x128xf32>
    tpu.vector_store %arg17[%c0_16, %c0_17], %40 {strides = array<i32>} : memref<64x256xf32, #tpu.memory_space<vmem>>, vector<8x128xf32>,
    %42 = vector.extract_strided_slice %9 {offsets = [8, 0], sizes = [8, 128], strides = [1, 1]} : vector<64x256xf32> to vector<8x128xf32>
    %43 = arith.truncf %40 : vector<8x128xf32> to vector<8x128xbf16>
    %cst_18 = arith.constant dense<0.000000e+00> : vector<8x128xf32>
    %44 = tpu.matmul %43, %10, %cst_18 {dimension_numbers = #tpu.dot_dimension_numbers<[1], [0], [0], [1], [0, 0, 1, 1], [], []>} : vector<8x128xbf16>, vector<128x128xbf16>, vector<8x128xf32> -> vector<8x128xf32>
    %45 = arith.addf %44, %13 : vector<8x128xf32>
    %46 = arith.addf %42, %45 : vector<8x128xf32>
    %47 = arith.negf %46 : vector<8x128xf32>
    %48 = math.exp %47 : vector<8x128xf32>
    %cst_19 = arith.constant 1.000000e+00 : f32
    %49 = vector.broadcast %cst_19 : f32 to vector<8x128xf32>
    %50 = arith.addf %49, %48 : vector<8x128xf32>
    %51 = arith.divf %49, %50 : vector<8x128xf32>
    %c64_i32_20 = arith.constant 64 : i32
    %52 = tpu.dynamic_rotate %51 by %c64_i32_20 dim 1 : vector<8x128xf32>, i32 -> vector<8x128xf32>
    %53 = arith.mulf %52, %45 : vector<8x128xf32>
    %54 = arith.addf %42, %53 : vector<8x128xf32>
    %55 = math.tanh %54 : vector<8x128xf32>
    %c96_i32_21 = arith.constant 96 : i32
    %56 = tpu.dynamic_rotate %51 by %c96_i32_21 dim 1 : vector<8x128xf32>, i32 -> vector<8x128xf32>
    %c64_i32_22 = arith.constant 64 : i32
    %57 = tpu.dynamic_rotate %55 by %c64_i32_22 dim 1 : vector<8x128xf32>, i32 -> vector<8x128xf32>
    %cst_23 = arith.constant 1.000000e+00 : f32
    %58 = vector.broadcast %cst_23 : f32 to vector<8x128xf32>
    %59 = arith.subf %58, %56 : vector<8x128xf32>
    %60 = arith.mulf %59, %57 : vector<8x128xf32>
    %61 = arith.mulf %56, %40 : vector<8x128xf32>
    %62 = arith.addf %60, %61 : vector<8x128xf32>
    %c1_i32 = arith.constant 1 : i32
    %63 = vector.broadcast %c1_i32 : i32 to vector<8x1xi32>
    %64 = arith.cmpi sgt, %0, %63 : vector<8x1xi32>
    %65 = vector.broadcast %64 : vector<8x1xi1> to vector<8x128xi1>
    %66 = arith.andi %3, %65 : vector<8x128xi1>
    %67 = arith.select %66, %62, %40 : vector<8x128xi1>, vector<8x128xf32>
    %c8 = arith.constant 8 : index
    %c0_24 = arith.constant 0 : index
    %68 = vector.load %arg17[%c8, %c0_24] : memref<64x256xf32, #tpu.memory_space<vmem>>, vector<8x128xf32>
    tpu.vector_store %arg17[%c8, %c0_24], %67 {strides = array<i32>} : memref<64x256xf32, #tpu.memory_space<vmem>>, vector<8x128xf32>,
    %69 = vector.extract_strided_slice %9 {offsets = [16, 0], sizes = [8, 128], strides = [1, 1]} : vector<64x256xf32> to vector<8x128xf32>
    %70 = arith.truncf %67 : vector<8x128xf32> to vector<8x128xbf16>
    %cst_25 = arith.constant dense<0.000000e+00> : vector<8x128xf32>
    %71 = tpu.matmul %70, %10, %cst_25 {dimension_numbers = #tpu.dot_dimension_numbers<[1], [0], [0], [1], [0, 0, 1, 1], [], []>} : vector<8x128xbf16>, vector<128x128xbf16>, vector<8x128xf32> -> vector<8x128xf32>
    %72 = arith.addf %71, %13 : vector<8x128xf32>
    %73 = arith.addf %69, %72 : vector<8x128xf32>
    %74 = arith.negf %73 : vector<8x128xf32>
    %75 = math.exp %74 : vector<8x128xf32>
    %cst_26 = arith.constant 1.000000e+00 : f32
    %76 = vector.broadcast %cst_26 : f32 to vector<8x128xf32>
    %77 = arith.addf %76, %75 : vector<8x128xf32>
    %78 = arith.divf %76, %77 : vector<8x128xf32>
    %c64_i32_27 = arith.constant 64 : i32
    %79 = tpu.dynamic_rotate %78 by %c64_i32_27 dim 1 : vector<8x128xf32>, i32 -> vector<8x128xf32>
    %80 = arith.mulf %79, %72 : vector<8x128xf32>
    %81 = arith.addf %69, %80 : vector<8x128xf32>
    %82 = math.tanh %81 : vector<8x128xf32>
    %c96_i32_28 = arith.constant 96 : i32
    %83 = tpu.dynamic_rotate %78 by %c96_i32_28 dim 1 : vector<8x128xf32>, i32 -> vector<8x128xf32>
    %c64_i32_29 = arith.constant 64 : i32
    %84 = tpu.dynamic_rotate %82 by %c64_i32_29 dim 1 : vector<8x128xf32>, i32 -> vector<8x128xf32>
    %cst_30 = arith.constant 1.000000e+00 : f32
    %85 = vector.broadcast %cst_30 : f32 to vector<8x128xf32>
    %86 = arith.subf %85, %83 : vector<8x128xf32>
    %87 = arith.mulf %86, %84 : vector<8x128xf32>
    %88 = arith.mulf %83, %67 : vector<8x128xf32>
    %89 = arith.addf %87, %88 : vector<8x128xf32>
    %c2_i32 = arith.constant 2 : i32
    %90 = vector.broadcast %c2_i32 : i32 to vector<8x1xi32>
    %91 = arith.cmpi sgt, %0, %90 : vector<8x1xi32>
    %92 = vector.broadcast %91 : vector<8x1xi1> to vector<8x128xi1>
    %93 = arith.andi %3, %92 : vector<8x128xi1>
    %94 = arith.select %93, %89, %67 : vector<8x128xi1>, vector<8x128xf32>
    %c16 = arith.constant 16 : index
    %c0_31 = arith.constant 0 : index
    %95 = vector.load %arg17[%c16, %c0_31] : memref<64x256xf32, #tpu.memory_space<vmem>>, vector<8x128xf32>
    tpu.vector_store %arg17[%c16, %c0_31], %94 {strides = array<i32>} : memref<64x256xf32, #tpu.memory_space<vmem>>, vector<8x128xf32>,
    %96 = vector.extract_strided_slice %9 {offsets = [24, 0], sizes = [8, 128], strides = [1, 1]} : vector<64x256xf32> to vector<8x128xf32>
    %97 = arith.truncf %94 : vector<8x128xf32> to vector<8x128xbf16>
    %cst_32 = arith.constant dense<0.000000e+00> : vector<8x128xf32>
    %98 = tpu.matmul %97, %10, %cst_32 {dimension_numbers = #tpu.dot_dimension_numbers<[1], [0], [0], [1], [0, 0, 1, 1], [], []>} : vector<8x128xbf16>, vector<128x128xbf16>, vector<8x128xf32> -> vector<8x128xf32>
    %99 = arith.addf %98, %13 : vector<8x128xf32>
    %100 = arith.addf %96, %99 : vector<8x128xf32>
    %101 = arith.negf %100 : vector<8x128xf32>
    %102 = math.exp %101 : vector<8x128xf32>
    %cst_33 = arith.constant 1.000000e+00 : f32
    %103 = vector.broadcast %cst_33 : f32 to vector<8x128xf32>
    %104 = arith.addf %103, %102 : vector<8x128xf32>
    %105 = arith.divf %103, %104 : vector<8x128xf32>
    %c64_i32_34 = arith.constant 64 : i32
    %106 = tpu.dynamic_rotate %105 by %c64_i32_34 dim 1 : vector<8x128xf32>, i32 -> vector<8x128xf32>
    %107 = arith.mulf %106, %99 : vector<8x128xf32>
    %108 = arith.addf %96, %107 : vector<8x128xf32>
    %109 = math.tanh %108 : vector<8x128xf32>
    %c96_i32_35 = arith.constant 96 : i32
    %110 = tpu.dynamic_rotate %105 by %c96_i32_35 dim 1 : vector<8x128xf32>, i32 -> vector<8x128xf32>
    %c64_i32_36 = arith.constant 64 : i32
    %111 = tpu.dynamic_rotate %109 by %c64_i32_36 dim 1 : vector<8x128xf32>, i32 -> vector<8x128xf32>
    %cst_37 = arith.constant 1.000000e+00 : f32
    %112 = vector.broadcast %cst_37 : f32 to vector<8x128xf32>
    %113 = arith.subf %112, %110 : vector<8x128xf32>
    %114 = arith.mulf %113, %111 : vector<8x128xf32>
    %115 = arith.mulf %110, %94 : vector<8x128xf32>
    %116 = arith.addf %114, %115 : vector<8x128xf32>
    %c3_i32 = arith.constant 3 : i32
    %117 = vector.broadcast %c3_i32 : i32 to vector<8x1xi32>
    %118 = arith.cmpi sgt, %0, %117 : vector<8x1xi32>
    %119 = vector.broadcast %118 : vector<8x1xi1> to vector<8x128xi1>
    %120 = arith.andi %3, %119 : vector<8x128xi1>
    %121 = arith.select %120, %116, %94 : vector<8x128xi1>, vector<8x128xf32>
    %c24 = arith.constant 24 : index
    %c0_38 = arith.constant 0 : index
    %122 = vector.load %arg17[%c24, %c0_38] : memref<64x256xf32, #tpu.memory_space<vmem>>, vector<8x128xf32>
    tpu.vector_store %arg17[%c24, %c0_38], %121 {strides = array<i32>} : memref<64x256xf32, #tpu.memory_space<vmem>>, vector<8x128xf32>,
    %123 = vector.extract_strided_slice %9 {offsets = [32, 0], sizes = [8, 128], strides = [1, 1]} : vector<64x256xf32> to vector<8x128xf32>
    %124 = arith.truncf %121 : vector<8x128xf32> to vector<8x128xbf16>
    %cst_39 = arith.constant dense<0.000000e+00> : vector<8x128xf32>
    %125 = tpu.matmul %124, %10, %cst_39 {dimension_numbers = #tpu.dot_dimension_numbers<[1], [0], [0], [1], [0, 0, 1, 1], [], []>} : vector<8x128xbf16>, vector<128x128xbf16>, vector<8x128xf32> -> vector<8x128xf32>
    %126 = arith.addf %125, %13 : vector<8x128xf32>
    %127 = arith.addf %123, %126 : vector<8x128xf32>
    %128 = arith.negf %127 : vector<8x128xf32>
    %129 = math.exp %128 : vector<8x128xf32>
    %cst_40 = arith.constant 1.000000e+00 : f32
    %130 = vector.broadcast %cst_40 : f32 to vector<8x128xf32>
    %131 = arith.addf %130, %129 : vector<8x128xf32>
    %132 = arith.divf %130, %131 : vector<8x128xf32>
    %c64_i32_41 = arith.constant 64 : i32
    %133 = tpu.dynamic_rotate %132 by %c64_i32_41 dim 1 : vector<8x128xf32>, i32 -> vector<8x128xf32>
    %134 = arith.mulf %133, %126 : vector<8x128xf32>
    %135 = arith.addf %123, %134 : vector<8x128xf32>
    %136 = math.tanh %135 : vector<8x128xf32>
    %c96_i32_42 = arith.constant 96 : i32
    %137 = tpu.dynamic_rotate %132 by %c96_i32_42 dim 1 : vector<8x128xf32>, i32 -> vector<8x128xf32>
    %c64_i32_43 = arith.constant 64 : i32
    %138 = tpu.dynamic_rotate %136 by %c64_i32_43 dim 1 : vector<8x128xf32>, i32 -> vector<8x128xf32>
    %cst_44 = arith.constant 1.000000e+00 : f32
    %139 = vector.broadcast %cst_44 : f32 to vector<8x128xf32>
    %140 = arith.subf %139, %137 : vector<8x128xf32>
    %141 = arith.mulf %140, %138 : vector<8x128xf32>
    %142 = arith.mulf %137, %121 : vector<8x128xf32>
    %143 = arith.addf %141, %142 : vector<8x128xf32>
    %c4_i32 = arith.constant 4 : i32
    %144 = vector.broadcast %c4_i32 : i32 to vector<8x1xi32>
    %145 = arith.cmpi sgt, %0, %144 : vector<8x1xi32>
    %146 = vector.broadcast %145 : vector<8x1xi1> to vector<8x128xi1>
    %147 = arith.andi %3, %146 : vector<8x128xi1>
    %148 = arith.select %147, %143, %121 : vector<8x128xi1>, vector<8x128xf32>
    %c32 = arith.constant 32 : index
    %c0_45 = arith.constant 0 : index
    %149 = vector.load %arg17[%c32, %c0_45] : memref<64x256xf32, #tpu.memory_space<vmem>>, vector<8x128xf32>
    tpu.vector_store %arg17[%c32, %c0_45], %148 {strides = array<i32>} : memref<64x256xf32, #tpu.memory_space<vmem>>, vector<8x128xf32>,
    %150 = vector.extract_strided_slice %9 {offsets = [40, 0], sizes = [8, 128], strides = [1, 1]} : vector<64x256xf32> to vector<8x128xf32>
    %151 = arith.truncf %148 : vector<8x128xf32> to vector<8x128xbf16>
    %cst_46 = arith.constant dense<0.000000e+00> : vector<8x128xf32>
    %152 = tpu.matmul %151, %10, %cst_46 {dimension_numbers = #tpu.dot_dimension_numbers<[1], [0], [0], [1], [0, 0, 1, 1], [], []>} : vector<8x128xbf16>, vector<128x128xbf16>, vector<8x128xf32> -> vector<8x128xf32>
    %153 = arith.addf %152, %13 : vector<8x128xf32>
    %154 = arith.addf %150, %153 : vector<8x128xf32>
    %155 = arith.negf %154 : vector<8x128xf32>
    %156 = math.exp %155 : vector<8x128xf32>
    %cst_47 = arith.constant 1.000000e+00 : f32
    %157 = vector.broadcast %cst_47 : f32 to vector<8x128xf32>
    %158 = arith.addf %157, %156 : vector<8x128xf32>
    %159 = arith.divf %157, %158 : vector<8x128xf32>
    %c64_i32_48 = arith.constant 64 : i32
    %160 = tpu.dynamic_rotate %159 by %c64_i32_48 dim 1 : vector<8x128xf32>, i32 -> vector<8x128xf32>
    %161 = arith.mulf %160, %153 : vector<8x128xf32>
    %162 = arith.addf %150, %161 : vector<8x128xf32>
    %163 = math.tanh %162 : vector<8x128xf32>
    %c96_i32_49 = arith.constant 96 : i32
    %164 = tpu.dynamic_rotate %159 by %c96_i32_49 dim 1 : vector<8x128xf32>, i32 -> vector<8x128xf32>
    %c64_i32_50 = arith.constant 64 : i32
    %165 = tpu.dynamic_rotate %163 by %c64_i32_50 dim 1 : vector<8x128xf32>, i32 -> vector<8x128xf32>
    %cst_51 = arith.constant 1.000000e+00 : f32
    %166 = vector.broadcast %cst_51 : f32 to vector<8x128xf32>
    %167 = arith.subf %166, %164 : vector<8x128xf32>
    %168 = arith.mulf %167, %165 : vector<8x128xf32>
    %169 = arith.mulf %164, %148 : vector<8x128xf32>
    %170 = arith.addf %168, %169 : vector<8x128xf32>
    %c5_i32 = arith.constant 5 : i32
    %171 = vector.broadcast %c5_i32 : i32 to vector<8x1xi32>
    %172 = arith.cmpi sgt, %0, %171 : vector<8x1xi32>
    %173 = vector.broadcast %172 : vector<8x1xi1> to vector<8x128xi1>
    %174 = arith.andi %3, %173 : vector<8x128xi1>
    %175 = arith.select %174, %170, %148 : vector<8x128xi1>, vector<8x128xf32>
    %c40 = arith.constant 40 : index
    %c0_52 = arith.constant 0 : index
    %176 = vector.load %arg17[%c40, %c0_52] : memref<64x256xf32, #tpu.memory_space<vmem>>, vector<8x128xf32>
    tpu.vector_store %arg17[%c40, %c0_52], %175 {strides = array<i32>} : memref<64x256xf32, #tpu.memory_space<vmem>>, vector<8x128xf32>,
    %177 = vector.extract_strided_slice %9 {offsets = [48, 0], sizes = [8, 128], strides = [1, 1]} : vector<64x256xf32> to vector<8x128xf32>
    %178 = arith.truncf %175 : vector<8x128xf32> to vector<8x128xbf16>
    %cst_53 = arith.constant dense<0.000000e+00> : vector<8x128xf32>
    %179 = tpu.matmul %178, %10, %cst_53 {dimension_numbers = #tpu.dot_dimension_numbers<[1], [0], [0], [1], [0, 0, 1, 1], [], []>} : vector<8x128xbf16>, vector<128x128xbf16>, vector<8x128xf32> -> vector<8x128xf32>
    %180 = arith.addf %179, %13 : vector<8x128xf32>
    %181 = arith.addf %177, %180 : vector<8x128xf32>
    %182 = arith.negf %181 : vector<8x128xf32>
    %183 = math.exp %182 : vector<8x128xf32>
    %cst_54 = arith.constant 1.000000e+00 : f32
    %184 = vector.broadcast %cst_54 : f32 to vector<8x128xf32>
    %185 = arith.addf %184, %183 : vector<8x128xf32>
    %186 = arith.divf %184, %185 : vector<8x128xf32>
    %c64_i32_55 = arith.constant 64 : i32
    %187 = tpu.dynamic_rotate %186 by %c64_i32_55 dim 1 : vector<8x128xf32>, i32 -> vector<8x128xf32>
    %188 = arith.mulf %187, %180 : vector<8x128xf32>
    %189 = arith.addf %177, %188 : vector<8x128xf32>
    %190 = math.tanh %189 : vector<8x128xf32>
    %c96_i32_56 = arith.constant 96 : i32
    %191 = tpu.dynamic_rotate %186 by %c96_i32_56 dim 1 : vector<8x128xf32>, i32 -> vector<8x128xf32>
    %c64_i32_57 = arith.constant 64 : i32
    %192 = tpu.dynamic_rotate %190 by %c64_i32_57 dim 1 : vector<8x128xf32>, i32 -> vector<8x128xf32>
    %cst_58 = arith.constant 1.000000e+00 : f32
    %193 = vector.broadcast %cst_58 : f32 to vector<8x128xf32>
    %194 = arith.subf %193, %191 : vector<8x128xf32>
    %195 = arith.mulf %194, %192 : vector<8x128xf32>
    %196 = arith.mulf %191, %175 : vector<8x128xf32>
    %197 = arith.addf %195, %196 : vector<8x128xf32>
    %c6_i32 = arith.constant 6 : i32
    %198 = vector.broadcast %c6_i32 : i32 to vector<8x1xi32>
    %199 = arith.cmpi sgt, %0, %198 : vector<8x1xi32>
    %200 = vector.broadcast %199 : vector<8x1xi1> to vector<8x128xi1>
    %201 = arith.andi %3, %200 : vector<8x128xi1>
    %202 = arith.select %201, %197, %175 : vector<8x128xi1>, vector<8x128xf32>
    %c48 = arith.constant 48 : index
    %c0_59 = arith.constant 0 : index
    %203 = vector.load %arg17[%c48, %c0_59] : memref<64x256xf32, #tpu.memory_space<vmem>>, vector<8x128xf32>
    tpu.vector_store %arg17[%c48, %c0_59], %202 {strides = array<i32>} : memref<64x256xf32, #tpu.memory_space<vmem>>, vector<8x128xf32>,
    %204 = vector.extract_strided_slice %9 {offsets = [56, 0], sizes = [8, 128], strides = [1, 1]} : vector<64x256xf32> to vector<8x128xf32>
    %205 = arith.truncf %202 : vector<8x128xf32> to vector<8x128xbf16>
    %cst_60 = arith.constant dense<0.000000e+00> : vector<8x128xf32>
    %206 = tpu.matmul %205, %10, %cst_60 {dimension_numbers = #tpu.dot_dimension_numbers<[1], [0], [0], [1], [0, 0, 1, 1], [], []>} : vector<8x128xbf16>, vector<128x128xbf16>, vector<8x128xf32> -> vector<8x128xf32>
    %207 = arith.addf %206, %13 : vector<8x128xf32>
    %208 = arith.addf %204, %207 : vector<8x128xf32>
    %209 = arith.negf %208 : vector<8x128xf32>
    %210 = math.exp %209 : vector<8x128xf32>
    %cst_61 = arith.constant 1.000000e+00 : f32
    %211 = vector.broadcast %cst_61 : f32 to vector<8x128xf32>
    %212 = arith.addf %211, %210 : vector<8x128xf32>
    %213 = arith.divf %211, %212 : vector<8x128xf32>
    %c64_i32_62 = arith.constant 64 : i32
    %214 = tpu.dynamic_rotate %213 by %c64_i32_62 dim 1 : vector<8x128xf32>, i32 -> vector<8x128xf32>
    %215 = arith.mulf %214, %207 : vector<8x128xf32>
    %216 = arith.addf %204, %215 : vector<8x128xf32>
    %217 = math.tanh %216 : vector<8x128xf32>
    %c96_i32_63 = arith.constant 96 : i32
    %218 = tpu.dynamic_rotate %213 by %c96_i32_63 dim 1 : vector<8x128xf32>, i32 -> vector<8x128xf32>
    %c64_i32_64 = arith.constant 64 : i32
    %219 = tpu.dynamic_rotate %217 by %c64_i32_64 dim 1 : vector<8x128xf32>, i32 -> vector<8x128xf32>
    %cst_65 = arith.constant 1.000000e+00 : f32
    %220 = vector.broadcast %cst_65 : f32 to vector<8x128xf32>
    %221 = arith.subf %220, %218 : vector<8x128xf32>
    %222 = arith.mulf %221, %219 : vector<8x128xf32>
    %223 = arith.mulf %218, %202 : vector<8x128xf32>
    %224 = arith.addf %222, %223 : vector<8x128xf32>
    %c7_i32 = arith.constant 7 : i32
    %225 = vector.broadcast %c7_i32 : i32 to vector<8x1xi32>
    %226 = arith.cmpi sgt, %0, %225 : vector<8x1xi32>
    %227 = vector.broadcast %226 : vector<8x1xi1> to vector<8x128xi1>
    %228 = arith.andi %3, %227 : vector<8x128xi1>
    %229 = arith.select %228, %224, %202 : vector<8x128xi1>, vector<8x128xf32>
    %c56 = arith.constant 56 : index
    %c0_66 = arith.constant 0 : index
    %230 = vector.load %arg17[%c56, %c0_66] : memref<64x256xf32, #tpu.memory_space<vmem>>, vector<8x128xf32>
    tpu.vector_store %arg17[%c56, %c0_66], %229 {strides = array<i32>} : memref<64x256xf32, #tpu.memory_space<vmem>>, vector<8x128xf32>,
    %c0_67 = arith.constant 0 : index
    %c0_68 = arith.constant 0 : index
    %231 = vector.load %arg5[%c0_67, %c0_68] : memref<128x128xbf16, #tpu.memory_space<vmem>>, vector<128x128xbf16>
    %c0_69 = arith.constant 0 : index
    %c0_70 = arith.constant 0 : index
    %232 = vector.load %arg7[%c0_69, %c0_70] : memref<1x128xf32, #tpu.memory_space<vmem>>, vector<1x128xf32>
    %233 = vector.shape_cast %232 : vector<1x128xf32> to vector<1x128xf32>
    %234 = vector.broadcast %233 : vector<1x128xf32> to vector<8x128xf32>
    %cst_71 = arith.constant 0.000000e+00 : f32
    %235 = vector.broadcast %cst_71 : f32 to vector<8x128xf32>
    %236 = vector.extract_strided_slice %9 {offsets = [56, 128], sizes = [8, 128], strides = [1, 1]} : vector<64x256xf32> to vector<8x128xf32>
    %237 = arith.truncf %235 : vector<8x128xf32> to vector<8x128xbf16>
    %cst_72 = arith.constant dense<0.000000e+00> : vector<8x128xf32>
    %238 = tpu.matmul %237, %231, %cst_72 {dimension_numbers = #tpu.dot_dimension_numbers<[1], [0], [0], [1], [0, 0, 1, 1], [], []>} : vector<8x128xbf16>, vector<128x128xbf16>, vector<8x128xf32> -> vector<8x128xf32>
    %239 = arith.addf %238, %234 : vector<8x128xf32>
    %240 = arith.addf %236, %239 : vector<8x128xf32>
    %241 = arith.negf %240 : vector<8x128xf32>
    %242 = math.exp %241 : vector<8x128xf32>
    %cst_73 = arith.constant 1.000000e+00 : f32
    %243 = vector.broadcast %cst_73 : f32 to vector<8x128xf32>
    %244 = arith.addf %243, %242 : vector<8x128xf32>
    %245 = arith.divf %243, %244 : vector<8x128xf32>
    %c64_i32_74 = arith.constant 64 : i32
    %246 = tpu.dynamic_rotate %245 by %c64_i32_74 dim 1 : vector<8x128xf32>, i32 -> vector<8x128xf32>
    %247 = arith.mulf %246, %239 : vector<8x128xf32>
    %248 = arith.addf %236, %247 : vector<8x128xf32>
    %249 = math.tanh %248 : vector<8x128xf32>
    %c96_i32_75 = arith.constant 96 : i32
    %250 = tpu.dynamic_rotate %245 by %c96_i32_75 dim 1 : vector<8x128xf32>, i32 -> vector<8x128xf32>
    %c64_i32_76 = arith.constant 64 : i32
    %251 = tpu.dynamic_rotate %249 by %c64_i32_76 dim 1 : vector<8x128xf32>, i32 -> vector<8x128xf32>
    %cst_77 = arith.constant 1.000000e+00 : f32
    %252 = vector.broadcast %cst_77 : f32 to vector<8x128xf32>
    %253 = arith.subf %252, %250 : vector<8x128xf32>
    %254 = arith.mulf %253, %251 : vector<8x128xf32>
    %255 = arith.mulf %250, %235 : vector<8x128xf32>
    %256 = arith.addf %254, %255 : vector<8x128xf32>
    %c7_i32_78 = arith.constant 7 : i32
    %257 = vector.broadcast %c7_i32_78 : i32 to vector<8x1xi32>
    %258 = arith.cmpi sgt, %0, %257 : vector<8x1xi32>
    %259 = vector.broadcast %258 : vector<8x1xi1> to vector<8x128xi1>
    %260 = arith.andi %3, %259 : vector<8x128xi1>
    %261 = arith.select %260, %256, %235 : vector<8x128xi1>, vector<8x128xf32>
    %c56_79 = arith.constant 56 : index
    %c128 = arith.constant 128 : index
    %262 = vector.load %arg17[%c56_79, %c128] : memref<64x256xf32, #tpu.memory_space<vmem>>, vector<8x128xf32>
    tpu.vector_store %arg17[%c56_79, %c128], %261 {strides = array<i32>} : memref<64x256xf32, #tpu.memory_space<vmem>>, vector<8x128xf32>,
    %263 = vector.extract_strided_slice %9 {offsets = [48, 128], sizes = [8, 128], strides = [1, 1]} : vector<64x256xf32> to vector<8x128xf32>
    %264 = arith.truncf %261 : vector<8x128xf32> to vector<8x128xbf16>
    %cst_80 = arith.constant dense<0.000000e+00> : vector<8x128xf32>
    %265 = tpu.matmul %264, %231, %cst_80 {dimension_numbers = #tpu.dot_dimension_numbers<[1], [0], [0], [1], [0, 0, 1, 1], [], []>} : vector<8x128xbf16>, vector<128x128xbf16>, vector<8x128xf32> -> vector<8x128xf32>
    %266 = arith.addf %265, %234 : vector<8x128xf32>
    %267 = arith.addf %263, %266 : vector<8x128xf32>
    %268 = arith.negf %267 : vector<8x128xf32>
    %269 = math.exp %268 : vector<8x128xf32>
    %cst_81 = arith.constant 1.000000e+00 : f32
    %270 = vector.broadcast %cst_81 : f32 to vector<8x128xf32>
    %271 = arith.addf %270, %269 : vector<8x128xf32>
    %272 = arith.divf %270, %271 : vector<8x128xf32>
    %c64_i32_82 = arith.constant 64 : i32
    %273 = tpu.dynamic_rotate %272 by %c64_i32_82 dim 1 : vector<8x128xf32>, i32 -> vector<8x128xf32>
    %274 = arith.mulf %273, %266 : vector<8x128xf32>
    %275 = arith.addf %263, %274 : vector<8x128xf32>
    %276 = math.tanh %275 : vector<8x128xf32>
    %c96_i32_83 = arith.constant 96 : i32
    %277 = tpu.dynamic_rotate %272 by %c96_i32_83 dim 1 : vector<8x128xf32>, i32 -> vector<8x128xf32>
    %c64_i32_84 = arith.constant 64 : i32
    %278 = tpu.dynamic_rotate %276 by %c64_i32_84 dim 1 : vector<8x128xf32>, i32 -> vector<8x128xf32>
    %cst_85 = arith.constant 1.000000e+00 : f32
    %279 = vector.broadcast %cst_85 : f32 to vector<8x128xf32>
    %280 = arith.subf %279, %277 : vector<8x128xf32>
    %281 = arith.mulf %280, %278 : vector<8x128xf32>
    %282 = arith.mulf %277, %261 : vector<8x128xf32>
    %283 = arith.addf %281, %282 : vector<8x128xf32>
    %c6_i32_86 = arith.constant 6 : i32
    %284 = vector.broadcast %c6_i32_86 : i32 to vector<8x1xi32>
    %285 = arith.cmpi sgt, %0, %284 : vector<8x1xi32>
    %286 = vector.broadcast %285 : vector<8x1xi1> to vector<8x128xi1>
    %287 = arith.andi %3, %286 : vector<8x128xi1>
    %288 = arith.select %287, %283, %261 : vector<8x128xi1>, vector<8x128xf32>
    %c48_87 = arith.constant 48 : index
    %c128_88 = arith.constant 128 : index
    %289 = vector.load %arg17[%c48_87, %c128_88] : memref<64x256xf32, #tpu.memory_space<vmem>>, vector<8x128xf32>
    tpu.vector_store %arg17[%c48_87, %c128_88], %288 {strides = array<i32>} : memref<64x256xf32, #tpu.memory_space<vmem>>, vector<8x128xf32>,
    %290 = vector.extract_strided_slice %9 {offsets = [40, 128], sizes = [8, 128], strides = [1, 1]} : vector<64x256xf32> to vector<8x128xf32>
    %291 = arith.truncf %288 : vector<8x128xf32> to vector<8x128xbf16>
    %cst_89 = arith.constant dense<0.000000e+00> : vector<8x128xf32>
    %292 = tpu.matmul %291, %231, %cst_89 {dimension_numbers = #tpu.dot_dimension_numbers<[1], [0], [0], [1], [0, 0, 1, 1], [], []>} : vector<8x128xbf16>, vector<128x128xbf16>, vector<8x128xf32> -> vector<8x128xf32>
    %293 = arith.addf %292, %234 : vector<8x128xf32>
    %294 = arith.addf %290, %293 : vector<8x128xf32>
    %295 = arith.negf %294 : vector<8x128xf32>
    %296 = math.exp %295 : vector<8x128xf32>
    %cst_90 = arith.constant 1.000000e+00 : f32
    %297 = vector.broadcast %cst_90 : f32 to vector<8x128xf32>
    %298 = arith.addf %297, %296 : vector<8x128xf32>
    %299 = arith.divf %297, %298 : vector<8x128xf32>
    %c64_i32_91 = arith.constant 64 : i32
    %300 = tpu.dynamic_rotate %299 by %c64_i32_91 dim 1 : vector<8x128xf32>, i32 -> vector<8x128xf32>
    %301 = arith.mulf %300, %293 : vector<8x128xf32>
    %302 = arith.addf %290, %301 : vector<8x128xf32>
    %303 = math.tanh %302 : vector<8x128xf32>
    %c96_i32_92 = arith.constant 96 : i32
    %304 = tpu.dynamic_rotate %299 by %c96_i32_92 dim 1 : vector<8x128xf32>, i32 -> vector<8x128xf32>
    %c64_i32_93 = arith.constant 64 : i32
    %305 = tpu.dynamic_rotate %303 by %c64_i32_93 dim 1 : vector<8x128xf32>, i32 -> vector<8x128xf32>
    %cst_94 = arith.constant 1.000000e+00 : f32
    %306 = vector.broadcast %cst_94 : f32 to vector<8x128xf32>
    %307 = arith.subf %306, %304 : vector<8x128xf32>
    %308 = arith.mulf %307, %305 : vector<8x128xf32>
    %309 = arith.mulf %304, %288 : vector<8x128xf32>
    %310 = arith.addf %308, %309 : vector<8x128xf32>
    %c5_i32_95 = arith.constant 5 : i32
    %311 = vector.broadcast %c5_i32_95 : i32 to vector<8x1xi32>
    %312 = arith.cmpi sgt, %0, %311 : vector<8x1xi32>
    %313 = vector.broadcast %312 : vector<8x1xi1> to vector<8x128xi1>
    %314 = arith.andi %3, %313 : vector<8x128xi1>
    %315 = arith.select %314, %310, %288 : vector<8x128xi1>, vector<8x128xf32>
    %c40_96 = arith.constant 40 : index
    %c128_97 = arith.constant 128 : index
    %316 = vector.load %arg17[%c40_96, %c128_97] : memref<64x256xf32, #tpu.memory_space<vmem>>, vector<8x128xf32>
    tpu.vector_store %arg17[%c40_96, %c128_97], %315 {strides = array<i32>} : memref<64x256xf32, #tpu.memory_space<vmem>>, vector<8x128xf32>,
    %317 = vector.extract_strided_slice %9 {offsets = [32, 128], sizes = [8, 128], strides = [1, 1]} : vector<64x256xf32> to vector<8x128xf32>
    %318 = arith.truncf %315 : vector<8x128xf32> to vector<8x128xbf16>
    %cst_98 = arith.constant dense<0.000000e+00> : vector<8x128xf32>
    %319 = tpu.matmul %318, %231, %cst_98 {dimension_numbers = #tpu.dot_dimension_numbers<[1], [0], [0], [1], [0, 0, 1, 1], [], []>} : vector<8x128xbf16>, vector<128x128xbf16>, vector<8x128xf32> -> vector<8x128xf32>
    %320 = arith.addf %319, %234 : vector<8x128xf32>
    %321 = arith.addf %317, %320 : vector<8x128xf32>
    %322 = arith.negf %321 : vector<8x128xf32>
    %323 = math.exp %322 : vector<8x128xf32>
    %cst_99 = arith.constant 1.000000e+00 : f32
    %324 = vector.broadcast %cst_99 : f32 to vector<8x128xf32>
    %325 = arith.addf %324, %323 : vector<8x128xf32>
    %326 = arith.divf %324, %325 : vector<8x128xf32>
    %c64_i32_100 = arith.constant 64 : i32
    %327 = tpu.dynamic_rotate %326 by %c64_i32_100 dim 1 : vector<8x128xf32>, i32 -> vector<8x128xf32>
    %328 = arith.mulf %327, %320 : vector<8x128xf32>
    %329 = arith.addf %317, %328 : vector<8x128xf32>
    %330 = math.tanh %329 : vector<8x128xf32>
    %c96_i32_101 = arith.constant 96 : i32
    %331 = tpu.dynamic_rotate %326 by %c96_i32_101 dim 1 : vector<8x128xf32>, i32 -> vector<8x128xf32>
    %c64_i32_102 = arith.constant 64 : i32
    %332 = tpu.dynamic_rotate %330 by %c64_i32_102 dim 1 : vector<8x128xf32>, i32 -> vector<8x128xf32>
    %cst_103 = arith.constant 1.000000e+00 : f32
    %333 = vector.broadcast %cst_103 : f32 to vector<8x128xf32>
    %334 = arith.subf %333, %331 : vector<8x128xf32>
    %335 = arith.mulf %334, %332 : vector<8x128xf32>
    %336 = arith.mulf %331, %315 : vector<8x128xf32>
    %337 = arith.addf %335, %336 : vector<8x128xf32>
    %c4_i32_104 = arith.constant 4 : i32
    %338 = vector.broadcast %c4_i32_104 : i32 to vector<8x1xi32>
    %339 = arith.cmpi sgt, %0, %338 : vector<8x1xi32>
    %340 = vector.broadcast %339 : vector<8x1xi1> to vector<8x128xi1>
    %341 = arith.andi %3, %340 : vector<8x128xi1>
    %342 = arith.select %341, %337, %315 : vector<8x128xi1>, vector<8x128xf32>
    %c32_105 = arith.constant 32 : index
    %c128_106 = arith.constant 128 : index
    %343 = vector.load %arg17[%c32_105, %c128_106] : memref<64x256xf32, #tpu.memory_space<vmem>>, vector<8x128xf32>
    tpu.vector_store %arg17[%c32_105, %c128_106], %342 {strides = array<i32>} : memref<64x256xf32, #tpu.memory_space<vmem>>, vector<8x128xf32>,
    %344 = vector.extract_strided_slice %9 {offsets = [24, 128], sizes = [8, 128], strides = [1, 1]} : vector<64x256xf32> to vector<8x128xf32>
    %345 = arith.truncf %342 : vector<8x128xf32> to vector<8x128xbf16>
    %cst_107 = arith.constant dense<0.000000e+00> : vector<8x128xf32>
    %346 = tpu.matmul %345, %231, %cst_107 {dimension_numbers = #tpu.dot_dimension_numbers<[1], [0], [0], [1], [0, 0, 1, 1], [], []>} : vector<8x128xbf16>, vector<128x128xbf16>, vector<8x128xf32> -> vector<8x128xf32>
    %347 = arith.addf %346, %234 : vector<8x128xf32>
    %348 = arith.addf %344, %347 : vector<8x128xf32>
    %349 = arith.negf %348 : vector<8x128xf32>
    %350 = math.exp %349 : vector<8x128xf32>
    %cst_108 = arith.constant 1.000000e+00 : f32
    %351 = vector.broadcast %cst_108 : f32 to vector<8x128xf32>
    %352 = arith.addf %351, %350 : vector<8x128xf32>
    %353 = arith.divf %351, %352 : vector<8x128xf32>
    %c64_i32_109 = arith.constant 64 : i32
    %354 = tpu.dynamic_rotate %353 by %c64_i32_109 dim 1 : vector<8x128xf32>, i32 -> vector<8x128xf32>
    %355 = arith.mulf %354, %347 : vector<8x128xf32>
    %356 = arith.addf %344, %355 : vector<8x128xf32>
    %357 = math.tanh %356 : vector<8x128xf32>
    %c96_i32_110 = arith.constant 96 : i32
    %358 = tpu.dynamic_rotate %353 by %c96_i32_110 dim 1 : vector<8x128xf32>, i32 -> vector<8x128xf32>
    %c64_i32_111 = arith.constant 64 : i32
    %359 = tpu.dynamic_rotate %357 by %c64_i32_111 dim 1 : vector<8x128xf32>, i32 -> vector<8x128xf32>
    %cst_112 = arith.constant 1.000000e+00 : f32
    %360 = vector.broadcast %cst_112 : f32 to vector<8x128xf32>
    %361 = arith.subf %360, %358 : vector<8x128xf32>
    %362 = arith.mulf %361, %359 : vector<8x128xf32>
    %363 = arith.mulf %358, %342 : vector<8x128xf32>
    %364 = arith.addf %362, %363 : vector<8x128xf32>
    %c3_i32_113 = arith.constant 3 : i32
    %365 = vector.broadcast %c3_i32_113 : i32 to vector<8x1xi32>
    %366 = arith.cmpi sgt, %0, %365 : vector<8x1xi32>
    %367 = vector.broadcast %366 : vector<8x1xi1> to vector<8x128xi1>
    %368 = arith.andi %3, %367 : vector<8x128xi1>
    %369 = arith.select %368, %364, %342 : vector<8x128xi1>, vector<8x128xf32>
    %c24_114 = arith.constant 24 : index
    %c128_115 = arith.constant 128 : index
    %370 = vector.load %arg17[%c24_114, %c128_115] : memref<64x256xf32, #tpu.memory_space<vmem>>, vector<8x128xf32>
    tpu.vector_store %arg17[%c24_114, %c128_115], %369 {strides = array<i32>} : memref<64x256xf32, #tpu.memory_space<vmem>>, vector<8x128xf32>,
    %371 = vector.extract_strided_slice %9 {offsets = [16, 128], sizes = [8, 128], strides = [1, 1]} : vector<64x256xf32> to vector<8x128xf32>
    %372 = arith.truncf %369 : vector<8x128xf32> to vector<8x128xbf16>
    %cst_116 = arith.constant dense<0.000000e+00> : vector<8x128xf32>
    %373 = tpu.matmul %372, %231, %cst_116 {dimension_numbers = #tpu.dot_dimension_numbers<[1], [0], [0], [1], [0, 0, 1, 1], [], []>} : vector<8x128xbf16>, vector<128x128xbf16>, vector<8x128xf32> -> vector<8x128xf32>
    %374 = arith.addf %373, %234 : vector<8x128xf32>
    %375 = arith.addf %371, %374 : vector<8x128xf32>
    %376 = arith.negf %375 : vector<8x128xf32>
    %377 = math.exp %376 : vector<8x128xf32>
    %cst_117 = arith.constant 1.000000e+00 : f32
    %378 = vector.broadcast %cst_117 : f32 to vector<8x128xf32>
    %379 = arith.addf %378, %377 : vector<8x128xf32>
    %380 = arith.divf %378, %379 : vector<8x128xf32>
    %c64_i32_118 = arith.constant 64 : i32
    %381 = tpu.dynamic_rotate %380 by %c64_i32_118 dim 1 : vector<8x128xf32>, i32 -> vector<8x128xf32>
    %382 = arith.mulf %381, %374 : vector<8x128xf32>
    %383 = arith.addf %371, %382 : vector<8x128xf32>
    %384 = math.tanh %383 : vector<8x128xf32>
    %c96_i32_119 = arith.constant 96 : i32
    %385 = tpu.dynamic_rotate %380 by %c96_i32_119 dim 1 : vector<8x128xf32>, i32 -> vector<8x128xf32>
    %c64_i32_120 = arith.constant 64 : i32
    %386 = tpu.dynamic_rotate %384 by %c64_i32_120 dim 1 : vector<8x128xf32>, i32 -> vector<8x128xf32>
    %cst_121 = arith.constant 1.000000e+00 : f32
    %387 = vector.broadcast %cst_121 : f32 to vector<8x128xf32>
    %388 = arith.subf %387, %385 : vector<8x128xf32>
    %389 = arith.mulf %388, %386 : vector<8x128xf32>
    %390 = arith.mulf %385, %369 : vector<8x128xf32>
    %391 = arith.addf %389, %390 : vector<8x128xf32>
    %c2_i32_122 = arith.constant 2 : i32
    %392 = vector.broadcast %c2_i32_122 : i32 to vector<8x1xi32>
    %393 = arith.cmpi sgt, %0, %392 : vector<8x1xi32>
    %394 = vector.broadcast %393 : vector<8x1xi1> to vector<8x128xi1>
    %395 = arith.andi %3, %394 : vector<8x128xi1>
    %396 = arith.select %395, %391, %369 : vector<8x128xi1>, vector<8x128xf32>
    %c16_123 = arith.constant 16 : index
    %c128_124 = arith.constant 128 : index
    %397 = vector.load %arg17[%c16_123, %c128_124] : memref<64x256xf32, #tpu.memory_space<vmem>>, vector<8x128xf32>
    tpu.vector_store %arg17[%c16_123, %c128_124], %396 {strides = array<i32>} : memref<64x256xf32, #tpu.memory_space<vmem>>, vector<8x128xf32>,
    %398 = vector.extract_strided_slice %9 {offsets = [8, 128], sizes = [8, 128], strides = [1, 1]} : vector<64x256xf32> to vector<8x128xf32>
    %399 = arith.truncf %396 : vector<8x128xf32> to vector<8x128xbf16>
    %cst_125 = arith.constant dense<0.000000e+00> : vector<8x128xf32>
    %400 = tpu.matmul %399, %231, %cst_125 {dimension_numbers = #tpu.dot_dimension_numbers<[1], [0], [0], [1], [0, 0, 1, 1], [], []>} : vector<8x128xbf16>, vector<128x128xbf16>, vector<8x128xf32> -> vector<8x128xf32>
    %401 = arith.addf %400, %234 : vector<8x128xf32>
    %402 = arith.addf %398, %401 : vector<8x128xf32>
    %403 = arith.negf %402 : vector<8x128xf32>
    %404 = math.exp %403 : vector<8x128xf32>
    %cst_126 = arith.constant 1.000000e+00 : f32
    %405 = vector.broadcast %cst_126 : f32 to vector<8x128xf32>
    %406 = arith.addf %405, %404 : vector<8x128xf32>
    %407 = arith.divf %405, %406 : vector<8x128xf32>
    %c64_i32_127 = arith.constant 64 : i32
    %408 = tpu.dynamic_rotate %407 by %c64_i32_127 dim 1 : vector<8x128xf32>, i32 -> vector<8x128xf32>
    %409 = arith.mulf %408, %401 : vector<8x128xf32>
    %410 = arith.addf %398, %409 : vector<8x128xf32>
    %411 = math.tanh %410 : vector<8x128xf32>
    %c96_i32_128 = arith.constant 96 : i32
    %412 = tpu.dynamic_rotate %407 by %c96_i32_128 dim 1 : vector<8x128xf32>, i32 -> vector<8x128xf32>
    %c64_i32_129 = arith.constant 64 : i32
    %413 = tpu.dynamic_rotate %411 by %c64_i32_129 dim 1 : vector<8x128xf32>, i32 -> vector<8x128xf32>
    %cst_130 = arith.constant 1.000000e+00 : f32
    %414 = vector.broadcast %cst_130 : f32 to vector<8x128xf32>
    %415 = arith.subf %414, %412 : vector<8x128xf32>
    %416 = arith.mulf %415, %413 : vector<8x128xf32>
    %417 = arith.mulf %412, %396 : vector<8x128xf32>
    %418 = arith.addf %416, %417 : vector<8x128xf32>
    %c1_i32_131 = arith.constant 1 : i32
    %419 = vector.broadcast %c1_i32_131 : i32 to vector<8x1xi32>
    %420 = arith.cmpi sgt, %0, %419 : vector<8x1xi32>
    %421 = vector.broadcast %420 : vector<8x1xi1> to vector<8x128xi1>
    %422 = arith.andi %3, %421 : vector<8x128xi1>
    %423 = arith.select %422, %418, %396 : vector<8x128xi1>, vector<8x128xf32>
    %c8_132 = arith.constant 8 : index
    %c128_133 = arith.constant 128 : index
    %424 = vector.load %arg17[%c8_132, %c128_133] : memref<64x256xf32, #tpu.memory_space<vmem>>, vector<8x128xf32>
    tpu.vector_store %arg17[%c8_132, %c128_133], %423 {strides = array<i32>} : memref<64x256xf32, #tpu.memory_space<vmem>>, vector<8x128xf32>,
    %425 = vector.extract_strided_slice %9 {offsets = [0, 128], sizes = [8, 128], strides = [1, 1]} : vector<64x256xf32> to vector<8x128xf32>
    %426 = arith.truncf %423 : vector<8x128xf32> to vector<8x128xbf16>
    %cst_134 = arith.constant dense<0.000000e+00> : vector<8x128xf32>
    %427 = tpu.matmul %426, %231, %cst_134 {dimension_numbers = #tpu.dot_dimension_numbers<[1], [0], [0], [1], [0, 0, 1, 1], [], []>} : vector<8x128xbf16>, vector<128x128xbf16>, vector<8x128xf32> -> vector<8x128xf32>
    %428 = arith.addf %427, %234 : vector<8x128xf32>
    %429 = arith.addf %425, %428 : vector<8x128xf32>
    %430 = arith.negf %429 : vector<8x128xf32>
    %431 = math.exp %430 : vector<8x128xf32>
    %cst_135 = arith.constant 1.000000e+00 : f32
    %432 = vector.broadcast %cst_135 : f32 to vector<8x128xf32>
    %433 = arith.addf %432, %431 : vector<8x128xf32>
    %434 = arith.divf %432, %433 : vector<8x128xf32>
    %c64_i32_136 = arith.constant 64 : i32
    %435 = tpu.dynamic_rotate %434 by %c64_i32_136 dim 1 : vector<8x128xf32>, i32 -> vector<8x128xf32>
    %436 = arith.mulf %435, %428 : vector<8x128xf32>
    %437 = arith.addf %425, %436 : vector<8x128xf32>
    %438 = math.tanh %437 : vector<8x128xf32>
    %c96_i32_137 = arith.constant 96 : i32
    %439 = tpu.dynamic_rotate %434 by %c96_i32_137 dim 1 : vector<8x128xf32>, i32 -> vector<8x128xf32>
    %c64_i32_138 = arith.constant 64 : i32
    %440 = tpu.dynamic_rotate %438 by %c64_i32_138 dim 1 : vector<8x128xf32>, i32 -> vector<8x128xf32>
    %cst_139 = arith.constant 1.000000e+00 : f32
    %441 = vector.broadcast %cst_139 : f32 to vector<8x128xf32>
    %442 = arith.subf %441, %439 : vector<8x128xf32>
    %443 = arith.mulf %442, %440 : vector<8x128xf32>
    %444 = arith.mulf %439, %423 : vector<8x128xf32>
    %445 = arith.addf %443, %444 : vector<8x128xf32>
    %c0_i32_140 = arith.constant 0 : i32
    %446 = vector.broadcast %c0_i32_140 : i32 to vector<8x1xi32>
    %447 = arith.cmpi sgt, %0, %446 : vector<8x1xi32>
    %448 = vector.broadcast %447 : vector<8x1xi1> to vector<8x128xi1>
    %449 = arith.andi %3, %448 : vector<8x128xi1>
    %450 = arith.select %449, %445, %423 : vector<8x128xi1>, vector<8x128xf32>
    %c0_141 = arith.constant 0 : index
    %c128_142 = arith.constant 128 : index
    %451 = vector.load %arg17[%c0_141, %c128_142] : memref<64x256xf32, #tpu.memory_space<vmem>>, vector<8x128xf32>
    tpu.vector_store %arg17[%c0_141, %c128_142], %450 {strides = array<i32>} : memref<64x256xf32, #tpu.memory_space<vmem>>, vector<8x128xf32>,
    %c0_143 = arith.constant 0 : index
    %c0_144 = arith.constant 0 : index
    %452 = vector.load %arg17[%c0_143, %c0_144] : memref<64x256xf32, #tpu.memory_space<vmem>>, vector<64x256xf32>
    %453 = arith.truncf %452 : vector<64x256xf32> to vector<64x256xbf16>
    %c0_145 = arith.constant 0 : index
    %c0_146 = arith.constant 0 : index
    %454 = vector.load %arg8[%c0_145, %c0_146] : memref<256x256xbf16, #tpu.memory_space<vmem>>, vector<256x256xbf16>
    %cst_147 = arith.constant dense<0.000000e+00> : vector<64x256xf32>
    %455 = tpu.matmul %453, %454, %cst_147 {dimension_numbers = #tpu.dot_dimension_numbers<[1], [0], [0], [1], [0, 0, 1, 1], [], []>} : vector<64x256xbf16>, vector<256x256xbf16>, vector<64x256xf32> -> vector<64x256xf32>
    %c0_148 = arith.constant 0 : index
    %c0_149 = arith.constant 0 : index
    %456 = vector.load %arg9[%c0_148, %c0_149] : memref<1x256xf32, #tpu.memory_space<vmem>>, vector<1x256xf32>
    %457 = vector.broadcast %456 : vector<1x256xf32> to vector<64x256xf32>
    %458 = arith.addf %455, %457 : vector<64x256xf32>
    %c0_150 = arith.constant 0 : index
    %c0_151 = arith.constant 0 : index
    %459 = vector.load %arg10[%c0_150, %c0_151] : memref<128x128xbf16, #tpu.memory_space<vmem>>, vector<128x128xbf16>
    %c0_152 = arith.constant 0 : index
    %c0_153 = arith.constant 0 : index
    %460 = vector.load %arg12[%c0_152, %c0_153] : memref<1x128xf32, #tpu.memory_space<vmem>>, vector<1x128xf32>
    %461 = vector.shape_cast %460 : vector<1x128xf32> to vector<1x128xf32>
    %462 = vector.broadcast %461 : vector<1x128xf32> to vector<8x128xf32>
    %cst_154 = arith.constant 0.000000e+00 : f32
    %463 = vector.broadcast %cst_154 : f32 to vector<8x128xf32>
    %464 = vector.extract_strided_slice %458 {offsets = [0, 0], sizes = [8, 128], strides = [1, 1]} : vector<64x256xf32> to vector<8x128xf32>
    %465 = arith.truncf %463 : vector<8x128xf32> to vector<8x128xbf16>
    %cst_155 = arith.constant dense<0.000000e+00> : vector<8x128xf32>
    %466 = tpu.matmul %465, %459, %cst_155 {dimension_numbers = #tpu.dot_dimension_numbers<[1], [0], [0], [1], [0, 0, 1, 1], [], []>} : vector<8x128xbf16>, vector<128x128xbf16>, vector<8x128xf32> -> vector<8x128xf32>
    %467 = arith.addf %466, %462 : vector<8x128xf32>
    %468 = arith.addf %464, %467 : vector<8x128xf32>
    %469 = arith.negf %468 : vector<8x128xf32>
    %470 = math.exp %469 : vector<8x128xf32>
    %cst_156 = arith.constant 1.000000e+00 : f32
    %471 = vector.broadcast %cst_156 : f32 to vector<8x128xf32>
    %472 = arith.addf %471, %470 : vector<8x128xf32>
    %473 = arith.divf %471, %472 : vector<8x128xf32>
    %c64_i32_157 = arith.constant 64 : i32
    %474 = tpu.dynamic_rotate %473 by %c64_i32_157 dim 1 : vector<8x128xf32>, i32 -> vector<8x128xf32>
    %475 = arith.mulf %474, %467 : vector<8x128xf32>
    %476 = arith.addf %464, %475 : vector<8x128xf32>
    %477 = math.tanh %476 : vector<8x128xf32>
    %c96_i32_158 = arith.constant 96 : i32
    %478 = tpu.dynamic_rotate %473 by %c96_i32_158 dim 1 : vector<8x128xf32>, i32 -> vector<8x128xf32>
    %c64_i32_159 = arith.constant 64 : i32
    %479 = tpu.dynamic_rotate %477 by %c64_i32_159 dim 1 : vector<8x128xf32>, i32 -> vector<8x128xf32>
    %cst_160 = arith.constant 1.000000e+00 : f32
    %480 = vector.broadcast %cst_160 : f32 to vector<8x128xf32>
    %481 = arith.subf %480, %478 : vector<8x128xf32>
    %482 = arith.mulf %481, %479 : vector<8x128xf32>
    %483 = arith.mulf %478, %463 : vector<8x128xf32>
    %484 = arith.addf %482, %483 : vector<8x128xf32>
    %c0_i32_161 = arith.constant 0 : i32
    %485 = vector.broadcast %c0_i32_161 : i32 to vector<8x1xi32>
    %486 = arith.cmpi sgt, %0, %485 : vector<8x1xi32>
    %487 = vector.broadcast %486 : vector<8x1xi1> to vector<8x128xi1>
    %488 = arith.andi %3, %487 : vector<8x128xi1>
    %489 = arith.select %488, %484, %463 : vector<8x128xi1>, vector<8x128xf32>
    %490 = vector.extract_strided_slice %458 {offsets = [8, 0], sizes = [8, 128], strides = [1, 1]} : vector<64x256xf32> to vector<8x128xf32>
    %491 = arith.truncf %489 : vector<8x128xf32> to vector<8x128xbf16>
    %cst_162 = arith.constant dense<0.000000e+00> : vector<8x128xf32>
    %492 = tpu.matmul %491, %459, %cst_162 {dimension_numbers = #tpu.dot_dimension_numbers<[1], [0], [0], [1], [0, 0, 1, 1], [], []>} : vector<8x128xbf16>, vector<128x128xbf16>, vector<8x128xf32> -> vector<8x128xf32>
    %493 = arith.addf %492, %462 : vector<8x128xf32>
    %494 = arith.addf %490, %493 : vector<8x128xf32>
    %495 = arith.negf %494 : vector<8x128xf32>
    %496 = math.exp %495 : vector<8x128xf32>
    %cst_163 = arith.constant 1.000000e+00 : f32
    %497 = vector.broadcast %cst_163 : f32 to vector<8x128xf32>
    %498 = arith.addf %497, %496 : vector<8x128xf32>
    %499 = arith.divf %497, %498 : vector<8x128xf32>
    %c64_i32_164 = arith.constant 64 : i32
    %500 = tpu.dynamic_rotate %499 by %c64_i32_164 dim 1 : vector<8x128xf32>, i32 -> vector<8x128xf32>
    %501 = arith.mulf %500, %493 : vector<8x128xf32>
    %502 = arith.addf %490, %501 : vector<8x128xf32>
    %503 = math.tanh %502 : vector<8x128xf32>
    %c96_i32_165 = arith.constant 96 : i32
    %504 = tpu.dynamic_rotate %499 by %c96_i32_165 dim 1 : vector<8x128xf32>, i32 -> vector<8x128xf32>
    %c64_i32_166 = arith.constant 64 : i32
    %505 = tpu.dynamic_rotate %503 by %c64_i32_166 dim 1 : vector<8x128xf32>, i32 -> vector<8x128xf32>
    %cst_167 = arith.constant 1.000000e+00 : f32
    %506 = vector.broadcast %cst_167 : f32 to vector<8x128xf32>
    %507 = arith.subf %506, %504 : vector<8x128xf32>
    %508 = arith.mulf %507, %505 : vector<8x128xf32>
    %509 = arith.mulf %504, %489 : vector<8x128xf32>
    %510 = arith.addf %508, %509 : vector<8x128xf32>
    %c1_i32_168 = arith.constant 1 : i32
    %511 = vector.broadcast %c1_i32_168 : i32 to vector<8x1xi32>
    %512 = arith.cmpi sgt, %0, %511 : vector<8x1xi32>
    %513 = vector.broadcast %512 : vector<8x1xi1> to vector<8x128xi1>
    %514 = arith.andi %3, %513 : vector<8x128xi1>
    %515 = arith.select %514, %510, %489 : vector<8x128xi1>, vector<8x128xf32>
    %516 = vector.extract_strided_slice %458 {offsets = [16, 0], sizes = [8, 128], strides = [1, 1]} : vector<64x256xf32> to vector<8x128xf32>
    %517 = arith.truncf %515 : vector<8x128xf32> to vector<8x128xbf16>
    %cst_169 = arith.constant dense<0.000000e+00> : vector<8x128xf32>
    %518 = tpu.matmul %517, %459, %cst_169 {dimension_numbers = #tpu.dot_dimension_numbers<[1], [0], [0], [1], [0, 0, 1, 1], [], []>} : vector<8x128xbf16>, vector<128x128xbf16>, vector<8x128xf32> -> vector<8x128xf32>
    %519 = arith.addf %518, %462 : vector<8x128xf32>
    %520 = arith.addf %516, %519 : vector<8x128xf32>
    %521 = arith.negf %520 : vector<8x128xf32>
    %522 = math.exp %521 : vector<8x128xf32>
    %cst_170 = arith.constant 1.000000e+00 : f32
    %523 = vector.broadcast %cst_170 : f32 to vector<8x128xf32>
    %524 = arith.addf %523, %522 : vector<8x128xf32>
    %525 = arith.divf %523, %524 : vector<8x128xf32>
    %c64_i32_171 = arith.constant 64 : i32
    %526 = tpu.dynamic_rotate %525 by %c64_i32_171 dim 1 : vector<8x128xf32>, i32 -> vector<8x128xf32>
    %527 = arith.mulf %526, %519 : vector<8x128xf32>
    %528 = arith.addf %516, %527 : vector<8x128xf32>
    %529 = math.tanh %528 : vector<8x128xf32>
    %c96_i32_172 = arith.constant 96 : i32
    %530 = tpu.dynamic_rotate %525 by %c96_i32_172 dim 1 : vector<8x128xf32>, i32 -> vector<8x128xf32>
    %c64_i32_173 = arith.constant 64 : i32
    %531 = tpu.dynamic_rotate %529 by %c64_i32_173 dim 1 : vector<8x128xf32>, i32 -> vector<8x128xf32>
    %cst_174 = arith.constant 1.000000e+00 : f32
    %532 = vector.broadcast %cst_174 : f32 to vector<8x128xf32>
    %533 = arith.subf %532, %530 : vector<8x128xf32>
    %534 = arith.mulf %533, %531 : vector<8x128xf32>
    %535 = arith.mulf %530, %515 : vector<8x128xf32>
    %536 = arith.addf %534, %535 : vector<8x128xf32>
    %c2_i32_175 = arith.constant 2 : i32
    %537 = vector.broadcast %c2_i32_175 : i32 to vector<8x1xi32>
    %538 = arith.cmpi sgt, %0, %537 : vector<8x1xi32>
    %539 = vector.broadcast %538 : vector<8x1xi1> to vector<8x128xi1>
    %540 = arith.andi %3, %539 : vector<8x128xi1>
    %541 = arith.select %540, %536, %515 : vector<8x128xi1>, vector<8x128xf32>
    %542 = vector.extract_strided_slice %458 {offsets = [24, 0], sizes = [8, 128], strides = [1, 1]} : vector<64x256xf32> to vector<8x128xf32>
    %543 = arith.truncf %541 : vector<8x128xf32> to vector<8x128xbf16>
    %cst_176 = arith.constant dense<0.000000e+00> : vector<8x128xf32>
    %544 = tpu.matmul %543, %459, %cst_176 {dimension_numbers = #tpu.dot_dimension_numbers<[1], [0], [0], [1], [0, 0, 1, 1], [], []>} : vector<8x128xbf16>, vector<128x128xbf16>, vector<8x128xf32> -> vector<8x128xf32>
    %545 = arith.addf %544, %462 : vector<8x128xf32>
    %546 = arith.addf %542, %545 : vector<8x128xf32>
    %547 = arith.negf %546 : vector<8x128xf32>
    %548 = math.exp %547 : vector<8x128xf32>
    %cst_177 = arith.constant 1.000000e+00 : f32
    %549 = vector.broadcast %cst_177 : f32 to vector<8x128xf32>
    %550 = arith.addf %549, %548 : vector<8x128xf32>
    %551 = arith.divf %549, %550 : vector<8x128xf32>
    %c64_i32_178 = arith.constant 64 : i32
    %552 = tpu.dynamic_rotate %551 by %c64_i32_178 dim 1 : vector<8x128xf32>, i32 -> vector<8x128xf32>
    %553 = arith.mulf %552, %545 : vector<8x128xf32>
    %554 = arith.addf %542, %553 : vector<8x128xf32>
    %555 = math.tanh %554 : vector<8x128xf32>
    %c96_i32_179 = arith.constant 96 : i32
    %556 = tpu.dynamic_rotate %551 by %c96_i32_179 dim 1 : vector<8x128xf32>, i32 -> vector<8x128xf32>
    %c64_i32_180 = arith.constant 64 : i32
    %557 = tpu.dynamic_rotate %555 by %c64_i32_180 dim 1 : vector<8x128xf32>, i32 -> vector<8x128xf32>
    %cst_181 = arith.constant 1.000000e+00 : f32
    %558 = vector.broadcast %cst_181 : f32 to vector<8x128xf32>
    %559 = arith.subf %558, %556 : vector<8x128xf32>
    %560 = arith.mulf %559, %557 : vector<8x128xf32>
    %561 = arith.mulf %556, %541 : vector<8x128xf32>
    %562 = arith.addf %560, %561 : vector<8x128xf32>
    %c3_i32_182 = arith.constant 3 : i32
    %563 = vector.broadcast %c3_i32_182 : i32 to vector<8x1xi32>
    %564 = arith.cmpi sgt, %0, %563 : vector<8x1xi32>
    %565 = vector.broadcast %564 : vector<8x1xi1> to vector<8x128xi1>
    %566 = arith.andi %3, %565 : vector<8x128xi1>
    %567 = arith.select %566, %562, %541 : vector<8x128xi1>, vector<8x128xf32>
    %568 = vector.extract_strided_slice %458 {offsets = [32, 0], sizes = [8, 128], strides = [1, 1]} : vector<64x256xf32> to vector<8x128xf32>
    %569 = arith.truncf %567 : vector<8x128xf32> to vector<8x128xbf16>
    %cst_183 = arith.constant dense<0.000000e+00> : vector<8x128xf32>
    %570 = tpu.matmul %569, %459, %cst_183 {dimension_numbers = #tpu.dot_dimension_numbers<[1], [0], [0], [1], [0, 0, 1, 1], [], []>} : vector<8x128xbf16>, vector<128x128xbf16>, vector<8x128xf32> -> vector<8x128xf32>
    %571 = arith.addf %570, %462 : vector<8x128xf32>
    %572 = arith.addf %568, %571 : vector<8x128xf32>
    %573 = arith.negf %572 : vector<8x128xf32>
    %574 = math.exp %573 : vector<8x128xf32>
    %cst_184 = arith.constant 1.000000e+00 : f32
    %575 = vector.broadcast %cst_184 : f32 to vector<8x128xf32>
    %576 = arith.addf %575, %574 : vector<8x128xf32>
    %577 = arith.divf %575, %576 : vector<8x128xf32>
    %c64_i32_185 = arith.constant 64 : i32
    %578 = tpu.dynamic_rotate %577 by %c64_i32_185 dim 1 : vector<8x128xf32>, i32 -> vector<8x128xf32>
    %579 = arith.mulf %578, %571 : vector<8x128xf32>
    %580 = arith.addf %568, %579 : vector<8x128xf32>
    %581 = math.tanh %580 : vector<8x128xf32>
    %c96_i32_186 = arith.constant 96 : i32
    %582 = tpu.dynamic_rotate %577 by %c96_i32_186 dim 1 : vector<8x128xf32>, i32 -> vector<8x128xf32>
    %c64_i32_187 = arith.constant 64 : i32
    %583 = tpu.dynamic_rotate %581 by %c64_i32_187 dim 1 : vector<8x128xf32>, i32 -> vector<8x128xf32>
    %cst_188 = arith.constant 1.000000e+00 : f32
    %584 = vector.broadcast %cst_188 : f32 to vector<8x128xf32>
    %585 = arith.subf %584, %582 : vector<8x128xf32>
    %586 = arith.mulf %585, %583 : vector<8x128xf32>
    %587 = arith.mulf %582, %567 : vector<8x128xf32>
    %588 = arith.addf %586, %587 : vector<8x128xf32>
    %c4_i32_189 = arith.constant 4 : i32
    %589 = vector.broadcast %c4_i32_189 : i32 to vector<8x1xi32>
    %590 = arith.cmpi sgt, %0, %589 : vector<8x1xi32>
    %591 = vector.broadcast %590 : vector<8x1xi1> to vector<8x128xi1>
    %592 = arith.andi %3, %591 : vector<8x128xi1>
    %593 = arith.select %592, %588, %567 : vector<8x128xi1>, vector<8x128xf32>
    %594 = vector.extract_strided_slice %458 {offsets = [40, 0], sizes = [8, 128], strides = [1, 1]} : vector<64x256xf32> to vector<8x128xf32>
    %595 = arith.truncf %593 : vector<8x128xf32> to vector<8x128xbf16>
    %cst_190 = arith.constant dense<0.000000e+00> : vector<8x128xf32>
    %596 = tpu.matmul %595, %459, %cst_190 {dimension_numbers = #tpu.dot_dimension_numbers<[1], [0], [0], [1], [0, 0, 1, 1], [], []>} : vector<8x128xbf16>, vector<128x128xbf16>, vector<8x128xf32> -> vector<8x128xf32>
    %597 = arith.addf %596, %462 : vector<8x128xf32>
    %598 = arith.addf %594, %597 : vector<8x128xf32>
    %599 = arith.negf %598 : vector<8x128xf32>
    %600 = math.exp %599 : vector<8x128xf32>
    %cst_191 = arith.constant 1.000000e+00 : f32
    %601 = vector.broadcast %cst_191 : f32 to vector<8x128xf32>
    %602 = arith.addf %601, %600 : vector<8x128xf32>
    %603 = arith.divf %601, %602 : vector<8x128xf32>
    %c64_i32_192 = arith.constant 64 : i32
    %604 = tpu.dynamic_rotate %603 by %c64_i32_192 dim 1 : vector<8x128xf32>, i32 -> vector<8x128xf32>
    %605 = arith.mulf %604, %597 : vector<8x128xf32>
    %606 = arith.addf %594, %605 : vector<8x128xf32>
    %607 = math.tanh %606 : vector<8x128xf32>
    %c96_i32_193 = arith.constant 96 : i32
    %608 = tpu.dynamic_rotate %603 by %c96_i32_193 dim 1 : vector<8x128xf32>, i32 -> vector<8x128xf32>
    %c64_i32_194 = arith.constant 64 : i32
    %609 = tpu.dynamic_rotate %607 by %c64_i32_194 dim 1 : vector<8x128xf32>, i32 -> vector<8x128xf32>
    %cst_195 = arith.constant 1.000000e+00 : f32
    %610 = vector.broadcast %cst_195 : f32 to vector<8x128xf32>
    %611 = arith.subf %610, %608 : vector<8x128xf32>
    %612 = arith.mulf %611, %609 : vector<8x128xf32>
    %613 = arith.mulf %608, %593 : vector<8x128xf32>
    %614 = arith.addf %612, %613 : vector<8x128xf32>
    %c5_i32_196 = arith.constant 5 : i32
    %615 = vector.broadcast %c5_i32_196 : i32 to vector<8x1xi32>
    %616 = arith.cmpi sgt, %0, %615 : vector<8x1xi32>
    %617 = vector.broadcast %616 : vector<8x1xi1> to vector<8x128xi1>
    %618 = arith.andi %3, %617 : vector<8x128xi1>
    %619 = arith.select %618, %614, %593 : vector<8x128xi1>, vector<8x128xf32>
    %620 = vector.extract_strided_slice %458 {offsets = [48, 0], sizes = [8, 128], strides = [1, 1]} : vector<64x256xf32> to vector<8x128xf32>
    %621 = arith.truncf %619 : vector<8x128xf32> to vector<8x128xbf16>
    %cst_197 = arith.constant dense<0.000000e+00> : vector<8x128xf32>
    %622 = tpu.matmul %621, %459, %cst_197 {dimension_numbers = #tpu.dot_dimension_numbers<[1], [0], [0], [1], [0, 0, 1, 1], [], []>} : vector<8x128xbf16>, vector<128x128xbf16>, vector<8x128xf32> -> vector<8x128xf32>
    %623 = arith.addf %622, %462 : vector<8x128xf32>
    %624 = arith.addf %620, %623 : vector<8x128xf32>
    %625 = arith.negf %624 : vector<8x128xf32>
    %626 = math.exp %625 : vector<8x128xf32>
    %cst_198 = arith.constant 1.000000e+00 : f32
    %627 = vector.broadcast %cst_198 : f32 to vector<8x128xf32>
    %628 = arith.addf %627, %626 : vector<8x128xf32>
    %629 = arith.divf %627, %628 : vector<8x128xf32>
    %c64_i32_199 = arith.constant 64 : i32
    %630 = tpu.dynamic_rotate %629 by %c64_i32_199 dim 1 : vector<8x128xf32>, i32 -> vector<8x128xf32>
    %631 = arith.mulf %630, %623 : vector<8x128xf32>
    %632 = arith.addf %620, %631 : vector<8x128xf32>
    %633 = math.tanh %632 : vector<8x128xf32>
    %c96_i32_200 = arith.constant 96 : i32
    %634 = tpu.dynamic_rotate %629 by %c96_i32_200 dim 1 : vector<8x128xf32>, i32 -> vector<8x128xf32>
    %c64_i32_201 = arith.constant 64 : i32
    %635 = tpu.dynamic_rotate %633 by %c64_i32_201 dim 1 : vector<8x128xf32>, i32 -> vector<8x128xf32>
    %cst_202 = arith.constant 1.000000e+00 : f32
    %636 = vector.broadcast %cst_202 : f32 to vector<8x128xf32>
    %637 = arith.subf %636, %634 : vector<8x128xf32>
    %638 = arith.mulf %637, %635 : vector<8x128xf32>
    %639 = arith.mulf %634, %619 : vector<8x128xf32>
    %640 = arith.addf %638, %639 : vector<8x128xf32>
    %c6_i32_203 = arith.constant 6 : i32
    %641 = vector.broadcast %c6_i32_203 : i32 to vector<8x1xi32>
    %642 = arith.cmpi sgt, %0, %641 : vector<8x1xi32>
    %643 = vector.broadcast %642 : vector<8x1xi1> to vector<8x128xi1>
    %644 = arith.andi %3, %643 : vector<8x128xi1>
    %645 = arith.select %644, %640, %619 : vector<8x128xi1>, vector<8x128xf32>
    %646 = vector.extract_strided_slice %458 {offsets = [56, 0], sizes = [8, 128], strides = [1, 1]} : vector<64x256xf32> to vector<8x128xf32>
    %647 = arith.truncf %645 : vector<8x128xf32> to vector<8x128xbf16>
    %cst_204 = arith.constant dense<0.000000e+00> : vector<8x128xf32>
    %648 = tpu.matmul %647, %459, %cst_204 {dimension_numbers = #tpu.dot_dimension_numbers<[1], [0], [0], [1], [0, 0, 1, 1], [], []>} : vector<8x128xbf16>, vector<128x128xbf16>, vector<8x128xf32> -> vector<8x128xf32>
    %649 = arith.addf %648, %462 : vector<8x128xf32>
    %650 = arith.addf %646, %649 : vector<8x128xf32>
    %651 = arith.negf %650 : vector<8x128xf32>
    %652 = math.exp %651 : vector<8x128xf32>
    %cst_205 = arith.constant 1.000000e+00 : f32
    %653 = vector.broadcast %cst_205 : f32 to vector<8x128xf32>
    %654 = arith.addf %653, %652 : vector<8x128xf32>
    %655 = arith.divf %653, %654 : vector<8x128xf32>
    %c64_i32_206 = arith.constant 64 : i32
    %656 = tpu.dynamic_rotate %655 by %c64_i32_206 dim 1 : vector<8x128xf32>, i32 -> vector<8x128xf32>
    %657 = arith.mulf %656, %649 : vector<8x128xf32>
    %658 = arith.addf %646, %657 : vector<8x128xf32>
    %659 = math.tanh %658 : vector<8x128xf32>
    %c96_i32_207 = arith.constant 96 : i32
    %660 = tpu.dynamic_rotate %655 by %c96_i32_207 dim 1 : vector<8x128xf32>, i32 -> vector<8x128xf32>
    %c64_i32_208 = arith.constant 64 : i32
    %661 = tpu.dynamic_rotate %659 by %c64_i32_208 dim 1 : vector<8x128xf32>, i32 -> vector<8x128xf32>
    %cst_209 = arith.constant 1.000000e+00 : f32
    %662 = vector.broadcast %cst_209 : f32 to vector<8x128xf32>
    %663 = arith.subf %662, %660 : vector<8x128xf32>
    %664 = arith.mulf %663, %661 : vector<8x128xf32>
    %665 = arith.mulf %660, %645 : vector<8x128xf32>
    %666 = arith.addf %664, %665 : vector<8x128xf32>
    %c7_i32_210 = arith.constant 7 : i32
    %667 = vector.broadcast %c7_i32_210 : i32 to vector<8x1xi32>
    %668 = arith.cmpi sgt, %0, %667 : vector<8x1xi32>
    %669 = vector.broadcast %668 : vector<8x1xi1> to vector<8x128xi1>
    %670 = arith.andi %3, %669 : vector<8x128xi1>
    %671 = arith.select %670, %666, %645 : vector<8x128xi1>, vector<8x128xf32>
    %c0_211 = arith.constant 0 : index
    %c0_212 = arith.constant 0 : index
    %672 = vector.load %arg11[%c0_211, %c0_212] : memref<128x128xbf16, #tpu.memory_space<vmem>>, vector<128x128xbf16>
    %c0_213 = arith.constant 0 : index
    %c0_214 = arith.constant 0 : index
    %673 = vector.load %arg13[%c0_213, %c0_214] : memref<1x128xf32, #tpu.memory_space<vmem>>, vector<1x128xf32>
    %674 = vector.shape_cast %673 : vector<1x128xf32> to vector<1x128xf32>
    %675 = vector.broadcast %674 : vector<1x128xf32> to vector<8x128xf32>
    %cst_215 = arith.constant 0.000000e+00 : f32
    %676 = vector.broadcast %cst_215 : f32 to vector<8x128xf32>
    %677 = vector.extract_strided_slice %458 {offsets = [56, 128], sizes = [8, 128], strides = [1, 1]} : vector<64x256xf32> to vector<8x128xf32>
    %678 = arith.truncf %676 : vector<8x128xf32> to vector<8x128xbf16>
    %cst_216 = arith.constant dense<0.000000e+00> : vector<8x128xf32>
    %679 = tpu.matmul %678, %672, %cst_216 {dimension_numbers = #tpu.dot_dimension_numbers<[1], [0], [0], [1], [0, 0, 1, 1], [], []>} : vector<8x128xbf16>, vector<128x128xbf16>, vector<8x128xf32> -> vector<8x128xf32>
    %680 = arith.addf %679, %675 : vector<8x128xf32>
    %681 = arith.addf %677, %680 : vector<8x128xf32>
    %682 = arith.negf %681 : vector<8x128xf32>
    %683 = math.exp %682 : vector<8x128xf32>
    %cst_217 = arith.constant 1.000000e+00 : f32
    %684 = vector.broadcast %cst_217 : f32 to vector<8x128xf32>
    %685 = arith.addf %684, %683 : vector<8x128xf32>
    %686 = arith.divf %684, %685 : vector<8x128xf32>
    %c64_i32_218 = arith.constant 64 : i32
    %687 = tpu.dynamic_rotate %686 by %c64_i32_218 dim 1 : vector<8x128xf32>, i32 -> vector<8x128xf32>
    %688 = arith.mulf %687, %680 : vector<8x128xf32>
    %689 = arith.addf %677, %688 : vector<8x128xf32>
    %690 = math.tanh %689 : vector<8x128xf32>
    %c96_i32_219 = arith.constant 96 : i32
    %691 = tpu.dynamic_rotate %686 by %c96_i32_219 dim 1 : vector<8x128xf32>, i32 -> vector<8x128xf32>
    %c64_i32_220 = arith.constant 64 : i32
    %692 = tpu.dynamic_rotate %690 by %c64_i32_220 dim 1 : vector<8x128xf32>, i32 -> vector<8x128xf32>
    %cst_221 = arith.constant 1.000000e+00 : f32
    %693 = vector.broadcast %cst_221 : f32 to vector<8x128xf32>
    %694 = arith.subf %693, %691 : vector<8x128xf32>
    %695 = arith.mulf %694, %692 : vector<8x128xf32>
    %696 = arith.mulf %691, %676 : vector<8x128xf32>
    %697 = arith.addf %695, %696 : vector<8x128xf32>
    %c7_i32_222 = arith.constant 7 : i32
    %698 = vector.broadcast %c7_i32_222 : i32 to vector<8x1xi32>
    %699 = arith.cmpi sgt, %0, %698 : vector<8x1xi32>
    %700 = vector.broadcast %699 : vector<8x1xi1> to vector<8x128xi1>
    %701 = arith.andi %3, %700 : vector<8x128xi1>
    %702 = arith.select %701, %697, %676 : vector<8x128xi1>, vector<8x128xf32>
    %703 = vector.extract_strided_slice %458 {offsets = [48, 128], sizes = [8, 128], strides = [1, 1]} : vector<64x256xf32> to vector<8x128xf32>
    %704 = arith.truncf %702 : vector<8x128xf32> to vector<8x128xbf16>
    %cst_223 = arith.constant dense<0.000000e+00> : vector<8x128xf32>
    %705 = tpu.matmul %704, %672, %cst_223 {dimension_numbers = #tpu.dot_dimension_numbers<[1], [0], [0], [1], [0, 0, 1, 1], [], []>} : vector<8x128xbf16>, vector<128x128xbf16>, vector<8x128xf32> -> vector<8x128xf32>
    %706 = arith.addf %705, %675 : vector<8x128xf32>
    %707 = arith.addf %703, %706 : vector<8x128xf32>
    %708 = arith.negf %707 : vector<8x128xf32>
    %709 = math.exp %708 : vector<8x128xf32>
    %cst_224 = arith.constant 1.000000e+00 : f32
    %710 = vector.broadcast %cst_224 : f32 to vector<8x128xf32>
    %711 = arith.addf %710, %709 : vector<8x128xf32>
    %712 = arith.divf %710, %711 : vector<8x128xf32>
    %c64_i32_225 = arith.constant 64 : i32
    %713 = tpu.dynamic_rotate %712 by %c64_i32_225 dim 1 : vector<8x128xf32>, i32 -> vector<8x128xf32>
    %714 = arith.mulf %713, %706 : vector<8x128xf32>
    %715 = arith.addf %703, %714 : vector<8x128xf32>
    %716 = math.tanh %715 : vector<8x128xf32>
    %c96_i32_226 = arith.constant 96 : i32
    %717 = tpu.dynamic_rotate %712 by %c96_i32_226 dim 1 : vector<8x128xf32>, i32 -> vector<8x128xf32>
    %c64_i32_227 = arith.constant 64 : i32
    %718 = tpu.dynamic_rotate %716 by %c64_i32_227 dim 1 : vector<8x128xf32>, i32 -> vector<8x128xf32>
    %cst_228 = arith.constant 1.000000e+00 : f32
    %719 = vector.broadcast %cst_228 : f32 to vector<8x128xf32>
    %720 = arith.subf %719, %717 : vector<8x128xf32>
    %721 = arith.mulf %720, %718 : vector<8x128xf32>
    %722 = arith.mulf %717, %702 : vector<8x128xf32>
    %723 = arith.addf %721, %722 : vector<8x128xf32>
    %c6_i32_229 = arith.constant 6 : i32
    %724 = vector.broadcast %c6_i32_229 : i32 to vector<8x1xi32>
    %725 = arith.cmpi sgt, %0, %724 : vector<8x1xi32>
    %726 = vector.broadcast %725 : vector<8x1xi1> to vector<8x128xi1>
    %727 = arith.andi %3, %726 : vector<8x128xi1>
    %728 = arith.select %727, %723, %702 : vector<8x128xi1>, vector<8x128xf32>
    %729 = vector.extract_strided_slice %458 {offsets = [40, 128], sizes = [8, 128], strides = [1, 1]} : vector<64x256xf32> to vector<8x128xf32>
    %730 = arith.truncf %728 : vector<8x128xf32> to vector<8x128xbf16>
    %cst_230 = arith.constant dense<0.000000e+00> : vector<8x128xf32>
    %731 = tpu.matmul %730, %672, %cst_230 {dimension_numbers = #tpu.dot_dimension_numbers<[1], [0], [0], [1], [0, 0, 1, 1], [], []>} : vector<8x128xbf16>, vector<128x128xbf16>, vector<8x128xf32> -> vector<8x128xf32>
    %732 = arith.addf %731, %675 : vector<8x128xf32>
    %733 = arith.addf %729, %732 : vector<8x128xf32>
    %734 = arith.negf %733 : vector<8x128xf32>
    %735 = math.exp %734 : vector<8x128xf32>
    %cst_231 = arith.constant 1.000000e+00 : f32
    %736 = vector.broadcast %cst_231 : f32 to vector<8x128xf32>
    %737 = arith.addf %736, %735 : vector<8x128xf32>
    %738 = arith.divf %736, %737 : vector<8x128xf32>
    %c64_i32_232 = arith.constant 64 : i32
    %739 = tpu.dynamic_rotate %738 by %c64_i32_232 dim 1 : vector<8x128xf32>, i32 -> vector<8x128xf32>
    %740 = arith.mulf %739, %732 : vector<8x128xf32>
    %741 = arith.addf %729, %740 : vector<8x128xf32>
    %742 = math.tanh %741 : vector<8x128xf32>
    %c96_i32_233 = arith.constant 96 : i32
    %743 = tpu.dynamic_rotate %738 by %c96_i32_233 dim 1 : vector<8x128xf32>, i32 -> vector<8x128xf32>
    %c64_i32_234 = arith.constant 64 : i32
    %744 = tpu.dynamic_rotate %742 by %c64_i32_234 dim 1 : vector<8x128xf32>, i32 -> vector<8x128xf32>
    %cst_235 = arith.constant 1.000000e+00 : f32
    %745 = vector.broadcast %cst_235 : f32 to vector<8x128xf32>
    %746 = arith.subf %745, %743 : vector<8x128xf32>
    %747 = arith.mulf %746, %744 : vector<8x128xf32>
    %748 = arith.mulf %743, %728 : vector<8x128xf32>
    %749 = arith.addf %747, %748 : vector<8x128xf32>
    %c5_i32_236 = arith.constant 5 : i32
    %750 = vector.broadcast %c5_i32_236 : i32 to vector<8x1xi32>
    %751 = arith.cmpi sgt, %0, %750 : vector<8x1xi32>
    %752 = vector.broadcast %751 : vector<8x1xi1> to vector<8x128xi1>
    %753 = arith.andi %3, %752 : vector<8x128xi1>
    %754 = arith.select %753, %749, %728 : vector<8x128xi1>, vector<8x128xf32>
    %755 = vector.extract_strided_slice %458 {offsets = [32, 128], sizes = [8, 128], strides = [1, 1]} : vector<64x256xf32> to vector<8x128xf32>
    %756 = arith.truncf %754 : vector<8x128xf32> to vector<8x128xbf16>
    %cst_237 = arith.constant dense<0.000000e+00> : vector<8x128xf32>
    %757 = tpu.matmul %756, %672, %cst_237 {dimension_numbers = #tpu.dot_dimension_numbers<[1], [0], [0], [1], [0, 0, 1, 1], [], []>} : vector<8x128xbf16>, vector<128x128xbf16>, vector<8x128xf32> -> vector<8x128xf32>
    %758 = arith.addf %757, %675 : vector<8x128xf32>
    %759 = arith.addf %755, %758 : vector<8x128xf32>
    %760 = arith.negf %759 : vector<8x128xf32>
    %761 = math.exp %760 : vector<8x128xf32>
    %cst_238 = arith.constant 1.000000e+00 : f32
    %762 = vector.broadcast %cst_238 : f32 to vector<8x128xf32>
    %763 = arith.addf %762, %761 : vector<8x128xf32>
    %764 = arith.divf %762, %763 : vector<8x128xf32>
    %c64_i32_239 = arith.constant 64 : i32
    %765 = tpu.dynamic_rotate %764 by %c64_i32_239 dim 1 : vector<8x128xf32>, i32 -> vector<8x128xf32>
    %766 = arith.mulf %765, %758 : vector<8x128xf32>
    %767 = arith.addf %755, %766 : vector<8x128xf32>
    %768 = math.tanh %767 : vector<8x128xf32>
    %c96_i32_240 = arith.constant 96 : i32
    %769 = tpu.dynamic_rotate %764 by %c96_i32_240 dim 1 : vector<8x128xf32>, i32 -> vector<8x128xf32>
    %c64_i32_241 = arith.constant 64 : i32
    %770 = tpu.dynamic_rotate %768 by %c64_i32_241 dim 1 : vector<8x128xf32>, i32 -> vector<8x128xf32>
    %cst_242 = arith.constant 1.000000e+00 : f32
    %771 = vector.broadcast %cst_242 : f32 to vector<8x128xf32>
    %772 = arith.subf %771, %769 : vector<8x128xf32>
    %773 = arith.mulf %772, %770 : vector<8x128xf32>
    %774 = arith.mulf %769, %754 : vector<8x128xf32>
    %775 = arith.addf %773, %774 : vector<8x128xf32>
    %c4_i32_243 = arith.constant 4 : i32
    %776 = vector.broadcast %c4_i32_243 : i32 to vector<8x1xi32>
    %777 = arith.cmpi sgt, %0, %776 : vector<8x1xi32>
    %778 = vector.broadcast %777 : vector<8x1xi1> to vector<8x128xi1>
    %779 = arith.andi %3, %778 : vector<8x128xi1>
    %780 = arith.select %779, %775, %754 : vector<8x128xi1>, vector<8x128xf32>
    %781 = vector.extract_strided_slice %458 {offsets = [24, 128], sizes = [8, 128], strides = [1, 1]} : vector<64x256xf32> to vector<8x128xf32>
    %782 = arith.truncf %780 : vector<8x128xf32> to vector<8x128xbf16>
    %cst_244 = arith.constant dense<0.000000e+00> : vector<8x128xf32>
    %783 = tpu.matmul %782, %672, %cst_244 {dimension_numbers = #tpu.dot_dimension_numbers<[1], [0], [0], [1], [0, 0, 1, 1], [], []>} : vector<8x128xbf16>, vector<128x128xbf16>, vector<8x128xf32> -> vector<8x128xf32>
    %784 = arith.addf %783, %675 : vector<8x128xf32>
    %785 = arith.addf %781, %784 : vector<8x128xf32>
    %786 = arith.negf %785 : vector<8x128xf32>
    %787 = math.exp %786 : vector<8x128xf32>
    %cst_245 = arith.constant 1.000000e+00 : f32
    %788 = vector.broadcast %cst_245 : f32 to vector<8x128xf32>
    %789 = arith.addf %788, %787 : vector<8x128xf32>
    %790 = arith.divf %788, %789 : vector<8x128xf32>
    %c64_i32_246 = arith.constant 64 : i32
    %791 = tpu.dynamic_rotate %790 by %c64_i32_246 dim 1 : vector<8x128xf32>, i32 -> vector<8x128xf32>
    %792 = arith.mulf %791, %784 : vector<8x128xf32>
    %793 = arith.addf %781, %792 : vector<8x128xf32>
    %794 = math.tanh %793 : vector<8x128xf32>
    %c96_i32_247 = arith.constant 96 : i32
    %795 = tpu.dynamic_rotate %790 by %c96_i32_247 dim 1 : vector<8x128xf32>, i32 -> vector<8x128xf32>
    %c64_i32_248 = arith.constant 64 : i32
    %796 = tpu.dynamic_rotate %794 by %c64_i32_248 dim 1 : vector<8x128xf32>, i32 -> vector<8x128xf32>
    %cst_249 = arith.constant 1.000000e+00 : f32
    %797 = vector.broadcast %cst_249 : f32 to vector<8x128xf32>
    %798 = arith.subf %797, %795 : vector<8x128xf32>
    %799 = arith.mulf %798, %796 : vector<8x128xf32>
    %800 = arith.mulf %795, %780 : vector<8x128xf32>
    %801 = arith.addf %799, %800 : vector<8x128xf32>
    %c3_i32_250 = arith.constant 3 : i32
    %802 = vector.broadcast %c3_i32_250 : i32 to vector<8x1xi32>
    %803 = arith.cmpi sgt, %0, %802 : vector<8x1xi32>
    %804 = vector.broadcast %803 : vector<8x1xi1> to vector<8x128xi1>
    %805 = arith.andi %3, %804 : vector<8x128xi1>
    %806 = arith.select %805, %801, %780 : vector<8x128xi1>, vector<8x128xf32>
    %807 = vector.extract_strided_slice %458 {offsets = [16, 128], sizes = [8, 128], strides = [1, 1]} : vector<64x256xf32> to vector<8x128xf32>
    %808 = arith.truncf %806 : vector<8x128xf32> to vector<8x128xbf16>
    %cst_251 = arith.constant dense<0.000000e+00> : vector<8x128xf32>
    %809 = tpu.matmul %808, %672, %cst_251 {dimension_numbers = #tpu.dot_dimension_numbers<[1], [0], [0], [1], [0, 0, 1, 1], [], []>} : vector<8x128xbf16>, vector<128x128xbf16>, vector<8x128xf32> -> vector<8x128xf32>
    %810 = arith.addf %809, %675 : vector<8x128xf32>
    %811 = arith.addf %807, %810 : vector<8x128xf32>
    %812 = arith.negf %811 : vector<8x128xf32>
    %813 = math.exp %812 : vector<8x128xf32>
    %cst_252 = arith.constant 1.000000e+00 : f32
    %814 = vector.broadcast %cst_252 : f32 to vector<8x128xf32>
    %815 = arith.addf %814, %813 : vector<8x128xf32>
    %816 = arith.divf %814, %815 : vector<8x128xf32>
    %c64_i32_253 = arith.constant 64 : i32
    %817 = tpu.dynamic_rotate %816 by %c64_i32_253 dim 1 : vector<8x128xf32>, i32 -> vector<8x128xf32>
    %818 = arith.mulf %817, %810 : vector<8x128xf32>
    %819 = arith.addf %807, %818 : vector<8x128xf32>
    %820 = math.tanh %819 : vector<8x128xf32>
    %c96_i32_254 = arith.constant 96 : i32
    %821 = tpu.dynamic_rotate %816 by %c96_i32_254 dim 1 : vector<8x128xf32>, i32 -> vector<8x128xf32>
    %c64_i32_255 = arith.constant 64 : i32
    %822 = tpu.dynamic_rotate %820 by %c64_i32_255 dim 1 : vector<8x128xf32>, i32 -> vector<8x128xf32>
    %cst_256 = arith.constant 1.000000e+00 : f32
    %823 = vector.broadcast %cst_256 : f32 to vector<8x128xf32>
    %824 = arith.subf %823, %821 : vector<8x128xf32>
    %825 = arith.mulf %824, %822 : vector<8x128xf32>
    %826 = arith.mulf %821, %806 : vector<8x128xf32>
    %827 = arith.addf %825, %826 : vector<8x128xf32>
    %c2_i32_257 = arith.constant 2 : i32
    %828 = vector.broadcast %c2_i32_257 : i32 to vector<8x1xi32>
    %829 = arith.cmpi sgt, %0, %828 : vector<8x1xi32>
    %830 = vector.broadcast %829 : vector<8x1xi1> to vector<8x128xi1>
    %831 = arith.andi %3, %830 : vector<8x128xi1>
    %832 = arith.select %831, %827, %806 : vector<8x128xi1>, vector<8x128xf32>
    %833 = vector.extract_strided_slice %458 {offsets = [8, 128], sizes = [8, 128], strides = [1, 1]} : vector<64x256xf32> to vector<8x128xf32>
    %834 = arith.truncf %832 : vector<8x128xf32> to vector<8x128xbf16>
    %cst_258 = arith.constant dense<0.000000e+00> : vector<8x128xf32>
    %835 = tpu.matmul %834, %672, %cst_258 {dimension_numbers = #tpu.dot_dimension_numbers<[1], [0], [0], [1], [0, 0, 1, 1], [], []>} : vector<8x128xbf16>, vector<128x128xbf16>, vector<8x128xf32> -> vector<8x128xf32>
    %836 = arith.addf %835, %675 : vector<8x128xf32>
    %837 = arith.addf %833, %836 : vector<8x128xf32>
    %838 = arith.negf %837 : vector<8x128xf32>
    %839 = math.exp %838 : vector<8x128xf32>
    %cst_259 = arith.constant 1.000000e+00 : f32
    %840 = vector.broadcast %cst_259 : f32 to vector<8x128xf32>
    %841 = arith.addf %840, %839 : vector<8x128xf32>
    %842 = arith.divf %840, %841 : vector<8x128xf32>
    %c64_i32_260 = arith.constant 64 : i32
    %843 = tpu.dynamic_rotate %842 by %c64_i32_260 dim 1 : vector<8x128xf32>, i32 -> vector<8x128xf32>
    %844 = arith.mulf %843, %836 : vector<8x128xf32>
    %845 = arith.addf %833, %844 : vector<8x128xf32>
    %846 = math.tanh %845 : vector<8x128xf32>
    %c96_i32_261 = arith.constant 96 : i32
    %847 = tpu.dynamic_rotate %842 by %c96_i32_261 dim 1 : vector<8x128xf32>, i32 -> vector<8x128xf32>
    %c64_i32_262 = arith.constant 64 : i32
    %848 = tpu.dynamic_rotate %846 by %c64_i32_262 dim 1 : vector<8x128xf32>, i32 -> vector<8x128xf32>
    %cst_263 = arith.constant 1.000000e+00 : f32
    %849 = vector.broadcast %cst_263 : f32 to vector<8x128xf32>
    %850 = arith.subf %849, %847 : vector<8x128xf32>
    %851 = arith.mulf %850, %848 : vector<8x128xf32>
    %852 = arith.mulf %847, %832 : vector<8x128xf32>
    %853 = arith.addf %851, %852 : vector<8x128xf32>
    %c1_i32_264 = arith.constant 1 : i32
    %854 = vector.broadcast %c1_i32_264 : i32 to vector<8x1xi32>
    %855 = arith.cmpi sgt, %0, %854 : vector<8x1xi32>
    %856 = vector.broadcast %855 : vector<8x1xi1> to vector<8x128xi1>
    %857 = arith.andi %3, %856 : vector<8x128xi1>
    %858 = arith.select %857, %853, %832 : vector<8x128xi1>, vector<8x128xf32>
    %859 = vector.extract_strided_slice %458 {offsets = [0, 128], sizes = [8, 128], strides = [1, 1]} : vector<64x256xf32> to vector<8x128xf32>
    %860 = arith.truncf %858 : vector<8x128xf32> to vector<8x128xbf16>
    %cst_265 = arith.constant dense<0.000000e+00> : vector<8x128xf32>
    %861 = tpu.matmul %860, %672, %cst_265 {dimension_numbers = #tpu.dot_dimension_numbers<[1], [0], [0], [1], [0, 0, 1, 1], [], []>} : vector<8x128xbf16>, vector<128x128xbf16>, vector<8x128xf32> -> vector<8x128xf32>
    %862 = arith.addf %861, %675 : vector<8x128xf32>
    %863 = arith.addf %859, %862 : vector<8x128xf32>
    %864 = arith.negf %863 : vector<8x128xf32>
    %865 = math.exp %864 : vector<8x128xf32>
    %cst_266 = arith.constant 1.000000e+00 : f32
    %866 = vector.broadcast %cst_266 : f32 to vector<8x128xf32>
    %867 = arith.addf %866, %865 : vector<8x128xf32>
    %868 = arith.divf %866, %867 : vector<8x128xf32>
    %c64_i32_267 = arith.constant 64 : i32
    %869 = tpu.dynamic_rotate %868 by %c64_i32_267 dim 1 : vector<8x128xf32>, i32 -> vector<8x128xf32>
    %870 = arith.mulf %869, %862 : vector<8x128xf32>
    %871 = arith.addf %859, %870 : vector<8x128xf32>
    %872 = math.tanh %871 : vector<8x128xf32>
    %c96_i32_268 = arith.constant 96 : i32
    %873 = tpu.dynamic_rotate %868 by %c96_i32_268 dim 1 : vector<8x128xf32>, i32 -> vector<8x128xf32>
    %c64_i32_269 = arith.constant 64 : i32
    %874 = tpu.dynamic_rotate %872 by %c64_i32_269 dim 1 : vector<8x128xf32>, i32 -> vector<8x128xf32>
    %cst_270 = arith.constant 1.000000e+00 : f32
    %875 = vector.broadcast %cst_270 : f32 to vector<8x128xf32>
    %876 = arith.subf %875, %873 : vector<8x128xf32>
    %877 = arith.mulf %876, %874 : vector<8x128xf32>
    %878 = arith.mulf %873, %858 : vector<8x128xf32>
    %879 = arith.addf %877, %878 : vector<8x128xf32>
    %c0_i32_271 = arith.constant 0 : i32
    %880 = vector.broadcast %c0_i32_271 : i32 to vector<8x1xi32>
    %881 = arith.cmpi sgt, %0, %880 : vector<8x1xi32>
    %882 = vector.broadcast %881 : vector<8x1xi1> to vector<8x128xi1>
    %883 = arith.andi %3, %882 : vector<8x128xi1>
    %884 = arith.select %883, %879, %858 : vector<8x128xi1>, vector<8x128xf32>
    %c0_272 = arith.constant 0 : index
    %c0_273 = arith.constant 0 : index
    %885 = vector.load %arg15[%c0_272, %c0_273] : memref<1x128xf32, #tpu.memory_space<vmem>>, vector<1x128xf32>
    %886 = vector.shape_cast %885 : vector<1x128xf32> to vector<1x128xf32>
    %887 = vector.broadcast %886 : vector<1x128xf32> to vector<8x128xf32>
    %888 = arith.truncf %671 : vector<8x128xf32> to vector<8x128xbf16>
    %c0_274 = arith.constant 0 : index
    %c0_275 = arith.constant 0 : index
    %889 = vector.load %arg14[%c0_274, %c0_275] : memref<256x128xbf16, #tpu.memory_space<vmem>>, vector<128x128xbf16>
    %cst_276 = arith.constant dense<0.000000e+00> : vector<8x128xf32>
    %890 = tpu.matmul %888, %889, %cst_276 {dimension_numbers = #tpu.dot_dimension_numbers<[1], [0], [0], [1], [0, 0, 1, 1], [], []>} : vector<8x128xbf16>, vector<128x128xbf16>, vector<8x128xf32> -> vector<8x128xf32>
    %891 = arith.addf %887, %890 : vector<8x128xf32>
    %892 = arith.truncf %884 : vector<8x128xf32> to vector<8x128xbf16>
    %c128_277 = arith.constant 128 : index
    %c0_278 = arith.constant 0 : index
    %893 = vector.load %arg14[%c128_277, %c0_278] : memref<256x128xbf16, #tpu.memory_space<vmem>>, vector<128x128xbf16>
    %cst_279 = arith.constant dense<0.000000e+00> : vector<8x128xf32>
    %894 = tpu.matmul %892, %893, %cst_279 {dimension_numbers = #tpu.dot_dimension_numbers<[1], [0], [0], [1], [0, 0, 1, 1], [], []>} : vector<8x128xbf16>, vector<128x128xbf16>, vector<8x128xf32> -> vector<8x128xf32>
    %895 = arith.addf %891, %894 : vector<8x128xf32>
    %c0_280 = arith.constant 0 : index
    %c0_281 = arith.constant 0 : index
    %896 = vector.load %arg16[%c0_280, %c0_281] : memref<8x128xf32, #tpu.memory_space<vmem>>, vector<8x128xf32>
    tpu.vector_store %arg16[%c0_280, %c0_281], %895 {strides = array<i32>} : memref<8x128xf32, #tpu.memory_space<vmem>>, vector<8x128xf32>,
    return
  }
}

</mosaic_0001>

<llo_original>
// kernel: gru_forward.1
$region0: #{gru_forward.1}
  #allocation0 [shape = 'u32[]', space=smem, size = 0x4, offset = 0x4, fixed_abs, tag = 'smem constant byte address 0x4 - core index']
  #allocation1 [shape = 'u32[144,128]{1,0:T(1,128)}', space=vmem, size = 0x12000, scoped, tag = 'internal scratch']
  #allocation2 [shape = 'f32[64,256]{1,0:T(8,128)}', space=vmem, size = 0x10000, scoped, tag = 'scratch operand']
  %s0 = inlined_call_operand.vmem [shape: bf16[64,128], index: 0, kind: input, shape index: {}]
  %s1 = inlined_call_operand.vmem [shape: s32[8,1], index: 1, kind: input, shape index: {}]
  %s2 = inlined_call_operand.vmem [shape: bf16[128,256], index: 2, kind: input, shape index: {}]
  %s3 = inlined_call_operand.vmem [shape: f32[1,256], index: 3, kind: input, shape index: {}]
  %s4 = inlined_call_operand.vmem [shape: bf16[128,128], index: 4, kind: input, shape index: {}]
  %s5 = inlined_call_operand.hbm [shape: bf16[128,128], index: 5, kind: input, shape index: {}]
  %s6 = inlined_call_operand.vmem [shape: f32[1,128], index: 6, kind: input, shape index: {}]
  %s7 = inlined_call_operand.vmem [shape: f32[1,128], index: 7, kind: input, shape index: {}]
  %s8 = inlined_call_operand.hbm [shape: bf16[256,256], index: 8, kind: input, shape index: {}]
  %s9 = inlined_call_operand.vmem [shape: f32[1,256], index: 9, kind: input, shape index: {}]
  %s10 = inlined_call_operand.hbm [shape: bf16[128,128], index: 10, kind: input, shape index: {}]
  %s11 = inlined_call_operand.hbm [shape: bf16[128,128], index: 11, kind: input, shape index: {}]
  %s12 = inlined_call_operand.vmem [shape: f32[1,128], index: 12, kind: input, shape index: {}]
  %s13 = inlined_call_operand.vmem [shape: f32[1,128], index: 13, kind: input, shape index: {}]
  %s14 = inlined_call_operand.hbm [shape: bf16[256,128], index: 14, kind: input, shape index: {}]
  %s15 = inlined_call_operand.hbm [shape: f32[1,128], index: 15, kind: input, shape index: {}]
  %s16 = inlined_call_operand.vmem [shape: f32[8,128], index: 16, kind: output, shape index: {}]
  %s17 = sld [smem:[#allocation0]]
  $region98: #{gru_forward.1} parent=0
    _
  %s19 = ssub.s32 1, %s17
  %s20 = scalar_select 0, %s19, %s17
  $region1: #{gru_forward.1} parent=0
    #allocation3 [shape = 'u8[32768]{0}', space=vmem, size = 0x8000, scoped, tag = 'input window, operand 5, single buffered']
    #allocation4 [shape = 's32[1]{0}', space=sflag, size = 0x4, scoped, tag = 'scoped memory for gru_forward.1']
    #allocation5 [shape = 'u8[131072]{0}', space=vmem, size = 0x20000, scoped, tag = 'input window, operand 8, single buffered']
    #allocation6 [shape = 's32[1]{0}', space=sflag, size = 0x4, scoped, tag = 'scoped memory for gru_forward.1']
    #allocation7 [shape = 'u8[32768]{0}', space=vmem, size = 0x8000, scoped, tag = 'input window, operand 10, single buffered']
    #allocation8 [shape = 'u8[32768]{0}', space=vmem, size = 0x8000, scoped, tag = 'input window, operand 11, single buffered']
    #allocation9 [shape = 's32[1]{0}', space=sflag, size = 0x4, scoped, tag = 'scoped memory for gru_forward.1']
    #allocation10 [shape = 'u8[65536]{0}', space=vmem, size = 0x10000, scoped, tag = 'input window, operand 14, single buffered']
    #allocation11 [shape = 'u8[512]{0}', space=vmem, size = 0x400, scoped, tag = 'input window, operand 15, single buffered']
    #allocation12 [shape = 's32[1]{0}', space=sflag, size = 0x4, scoped, tag = 'scoped memory for gru_forward.1']
    %21 = vsyncpa [#allocation4], 0
    %22 = vsyncpa [#allocation6], 0
    %23 = vsyncpa [#allocation9], 0
    %24 = vsyncpa [#allocation12], 0
    // Predicated region
    $region2: #{gru_forward.1} parent=1 // pred_check
      _
    $region3: #{gru_forward.1} parent=1 // pred_check_branch
      %26 = sbr.rel (0) target = $region5
    $region4: #{gru_forward.1} parent=1 // pred_region
      _
    $region5: #{gru_forward.1} parent=1 // pred_fallthru
      _
    // Predicated region
    $region6: #{gru_forward.1} parent=1 // pred_check
      _
    $region7: #{gru_forward.1} parent=1 // pred_check_branch
      %28 = sbr.rel (0) target = $region9
    $region8: #{gru_forward.1} parent=1 // pred_region
      _
    $region9: #{gru_forward.1} parent=1 // pred_fallthru
      _
    // Predicated region
    $region10: #{gru_forward.1} parent=1 // pred_check
      _
    $region11: #{gru_forward.1} parent=1 // pred_check_branch
      %30 = sbr.rel (0) target = $region13
    $region12: #{gru_forward.1} parent=1 // pred_region
      _
    $region13: #{gru_forward.1} parent=1 // pred_fallthru
      _
    // Predicated region
    $region14: #{gru_forward.1} parent=1 // pred_check
      _
    $region15: #{gru_forward.1} parent=1 // pred_check_branch
      %32 = sbr.rel (0) target = $region17
    $region16: #{gru_forward.1} parent=1 // pred_region
      _
    $region17: #{gru_forward.1} parent=1 // pred_fallthru
      _
    // Predicated region
    $region18: #{gru_forward.1} parent=1 // pred_check
      _
    $region19: #{gru_forward.1} parent=1 // pred_check_branch
      %34 = sbr.rel (0) target = $region21
    $region20: #{gru_forward.1} parent=1 // pred_region
      _
    $region21: #{gru_forward.1} parent=1 // pred_fallthru
      _
    // Predicated region
    $region22: #{gru_forward.1} parent=1 // pred_check
      _
    $region23: #{gru_forward.1} parent=1 // pred_check_branch
      %36 = sbr.rel (0) target = $region25
    $region24: #{gru_forward.1} parent=1 // pred_region
      %s38 = ssub.s32 1024, 1024
      %39 = vsyncadd [#allocation4], %s38
      %s40 = sshll.u32 [#allocation3], 4
      %s41 = int_to_ptr.vmem [resolvable:$true] %s40
      %46 = dma.hbm_to_vmem [thread:$0]  %s5, 1024, %s41, [#allocation4], 64, 64, 4
    $region25: #{gru_forward.1} parent=1 // pred_fallthru
      _
    // Predicated region
    $region26: #{gru_forward.1} parent=1 // pred_check
      _
    $region27: #{gru_forward.1} parent=1 // pred_check_branch
      %48 = sbr.rel (0) target = $region29
    $region28: #{gru_forward.1} parent=1 // pred_region
      _
    $region29: #{gru_forward.1} parent=1 // pred_fallthru
      _
    // Predicated region
    $region30: #{gru_forward.1} parent=1 // pred_check
      _
    $region31: #{gru_forward.1} parent=1 // pred_check_branch
      %50 = sbr.rel (0) target = $region33
    $region32: #{gru_forward.1} parent=1 // pred_region
      _
    $region33: #{gru_forward.1} parent=1 // pred_fallthru
      _
    // Predicated region
    $region34: #{gru_forward.1} parent=1 // pred_check
      _
    $region35: #{gru_forward.1} parent=1 // pred_check_branch
      %52 = sbr.rel (0) target = $region37
    $region36: #{gru_forward.1} parent=1 // pred_region
      %s54 = ssub.s32 4096, 4096
      %55 = vsyncadd [#allocation6], %s54
      %s56 = sshll.u32 [#allocation5], 4
      %s57 = int_to_ptr.vmem [resolvable:$true] %s56
      %62 = dma.hbm_to_vmem [thread:$0]  %s8, 4096, %s57, [#allocation6], 128, 128, 8
    $region37: #{gru_forward.1} parent=1 // pred_fallthru
      _
    // Predicated region
    $region38: #{gru_forward.1} parent=1 // pred_check
      _
    $region39: #{gru_forward.1} parent=1 // pred_check_branch
      %64 = sbr.rel (0) target = $region41
    $region40: #{gru_forward.1} parent=1 // pred_region
      _
    $region41: #{gru_forward.1} parent=1 // pred_fallthru
      _
    // Predicated region
    $region42: #{gru_forward.1} parent=1 // pred_check
      _
    $region43: #{gru_forward.1} parent=1 // pred_check_branch
      %66 = sbr.rel (0) target = $region45
    $region44: #{gru_forward.1} parent=1 // pred_region
      %s68 = ssub.s32 1024, 1024
      %69 = vsyncadd [#allocation6], %s68
      %s70 = sshll.u32 [#allocation7], 4
      %s71 = int_to_ptr.vmem [resolvable:$true] %s70
      %76 = dma.hbm_to_vmem [thread:$0]  %s10, 1024, %s71, [#allocation6], 64, 64, 4
    $region45: #{gru_forward.1} parent=1 // pred_fallthru
      _
    // Predicated region
    $region46: #{gru_forward.1} parent=1 // pred_check
      _
    $region47: #{gru_forward.1} parent=1 // pred_check_branch
      %78 = sbr.rel (0) target = $region49
    $region48: #{gru_forward.1} parent=1 // pred_region
      %s80 = ssub.s32 1024, 1024
      %81 = vsyncadd [#allocation9], %s80
      %s82 = sshll.u32 [#allocation8], 4
      %s83 = int_to_ptr.vmem [resolvable:$true] %s82
      %88 = dma.hbm_to_vmem [thread:$0]  %s11, 1024, %s83, [#allocation9], 64, 64, 4
    $region49: #{gru_forward.1} parent=1 // pred_fallthru
      _
    // Predicated region
    $region50: #{gru_forward.1} parent=1 // pred_check
      _
    $region51: #{gru_forward.1} parent=1 // pred_check_branch
      %90 = sbr.rel (0) target = $region53
    $region52: #{gru_forward.1} parent=1 // pred_region
      _
    $region53: #{gru_forward.1} parent=1 // pred_fallthru
      _
    // Predicated region
    $region54: #{gru_forward.1} parent=1 // pred_check
      _
    $region55: #{gru_forward.1} parent=1 // pred_check_branch
      %92 = sbr.rel (0) target = $region57
    $region56: #{gru_forward.1} parent=1 // pred_region
      _
    $region57: #{gru_forward.1} parent=1 // pred_fallthru
      _
    // Predicated region
    $region58: #{gru_forward.1} parent=1 // pred_check
      _
    $region59: #{gru_forward.1} parent=1 // pred_check_branch
      %94 = sbr.rel (0) target = $region61
    $region60: #{gru_forward.1} parent=1 // pred_region
      %s96 = ssub.s32 2048, 2048
      %97 = vsyncadd [#allocation9], %s96
      %s98 = sshll.u32 [#allocation10], 4
      %s99 = int_to_ptr.vmem [resolvable:$true] %s98
      %104 = dma.hbm_to_vmem [thread:$0]  %s14, 2048, %s99, [#allocation9], 64, 64, 4
    $region61: #{gru_forward.1} parent=1 // pred_fallthru
      _
    // Predicated region
    $region62: #{gru_forward.1} parent=1 // pred_check
      _
    $region63: #{gru_forward.1} parent=1 // pred_check_branch
      %106 = sbr.rel (0) target = $region65
    $region64: #{gru_forward.1} parent=1 // pred_region
      %s108 = ssub.s32 16, 16
      %109 = vsyncadd [#allocation12], %s108
      %s111 = sshll.u32 [#allocation11], 4
      %s112 = int_to_ptr.vmem [resolvable:$true] %s111
      %114 = dma.hbm_to_vmem [thread:$0]  %s15, 16, %s112, [#allocation12]
    $region65: #{gru_forward.1} parent=1 // pred_fallthru
      _
    // Predicated region
    $region66: #{gru_forward.1} parent=1 // pred_check
      _
    $region67: #{gru_forward.1} parent=1 // pred_check_branch
      %116 = sbr.rel (0) target = $region69
    $region68: #{gru_forward.1} parent=1 // pred_region
      %117 = dma.done [#allocation4], 1024
    $region69: #{gru_forward.1} parent=1 // pred_fallthru
      _
    // Predicated region
    $region70: #{gru_forward.1} parent=1 // pred_check
      _
    $region71: #{gru_forward.1} parent=1 // pred_check_branch
      %119 = sbr.rel (0) target = $region73
    $region72: #{gru_forward.1} parent=1 // pred_region
      %120 = dma.done [#allocation6], 4096
    $region73: #{gru_forward.1} parent=1 // pred_fallthru
      _
    // Predicated region
    $region74: #{gru_forward.1} parent=1 // pred_check
      _
    $region75: #{gru_forward.1} parent=1 // pred_check_branch
      %122 = sbr.rel (0) target = $region77
    $region76: #{gru_forward.1} parent=1 // pred_region
      %123 = dma.done [#allocation6], 1024
    $region77: #{gru_forward.1} parent=1 // pred_fallthru
      _
    // Predicated region
    $region78: #{gru_forward.1} parent=1 // pred_check
      _
    $region79: #{gru_forward.1} parent=1 // pred_check_branch
      %125 = sbr.rel (0) target = $region81
    $region80: #{gru_forward.1} parent=1 // pred_region
      %126 = dma.done [#allocation9], 1024
    $region81: #{gru_forward.1} parent=1 // pred_fallthru
      _
    // Predicated region
    $region82: #{gru_forward.1} parent=1 // pred_check
      _
    $region83: #{gru_forward.1} parent=1 // pred_check_branch
      %128 = sbr.rel (0) target = $region85
    $region84: #{gru_forward.1} parent=1 // pred_region
      %129 = dma.done [#allocation9], 2048
    $region85: #{gru_forward.1} parent=1 // pred_fallthru
      _
    // Predicated region
    $region86: #{gru_forward.1} parent=1 // pred_check
      _
    $region87: #{gru_forward.1} parent=1 // pred_check_branch
      %131 = sbr.rel (0) target = $region89
    $region88: #{gru_forward.1} parent=1 // pred_region
      %132 = dma.done [#allocation12], 16
    $region89: #{gru_forward.1} parent=1 // pred_fallthru
      _
    %v134 = vld [vmem:[%s1] sm:$0xff]
    %v135 = vlaneseq
    %v136 = vand.u32 %v135, 127
    %vm137 = vcmp.lt.s32.totalorder %v136, 32
    %v138 = vld [vmem:[%s0] sm:$0xf]
    %v139 = vld [vmem:[%s0 + $0x4] sm:$0xf]
    %v140 = vld [vmem:[%s0 + $0x8] sm:$0xf]
    %v141 = vld [vmem:[%s0 + $0xc] sm:$0xf]
    %v142 = vld [vmem:[%s0 + $0x10] sm:$0xf]
    %v143 = vld [vmem:[%s0 + $0x14] sm:$0xf]
    %v144 = vld [vmem:[%s0 + $0x18] sm:$0xf]
    %v145 = vld [vmem:[%s0 + $0x1c] sm:$0xf]
    %v146 = vld [vmem:[%s2] sm:$0xff]
    %v147 = vld [vmem:[%s2 + $0x8] sm:$0xff]
    %v148 = vld [vmem:[%s2 + $0x10] sm:$0xff]
    %v149 = vld [vmem:[%s2 + $0x18] sm:$0xff]
    %v150 = vld [vmem:[%s2 + $0x20] sm:$0xff]
    %v151 = vld [vmem:[%s2 + $0x28] sm:$0xff]
    %v152 = vld [vmem:[%s2 + $0x30] sm:$0xff]
    %v153 = vld [vmem:[%s2 + $0x38] sm:$0xff]
    %v154 = vld [vmem:[%s2 + $0x40] sm:$0xff]
    %v155 = vld [vmem:[%s2 + $0x48] sm:$0xff]
    %v156 = vld [vmem:[%s2 + $0x50] sm:$0xff]
    %v157 = vld [vmem:[%s2 + $0x58] sm:$0xff]
    %v158 = vld [vmem:[%s2 + $0x60] sm:$0xff]
    %v159 = vld [vmem:[%s2 + $0x68] sm:$0xff]
    %v160 = vld [vmem:[%s2 + $0x70] sm:$0xff]
    %v161 = vld [vmem:[%s2 + $0x78] sm:$0xff]
    %v162 = vld [vmem:[%s3] sm:$0x3]
    %v164 = vlaneseq
    %v165 = vshrl.u32 %v164, 7
    %v166 = vsub.s32 0, %v165
    %v167 = vrot.slane %v162, %v166
    %v168 = vlaneseq
    %v169 = vshrl.u32 %v168, 7
    %v170 = vsub.s32 1, %v169
    %v171 = vrot.slane %v162, %v170
    %v182 = vunpack.c.l.b16 %v138
    %v183 = vunpack.c.l.b16 %v139
    %v184 = vunpack.c.l.b16 %v140
    %v185 = vunpack.c.l.b16 %v141
    %v186 = vunpack.c.l.b16 %v142
    %v187 = vunpack.c.l.b16 %v143
    %v188 = vunpack.c.l.b16 %v144
    %v189 = vunpack.c.l.b16 %v145
    %v190 = vpack.c.b16 %v183, %v182
    %v191 = vpack.c.b16 %v185, %v184
    %v192 = vpack.c.b16 %v187, %v186
    %v193 = vpack.c.b16 %v189, %v188
    %v214 = vunpack.c.l.b16 %v146
    %v215 = vunpack.c.h.b16 %v146
    %v216 = vunpack.c.l.b16 %v147
    %v217 = vunpack.c.h.b16 %v147
    %v218 = vunpack.c.l.b16 %v148
    %v219 = vunpack.c.h.b16 %v148
    %v220 = vunpack.c.l.b16 %v149
    %v221 = vunpack.c.h.b16 %v149
    %v222 = vunpack.c.l.b16 %v150
    %v223 = vunpack.c.h.b16 %v150
    %v224 = vunpack.c.l.b16 %v151
    %v225 = vunpack.c.h.b16 %v151
    %v226 = vunpack.c.l.b16 %v152
    %v227 = vunpack.c.h.b16 %v152
    %v228 = vunpack.c.l.b16 %v153
    %v229 = vunpack.c.h.b16 %v153
    %v230 = vunpack.c.l.b16 %v154
    %v231 = vunpack.c.h.b16 %v154
    %v232 = vunpack.c.l.b16 %v155
    %v233 = vunpack.c.h.b16 %v155
    %v234 = vunpack.c.l.b16 %v156
    %v235 = vunpack.c.h.b16 %v156
    %v236 = vunpack.c.l.b16 %v157
    %v237 = vunpack.c.h.b16 %v157
    %v238 = vunpack.c.l.b16 %v158
    %v239 = vunpack.c.h.b16 %v158
    %v240 = vunpack.c.l.b16 %v159
    %v241 = vunpack.c.h.b16 %v159
    %v242 = vunpack.c.l.b16 %v160
    %v243 = vunpack.c.h.b16 %v160
    %v244 = vunpack.c.l.b16 %v161
    %v245 = vunpack.c.h.b16 %v161
    %v246 = vpack.c.b16 %v216, %v214
    %v247 = vpack.c.b16 %v217, %v215
    %v248 = vpack.c.b16 %v220, %v218
    %v249 = vpack.c.b16 %v221, %v219
    %v250 = vpack.c.b16 %v224, %v222
    %v251 = vpack.c.b16 %v225, %v223
    %v252 = vpack.c.b16 %v228, %v226
    %v253 = vpack.c.b16 %v229, %v227
    %v254 = vpack.c.b16 %v232, %v230
    %v255 = vpack.c.b16 %v233, %v231
    %v256 = vpack.c.b16 %v236, %v234
    %v257 = vpack.c.b16 %v237, %v235
    %v258 = vpack.c.b16 %v240, %v238
    %v259 = vpack.c.b16 %v241, %v239
    %v260 = vpack.c.b16 %v244, %v242
    %v261 = vpack.c.b16 %v245, %v243
    %278 = vmatprep.subr.bf16.mxu0 %v247
    %279 = vmatpush1.bf16.msra.mxu0 %v246
    %280 = vmatprep.subr.bf16.mxu0 %v249
    %281 = vmatpush1.bf16.msra.mxu0 %v248
    %282 = vmatprep.subr.bf16.mxu0 %v251
    %283 = vmatpush1.bf16.msra.mxu0 %v250
    %284 = vmatprep.subr.bf16.mxu0 %v253
    %285 = vmatpush1.bf16.msra.mxu0 %v252
    %286 = vmatprep.subr.bf16.mxu0 %v255
    %287 = vmatpush1.bf16.msra.mxu0 %v254
    %288 = vmatprep.subr.bf16.mxu0 %v257
    %289 = vmatpush1.bf16.msra.mxu0 %v256
    %290 = vmatprep.subr.bf16.mxu0 %v259
    %291 = vmatpush1.bf16.msra.mxu0 %v258
    %292 = vmatprep.subr.bf16.mxu0 %v261
    %293 = vmatpush1.bf16.msra.mxu0 %v260
    %294 = vmatprep.subr.bf16.mxu0 0
    %295 = vmatpush1.bf16.msra.mxu0 0
    %296 = vmatprep.subr.bf16.mxu0 0
    %297 = vmatpush1.bf16.msra.mxu0 0
    %298 = vmatprep.subr.bf16.mxu0 0
    %299 = vmatpush1.bf16.msra.mxu0 0
    %300 = vmatprep.subr.bf16.mxu0 0
    %301 = vmatpush1.bf16.msra.mxu0 0
    %302 = vmatprep.subr.bf16.mxu0 0
    %303 = vmatpush1.bf16.msra.mxu0 0
    %304 = vmatprep.subr.bf16.mxu0 0
    %305 = vmatpush1.bf16.msra.mxu0 0
    %306 = vmatprep.subr.bf16.mxu0 0
    %307 = vmatpush1.bf16.msra.mxu0 0
    %308 = vmatprep.subr.bf16.mxu0 0
    %309 = vmatpush1.bf16.msra.mxu0 0
    %310 = vmatprep.mubr.bf16.mxu0 0
    %311 = vmatmul.mubr.bf16.gmra.mrb[0].mxu0 %v190
    %v312 = vpop.f32.mrb[0].mxu0
    %v313 = vadd.f32 %v167, %v312
    %v314 = vpop.f32.mrb[0].mxu0
    %v315 = vadd.f32 %v171, %v314
    %v316 = vpop.f32.mrb[0].mxu0
    %v317 = vadd.f32 %v167, %v316
    %v318 = vpop.f32.mrb[0].mxu0
    %v319 = vadd.f32 %v171, %v318
    %320 = vmatprep.mubr.bf16.mxu0 0
    %321 = vmatmul.mubr.bf16.gmra.mrb[0].mxu0 %v191
    %v322 = vpop.f32.mrb[0].mxu0
    %v323 = vadd.f32 %v167, %v322
    %v324 = vpop.f32.mrb[0].mxu0
    %v325 = vadd.f32 %v171, %v324
    %v326 = vpop.f32.mrb[0].mxu0
    %v327 = vadd.f32 %v167, %v326
    %v328 = vpop.f32.mrb[0].mxu0
    %v329 = vadd.f32 %v171, %v328
    %330 = vmatprep.mubr.bf16.mxu0 0
    %331 = vmatmul.mubr.bf16.gmra.mrb[0].mxu0 %v192
    %v332 = vpop.f32.mrb[0].mxu0
    %v333 = vadd.f32 %v167, %v332
    %v334 = vpop.f32.mrb[0].mxu0
    %v335 = vadd.f32 %v171, %v334
    %v336 = vpop.f32.mrb[0].mxu0
    %v337 = vadd.f32 %v167, %v336
    %v338 = vpop.f32.mrb[0].mxu0
    %v339 = vadd.f32 %v171, %v338
    %340 = vmatprep.mubr.bf16.mxu0 0
    %341 = vmatmul.mubr.bf16.gmra.mrb[0].mxu0 %v193
    %v342 = vpop.f32.mrb[0].mxu0
    %v343 = vadd.f32 %v167, %v342
    %v344 = vpop.f32.mrb[0].mxu0
    %v345 = vadd.f32 %v171, %v344
    %v346 = vpop.f32.mrb[0].mxu0
    %v347 = vadd.f32 %v167, %v346
    %v348 = vpop.f32.mrb[0].mxu0
    %v349 = vadd.f32 %v171, %v348
    %350 = vdwg.mxu0
    %v351 = vld [vmem:[%s4] sm:$0xf]
    %v352 = vld [vmem:[%s4 + $0x4] sm:$0xf]
    %v353 = vld [vmem:[%s4 + $0x8] sm:$0xf]
    %v354 = vld [vmem:[%s4 + $0xc] sm:$0xf]
    %v355 = vld [vmem:[%s4 + $0x10] sm:$0xf]
    %v356 = vld [vmem:[%s4 + $0x14] sm:$0xf]
    %v357 = vld [vmem:[%s4 + $0x18] sm:$0xf]
    %v358 = vld [vmem:[%s4 + $0x1c] sm:$0xf]
    %v359 = vld [vmem:[%s4 + $0x20] sm:$0xf]
    %v360 = vld [vmem:[%s4 + $0x24] sm:$0xf]
    %v361 = vld [vmem:[%s4 + $0x28] sm:$0xf]
    %v362 = vld [vmem:[%s4 + $0x2c] sm:$0xf]
    %v363 = vld [vmem:[%s4 + $0x30] sm:$0xf]
    %v364 = vld [vmem:[%s4 + $0x34] sm:$0xf]
    %v365 = vld [vmem:[%s4 + $0x38] sm:$0xf]
    %v366 = vld [vmem:[%s4 + $0x3c] sm:$0xf]
    %v367 = vld [vmem:[%s6] sm:$0x1]
    %v369 = vlaneseq
    %v370 = vshrl.u32 %v369, 7
    %v371 = vsub.s32 0, %v370
    %v372 = vrot.slane %v367, %v371
    %v390 = vunpack.c.l.b16 %v351
    %v391 = vunpack.c.l.b16 %v352
    %v392 = vunpack.c.l.b16 %v353
    %v393 = vunpack.c.l.b16 %v354
    %v394 = vunpack.c.l.b16 %v355
    %v395 = vunpack.c.l.b16 %v356
    %v396 = vunpack.c.l.b16 %v357
    %v397 = vunpack.c.l.b16 %v358
    %v398 = vunpack.c.l.b16 %v359
    %v399 = vunpack.c.l.b16 %v360
    %v400 = vunpack.c.l.b16 %v361
    %v401 = vunpack.c.l.b16 %v362
    %v402 = vunpack.c.l.b16 %v363
    %v403 = vunpack.c.l.b16 %v364
    %v404 = vunpack.c.l.b16 %v365
    %v405 = vunpack.c.l.b16 %v366
    %v406 = vpack.c.b16 %v391, %v390
    %v407 = vpack.c.b16 %v393, %v392
    %v408 = vpack.c.b16 %v395, %v394
    %v409 = vpack.c.b16 %v397, %v396
    %v410 = vpack.c.b16 %v399, %v398
    %v411 = vpack.c.b16 %v401, %v400
    %v412 = vpack.c.b16 %v403, %v402
    %v413 = vpack.c.b16 %v405, %v404
    %422 = vmatprep.subr.bf16.mxu0 0
    %423 = vmatpush1.bf16.msra.mxu0 %v406
    %424 = vmatprep.subr.bf16.mxu0 0
    %425 = vmatpush1.bf16.msra.mxu0 %v407
    %426 = vmatprep.subr.bf16.mxu0 0
    %427 = vmatpush1.bf16.msra.mxu0 %v408
    %428 = vmatprep.subr.bf16.mxu0 0
    %429 = vmatpush1.bf16.msra.mxu0 %v409
    %430 = vmatprep.subr.bf16.mxu0 0
    %431 = vmatpush1.bf16.msra.mxu0 %v410
    %432 = vmatprep.subr.bf16.mxu0 0
    %433 = vmatpush1.bf16.msra.mxu0 %v411
    %434 = vmatprep.subr.bf16.mxu0 0
    %435 = vmatpush1.bf16.msra.mxu0 %v412
    %436 = vmatprep.subr.bf16.mxu0 0
    %437 = vmatpush1.bf16.msra.mxu0 %v413
    %438 = vmatprep.subr.bf16.mxu0 0
    %439 = vmatpush1.bf16.msra.mxu0 0
    %440 = vmatprep.subr.bf16.mxu0 0
    %441 = vmatpush1.bf16.msra.mxu0 0
    %442 = vmatprep.subr.bf16.mxu0 0
    %443 = vmatpush1.bf16.msra.mxu0 0
    %444 = vmatprep.subr.bf16.mxu0 0
    %445 = vmatpush1.bf16.msra.mxu0 0
    %446 = vmatprep.subr.bf16.mxu0 0
    %447 = vmatpush1.bf16.msra.mxu0 0
    %448 = vmatprep.subr.bf16.mxu0 0
    %449 = vmatpush1.bf16.msra.mxu0 0
    %450 = vmatprep.subr.bf16.mxu0 0
    %451 = vmatpush1.bf16.msra.mxu0 0
    %452 = vmatprep.subr.bf16.mxu0 0
    %453 = vmatpush1.bf16.msra.mxu0 0
    %454 = vmatprep.mubr.bf16.mxu0 0
    %455 = vmatmul.mubr.bf16.gmra.mrb[0].mxu0 0
    %v456 = vpop.f32.mrb[0].mxu0
    %v457 = vadd.f32 %v372, %v456
    %v458 = vpop.f32.mrb[0].mxu0
    %v459 = vpop.f32.mrb[0].mxu0
    %v460 = vpop.f32.mrb[0].mxu0
    %461 = vdwg.mxu0
    %v462 = vadd.f32 %v313, %v457
    %v463 = vxor.u32 %v462, 2147483648
    %v464 = vmul.f32 %v463, 1.442695
    %v465 = vpow.pop %v464
    %v466 = vadd.f32 %v465, 1.0
    %v467 = vrcp.pop %v466
    %v468 = vmul.f32 1.0, %v467
    %469 = vrot.lane.b32.xlu0 %v468, 64
    %v470 = vpop.permute.xlu0 %469
    %v471 = vmul.f32 %v470, %v457
    %v472 = vadd.f32 %v313, %v471
    %v473 = vtanh.pop %v472
    %474 = vrot.lane.b32.xlu0 %v468, 96
    %v475 = vpop.permute.xlu0 %474
    %476 = vrot.lane.b32.xlu0 %v473, 64
    %v477 = vpop.permute.xlu0 %476
    %v478 = vsub.f32 1.0, %v475
    %v479 = vmul.f32 %v478, %v477
    %v480 = vmul.f32 %v475, 0.0
    %v481 = vadd.f32 %v479, %v480
    %vm482 = vcmp.gt.s32.totalorder %v134, 0
    %v483 = vsel %vm482, 1, 0
    %484 = vset.pattern.permute.xlu0 0
    %485 = vperm.xlu0 %484, %v483
    %v486 = vpop.permute.xlu0 %485
    %vm487 = vcmp.eq.s32.totalorder %v486, 1
    %vm488 = vmand %vm137, %vm487
    %v489 = vsel %vm488, %v481, 0.0
    %490 = vst [vmem:[#allocation2] sm:$0xff] %v489
    %v491 = vpack.c.bf16 %v489, %v489
    %492 = vmatprep.subr.bf16.mxu0 0
    %493 = vmatpush1.bf16.msra.mxu0 %v406
    %494 = vmatprep.subr.bf16.mxu0 0
    %495 = vmatpush1.bf16.msra.mxu0 %v407
    %496 = vmatprep.subr.bf16.mxu0 0
    %497 = vmatpush1.bf16.msra.mxu0 %v408
    %498 = vmatprep.subr.bf16.mxu0 0
    %499 = vmatpush1.bf16.msra.mxu0 %v409
    %500 = vmatprep.subr.bf16.mxu0 0
    %501 = vmatpush1.bf16.msra.mxu0 %v410
    %502 = vmatprep.subr.bf16.mxu0 0
    %503 = vmatpush1.bf16.msra.mxu0 %v411
    %504 = vmatprep.subr.bf16.mxu0 0
    %505 = vmatpush1.bf16.msra.mxu0 %v412
    %506 = vmatprep.subr.bf16.mxu0 0
    %507 = vmatpush1.bf16.msra.mxu0 %v413
    %508 = vmatprep.subr.bf16.mxu0 0
    %509 = vmatpush1.bf16.msra.mxu0 0
    %510 = vmatprep.subr.bf16.mxu0 0
    %511 = vmatpush1.bf16.msra.mxu0 0
    %512 = vmatprep.subr.bf16.mxu0 0
    %513 = vmatpush1.bf16.msra.mxu0 0
    %514 = vmatprep.subr.bf16.mxu0 0
    %515 = vmatpush1.bf16.msra.mxu0 0
    %516 = vmatprep.subr.bf16.mxu0 0
    %517 = vmatpush1.bf16.msra.mxu0 0
    %518 = vmatprep.subr.bf16.mxu0 0
    %519 = vmatpush1.bf16.msra.mxu0 0
    %520 = vmatprep.subr.bf16.mxu0 0
    %521 = vmatpush1.bf16.msra.mxu0 0
    %522 = vmatprep.subr.bf16.mxu0 0
    %523 = vmatpush1.bf16.msra.mxu0 0
    %524 = vmatprep.mubr.bf16.mxu0 0
    %525 = vmatmul.mubr.bf16.gmra.mrb[0].mxu0 %v491
    %v526 = vpop.f32.mrb[0].mxu0
    %v527 = vadd.f32 %v372, %v526
    %v528 = vpop.f32.mrb[0].mxu0
    %v529 = vpop.f32.mrb[0].mxu0
    %v530 = vpop.f32.mrb[0].mxu0
    %531 = vdwg.mxu0
    %v532 = vadd.f32 %v317, %v527
    %v533 = vxor.u32 %v532, 2147483648
    %v534 = vmul.f32 %v533, 1.442695
    %v535 = vpow.pop %v534
    %v536 = vadd.f32 %v535, 1.0
    %v537 = vrcp.pop %v536
    %v538 = vmul.f32 1.0, %v537
    %539 = vrot.lane.b32.xlu0 %v538, 64
    %v540 = vpop.permute.xlu0 %539
    %v541 = vmul.f32 %v540, %v527
    %v542 = vadd.f32 %v317, %v541
    %v543 = vtanh.pop %v542
    %544 = vrot.lane.b32.xlu0 %v538, 96
    %v545 = vpop.permute.xlu0 %544
    %546 = vrot.lane.b32.xlu0 %v543, 64
    %v547 = vpop.permute.xlu0 %546
    %v548 = vsub.f32 1.0, %v545
    %v549 = vmul.f32 %v548, %v547
    %v550 = vmul.f32 %v545, %v489
    %v551 = vadd.f32 %v549, %v550
    %vm552 = vcmp.gt.s32.totalorder %v134, 1
    %v553 = vsel %vm552, 1, 0
    %554 = vset.pattern.permute.xlu0 0
    %555 = vperm.xlu0 %554, %v553
    %v556 = vpop.permute.xlu0 %555
    %vm557 = vcmp.eq.s32.totalorder %v556, 1
    %vm558 = vmand %vm137, %vm557
    %v559 = vsel %vm558, %v551, %v489
    %560 = vst [vmem:[#allocation2 + $0x10] sm:$0xff] %v559
    %v561 = vpack.c.bf16 %v559, %v559
    %562 = vmatprep.subr.bf16.mxu0 0
    %563 = vmatpush1.bf16.msra.mxu0 %v406
    %564 = vmatprep.subr.bf16.mxu0 0
    %565 = vmatpush1.bf16.msra.mxu0 %v407
    %566 = vmatprep.subr.bf16.mxu0 0
    %567 = vmatpush1.bf16.msra.mxu0 %v408
    %568 = vmatprep.subr.bf16.mxu0 0
    %569 = vmatpush1.bf16.msra.mxu0 %v409
    %570 = vmatprep.subr.bf16.mxu0 0
    %571 = vmatpush1.bf16.msra.mxu0 %v410
    %572 = vmatprep.subr.bf16.mxu0 0
    %573 = vmatpush1.bf16.msra.mxu0 %v411
    %574 = vmatprep.subr.bf16.mxu0 0
    %575 = vmatpush1.bf16.msra.mxu0 %v412
    %576 = vmatprep.subr.bf16.mxu0 0
    %577 = vmatpush1.bf16.msra.mxu0 %v413
    %578 = vmatprep.subr.bf16.mxu0 0
    %579 = vmatpush1.bf16.msra.mxu0 0
    %580 = vmatprep.subr.bf16.mxu0 0
    %581 = vmatpush1.bf16.msra.mxu0 0
    %582 = vmatprep.subr.bf16.mxu0 0
    %583 = vmatpush1.bf16.msra.mxu0 0
    %584 = vmatprep.subr.bf16.mxu0 0
    %585 = vmatpush1.bf16.msra.mxu0 0
    %586 = vmatprep.subr.bf16.mxu0 0
    %587 = vmatpush1.bf16.msra.mxu0 0
    %588 = vmatprep.subr.bf16.mxu0 0
    %589 = vmatpush1.bf16.msra.mxu0 0
    %590 = vmatprep.subr.bf16.mxu0 0
    %591 = vmatpush1.bf16.msra.mxu0 0
    %592 = vmatprep.subr.bf16.mxu0 0
    %593 = vmatpush1.bf16.msra.mxu0 0
    %594 = vmatprep.mubr.bf16.mxu0 0
    %595 = vmatmul.mubr.bf16.gmra.mrb[0].mxu0 %v561
    %v596 = vpop.f32.mrb[0].mxu0
    %v597 = vadd.f32 %v372, %v596
    %v598 = vpop.f32.mrb[0].mxu0
    %v599 = vpop.f32.mrb[0].mxu0
    %v600 = vpop.f32.mrb[0].mxu0
    %601 = vdwg.mxu0
    %v602 = vadd.f32 %v323, %v597
    %v603 = vxor.u32 %v602, 2147483648
    %v604 = vmul.f32 %v603, 1.442695
    %v605 = vpow.pop %v604
    %v606 = vadd.f32 %v605, 1.0
    %v607 = vrcp.pop %v606
    %v608 = vmul.f32 1.0, %v607
    %609 = vrot.lane.b32.xlu0 %v608, 64
    %v610 = vpop.permute.xlu0 %609
    %v611 = vmul.f32 %v610, %v597
    %v612 = vadd.f32 %v323, %v611
    %v613 = vtanh.pop %v612
    %614 = vrot.lane.b32.xlu0 %v608, 96
    %v615 = vpop.permute.xlu0 %614
    %616 = vrot.lane.b32.xlu0 %v613, 64
    %v617 = vpop.permute.xlu0 %616
    %v618 = vsub.f32 1.0, %v615
    %v619 = vmul.f32 %v618, %v617
    %v620 = vmul.f32 %v615, %v559
    %v621 = vadd.f32 %v619, %v620
    %vm622 = vcmp.gt.s32.totalorder %v134, 2
    %v623 = vsel %vm622, 1, 0
    %624 = vset.pattern.permute.xlu0 0
    %625 = vperm.xlu0 %624, %v623
    %v626 = vpop.permute.xlu0 %625
    %vm627 = vcmp.eq.s32.totalorder %v626, 1
    %vm628 = vmand %vm137, %vm627
    %v629 = vsel %vm628, %v621, %v559
    %630 = vst [vmem:[#allocation2 + $0x20] sm:$0xff] %v629
    %v631 = vpack.c.bf16 %v629, %v629
    %632 = vmatprep.subr.bf16.mxu0 0
    %633 = vmatpush1.bf16.msra.mxu0 %v406
    %634 = vmatprep.subr.bf16.mxu0 0
    %635 = vmatpush1.bf16.msra.mxu0 %v407
    %636 = vmatprep.subr.bf16.mxu0 0
    %637 = vmatpush1.bf16.msra.mxu0 %v408
    %638 = vmatprep.subr.bf16.mxu0 0
    %639 = vmatpush1.bf16.msra.mxu0 %v409
    %640 = vmatprep.subr.bf16.mxu0 0
    %641 = vmatpush1.bf16.msra.mxu0 %v410
    %642 = vmatprep.subr.bf16.mxu0 0
    %643 = vmatpush1.bf16.msra.mxu0 %v411
    %644 = vmatprep.subr.bf16.mxu0 0
    %645 = vmatpush1.bf16.msra.mxu0 %v412
    %646 = vmatprep.subr.bf16.mxu0 0
    %647 = vmatpush1.bf16.msra.mxu0 %v413
    %648 = vmatprep.subr.bf16.mxu0 0
    %649 = vmatpush1.bf16.msra.mxu0 0
    %650 = vmatprep.subr.bf16.mxu0 0
    %651 = vmatpush1.bf16.msra.mxu0 0
    %652 = vmatprep.subr.bf16.mxu0 0
    %653 = vmatpush1.bf16.msra.mxu0 0
    %654 = vmatprep.subr.bf16.mxu0 0
    %655 = vmatpush1.bf16.msra.mxu0 0
    %656 = vmatprep.subr.bf16.mxu0 0
    %657 = vmatpush1.bf16.msra.mxu0 0
    %658 = vmatprep.subr.bf16.mxu0 0
    %659 = vmatpush1.bf16.msra.mxu0 0
    %660 = vmatprep.subr.bf16.mxu0 0
    %661 = vmatpush1.bf16.msra.mxu0 0
    %662 = vmatprep.subr.bf16.mxu0 0
    %663 = vmatpush1.bf16.msra.mxu0 0
    %664 = vmatprep.mubr.bf16.mxu0 0
    %665 = vmatmul.mubr.bf16.gmra.mrb[0].mxu0 %v631
    %v666 = vpop.f32.mrb[0].mxu0
    %v667 = vadd.f32 %v372, %v666
    %v668 = vpop.f32.mrb[0].mxu0
    %v669 = vpop.f32.mrb[0].mxu0
    %v670 = vpop.f32.mrb[0].mxu0
    %671 = vdwg.mxu0
    %v672 = vadd.f32 %v327, %v667
    %v673 = vxor.u32 %v672, 2147483648
    %v674 = vmul.f32 %v673, 1.442695
    %v675 = vpow.pop %v674
    %v676 = vadd.f32 %v675, 1.0
    %v677 = vrcp.pop %v676
    %v678 = vmul.f32 1.0, %v677
    %679 = vrot.lane.b32.xlu0 %v678, 64
    %v680 = vpop.permute.xlu0 %679
    %v681 = vmul.f32 %v680, %v667
    %v682 = vadd.f32 %v327, %v681
    %v683 = vtanh.pop %v682
    %684 = vrot.lane.b32.xlu0 %v678, 96
    %v685 = vpop.permute.xlu0 %684
    %686 = vrot.lane.b32.xlu0 %v683, 64
    %v687 = vpop.permute.xlu0 %686
    %v688 = vsub.f32 1.0, %v685
    %v689 = vmul.f32 %v688, %v687
    %v690 = vmul.f32 %v685, %v629
    %v691 = vadd.f32 %v689, %v690
    %vm692 = vcmp.gt.s32.totalorder %v134, 3
    %v693 = vsel %vm692, 1, 0
    %694 = vset.pattern.permute.xlu0 0
    %695 = vperm.xlu0 %694, %v693
    %v696 = vpop.permute.xlu0 %695
    %vm697 = vcmp.eq.s32.totalorder %v696, 1
    %vm698 = vmand %vm137, %vm697
    %v699 = vsel %vm698, %v691, %v629
    %700 = vst [vmem:[#allocation2 + $0x30] sm:$0xff] %v699
    %v701 = vpack.c.bf16 %v699, %v699
    %702 = vmatprep.subr.bf16.mxu0 0
    %703 = vmatpush1.bf16.msra.mxu0 %v406
    %704 = vmatprep.subr.bf16.mxu0 0
    %705 = vmatpush1.bf16.msra.mxu0 %v407
    %706 = vmatprep.subr.bf16.mxu0 0
    %707 = vmatpush1.bf16.msra.mxu0 %v408
    %708 = vmatprep.subr.bf16.mxu0 0
    %709 = vmatpush1.bf16.msra.mxu0 %v409
    %710 = vmatprep.subr.bf16.mxu0 0
    %711 = vmatpush1.bf16.msra.mxu0 %v410
    %712 = vmatprep.subr.bf16.mxu0 0
    %713 = vmatpush1.bf16.msra.mxu0 %v411
    %714 = vmatprep.subr.bf16.mxu0 0
    %715 = vmatpush1.bf16.msra.mxu0 %v412
    %716 = vmatprep.subr.bf16.mxu0 0
    %717 = vmatpush1.bf16.msra.mxu0 %v413
    %718 = vmatprep.subr.bf16.mxu0 0
    %719 = vmatpush1.bf16.msra.mxu0 0
    %720 = vmatprep.subr.bf16.mxu0 0
    %721 = vmatpush1.bf16.msra.mxu0 0
    %722 = vmatprep.subr.bf16.mxu0 0
    %723 = vmatpush1.bf16.msra.mxu0 0
    %724 = vmatprep.subr.bf16.mxu0 0
    %725 = vmatpush1.bf16.msra.mxu0 0
    %726 = vmatprep.subr.bf16.mxu0 0
    %727 = vmatpush1.bf16.msra.mxu0 0
    %728 = vmatprep.subr.bf16.mxu0 0
    %729 = vmatpush1.bf16.msra.mxu0 0
    %730 = vmatprep.subr.bf16.mxu0 0
    %731 = vmatpush1.bf16.msra.mxu0 0
    %732 = vmatprep.subr.bf16.mxu0 0
    %733 = vmatpush1.bf16.msra.mxu0 0
    %734 = vmatprep.mubr.bf16.mxu0 0
    %735 = vmatmul.mubr.bf16.gmra.mrb[0].mxu0 %v701
    %v736 = vpop.f32.mrb[0].mxu0
    %v737 = vadd.f32 %v372, %v736
    %v738 = vpop.f32.mrb[0].mxu0
    %v739 = vpop.f32.mrb[0].mxu0
    %v740 = vpop.f32.mrb[0].mxu0
    %741 = vdwg.mxu0
    %v742 = vadd.f32 %v333, %v737
    %v743 = vxor.u32 %v742, 2147483648
    %v744 = vmul.f32 %v743, 1.442695
    %v745 = vpow.pop %v744
    %v746 = vadd.f32 %v745, 1.0
    %v747 = vrcp.pop %v746
    %v748 = vmul.f32 1.0, %v747
    %749 = vrot.lane.b32.xlu0 %v748, 64
    %v750 = vpop.permute.xlu0 %749
    %v751 = vmul.f32 %v750, %v737
    %v752 = vadd.f32 %v333, %v751
    %v753 = vtanh.pop %v752
    %754 = vrot.lane.b32.xlu0 %v748, 96
    %v755 = vpop.permute.xlu0 %754
    %756 = vrot.lane.b32.xlu0 %v753, 64
    %v757 = vpop.permute.xlu0 %756
    %v758 = vsub.f32 1.0, %v755
    %v759 = vmul.f32 %v758, %v757
    %v760 = vmul.f32 %v755, %v699
    %v761 = vadd.f32 %v759, %v760
    %vm762 = vcmp.gt.s32.totalorder %v134, 4
    %v763 = vsel %vm762, 1, 0
    %764 = vset.pattern.permute.xlu0 0
    %765 = vperm.xlu0 %764, %v763
    %v766 = vpop.permute.xlu0 %765
    %vm767 = vcmp.eq.s32.totalorder %v766, 1
    %vm768 = vmand %vm137, %vm767
    %v769 = vsel %vm768, %v761, %v699
    %770 = vst [vmem:[#allocation2 + $0x40] sm:$0xff] %v769
    %v771 = vpack.c.bf16 %v769, %v769
    %772 = vmatprep.subr.bf16.mxu0 0
    %773 = vmatpush1.bf16.msra.mxu0 %v406
    %774 = vmatprep.subr.bf16.mxu0 0
    %775 = vmatpush1.bf16.msra.mxu0 %v407
    %776 = vmatprep.subr.bf16.mxu0 0
    %777 = vmatpush1.bf16.msra.mxu0 %v408
    %778 = vmatprep.subr.bf16.mxu0 0
    %779 = vmatpush1.bf16.msra.mxu0 %v409
    %780 = vmatprep.subr.bf16.mxu0 0
    %781 = vmatpush1.bf16.msra.mxu0 %v410
    %782 = vmatprep.subr.bf16.mxu0 0
    %783 = vmatpush1.bf16.msra.mxu0 %v411
    %784 = vmatprep.subr.bf16.mxu0 0
    %785 = vmatpush1.bf16.msra.mxu0 %v412
    %786 = vmatprep.subr.bf16.mxu0 0
    %787 = vmatpush1.bf16.msra.mxu0 %v413
    %788 = vmatprep.subr.bf16.mxu0 0
    %789 = vmatpush1.bf16.msra.mxu0 0
    %790 = vmatprep.subr.bf16.mxu0 0
    %791 = vmatpush1.bf16.msra.mxu0 0
    %792 = vmatprep.subr.bf16.mxu0 0
    %793 = vmatpush1.bf16.msra.mxu0 0
    %794 = vmatprep.subr.bf16.mxu0 0
    %795 = vmatpush1.bf16.msra.mxu0 0
    %796 = vmatprep.subr.bf16.mxu0 0
    %797 = vmatpush1.bf16.msra.mxu0 0
    %798 = vmatprep.subr.bf16.mxu0 0
    %799 = vmatpush1.bf16.msra.mxu0 0
    %800 = vmatprep.subr.bf16.mxu0 0
    %801 = vmatpush1.bf16.msra.mxu0 0
    %802 = vmatprep.subr.bf16.mxu0 0
    %803 = vmatpush1.bf16.msra.mxu0 0
    %804 = vmatprep.mubr.bf16.mxu0 0
    %805 = vmatmul.mubr.bf16.gmra.mrb[0].mxu0 %v771
    %v806 = vpop.f32.mrb[0].mxu0
    %v807 = vadd.f32 %v372, %v806
    %v808 = vpop.f32.mrb[0].mxu0
    %v809 = vpop.f32.mrb[0].mxu0
    %v810 = vpop.f32.mrb[0].mxu0
    %811 = vdwg.mxu0
    %v812 = vadd.f32 %v337, %v807
    %v813 = vxor.u32 %v812, 2147483648
    %v814 = vmul.f32 %v813, 1.442695
    %v815 = vpow.pop %v814
    %v816 = vadd.f32 %v815, 1.0
    %v817 = vrcp.pop %v816
    %v818 = vmul.f32 1.0, %v817
    %819 = vrot.lane.b32.xlu0 %v818, 64
    %v820 = vpop.permute.xlu0 %819
    %v821 = vmul.f32 %v820, %v807
    %v822 = vadd.f32 %v337, %v821
    %v823 = vtanh.pop %v822
    %824 = vrot.lane.b32.xlu0 %v818, 96
    %v825 = vpop.permute.xlu0 %824
    %826 = vrot.lane.b32.xlu0 %v823, 64
    %v827 = vpop.permute.xlu0 %826
    %v828 = vsub.f32 1.0, %v825
    %v829 = vmul.f32 %v828, %v827
    %v830 = vmul.f32 %v825, %v769
    %v831 = vadd.f32 %v829, %v830
    %vm832 = vcmp.gt.s32.totalorder %v134, 5
    %v833 = vsel %vm832, 1, 0
    %834 = vset.pattern.permute.xlu0 0
    %835 = vperm.xlu0 %834, %v833
    %v836 = vpop.permute.xlu0 %835
    %vm837 = vcmp.eq.s32.totalorder %v836, 1
    %vm838 = vmand %vm137, %vm837
    %v839 = vsel %vm838, %v831, %v769
    %840 = vst [vmem:[#allocation2 + $0x50] sm:$0xff] %v839
    %v841 = vpack.c.bf16 %v839, %v839
    %842 = vmatprep.subr.bf16.mxu0 0
    %843 = vmatpush1.bf16.msra.mxu0 %v406
    %844 = vmatprep.subr.bf16.mxu0 0
    %845 = vmatpush1.bf16.msra.mxu0 %v407
    %846 = vmatprep.subr.bf16.mxu0 0
    %847 = vmatpush1.bf16.msra.mxu0 %v408
    %848 = vmatprep.subr.bf16.mxu0 0
    %849 = vmatpush1.bf16.msra.mxu0 %v409
    %850 = vmatprep.subr.bf16.mxu0 0
    %851 = vmatpush1.bf16.msra.mxu0 %v410
    %852 = vmatprep.subr.bf16.mxu0 0
    %853 = vmatpush1.bf16.msra.mxu0 %v411
    %854 = vmatprep.subr.bf16.mxu0 0
    %855 = vmatpush1.bf16.msra.mxu0 %v412
    %856 = vmatprep.subr.bf16.mxu0 0
    %857 = vmatpush1.bf16.msra.mxu0 %v413
    %858 = vmatprep.subr.bf16.mxu0 0
    %859 = vmatpush1.bf16.msra.mxu0 0
    %860 = vmatprep.subr.bf16.mxu0 0
    %861 = vmatpush1.bf16.msra.mxu0 0
    %862 = vmatprep.subr.bf16.mxu0 0
    %863 = vmatpush1.bf16.msra.mxu0 0
    %864 = vmatprep.subr.bf16.mxu0 0
    %865 = vmatpush1.bf16.msra.mxu0 0
    %866 = vmatprep.subr.bf16.mxu0 0
    %867 = vmatpush1.bf16.msra.mxu0 0
    %868 = vmatprep.subr.bf16.mxu0 0
    %869 = vmatpush1.bf16.msra.mxu0 0
    %870 = vmatprep.subr.bf16.mxu0 0
    %871 = vmatpush1.bf16.msra.mxu0 0
    %872 = vmatprep.subr.bf16.mxu0 0
    %873 = vmatpush1.bf16.msra.mxu0 0
    %874 = vmatprep.mubr.bf16.mxu0 0
    %875 = vmatmul.mubr.bf16.gmra.mrb[0].mxu0 %v841
    %v876 = vpop.f32.mrb[0].mxu0
    %v877 = vadd.f32 %v372, %v876
    %v878 = vpop.f32.mrb[0].mxu0
    %v879 = vpop.f32.mrb[0].mxu0
    %v880 = vpop.f32.mrb[0].mxu0
    %881 = vdwg.mxu0
    %v882 = vadd.f32 %v343, %v877
    %v883 = vxor.u32 %v882, 2147483648
    %v884 = vmul.f32 %v883, 1.442695
    %v885 = vpow.pop %v884
    %v886 = vadd.f32 %v885, 1.0
    %v887 = vrcp.pop %v886
    %v888 = vmul.f32 1.0, %v887
    %889 = vrot.lane.b32.xlu0 %v888, 64
    %v890 = vpop.permute.xlu0 %889
    %v891 = vmul.f32 %v890, %v877
    %v892 = vadd.f32 %v343, %v891
    %v893 = vtanh.pop %v892
    %894 = vrot.lane.b32.xlu0 %v888, 96
    %v895 = vpop.permute.xlu0 %894
    %896 = vrot.lane.b32.xlu0 %v893, 64
    %v897 = vpop.permute.xlu0 %896
    %v898 = vsub.f32 1.0, %v895
    %v899 = vmul.f32 %v898, %v897
    %v900 = vmul.f32 %v895, %v839
    %v901 = vadd.f32 %v899, %v900
    %vm902 = vcmp.gt.s32.totalorder %v134, 6
    %v903 = vsel %vm902, 1, 0
    %904 = vset.pattern.permute.xlu0 0
    %905 = vperm.xlu0 %904, %v903
    %v906 = vpop.permute.xlu0 %905
    %vm907 = vcmp.eq.s32.totalorder %v906, 1
    %vm908 = vmand %vm137, %vm907
    %v909 = vsel %vm908, %v901, %v839
    %910 = vst [vmem:[#allocation2 + $0x60] sm:$0xff] %v909
    %v911 = vpack.c.bf16 %v909, %v909
    %912 = vmatprep.subr.bf16.mxu0 0
    %913 = vmatpush1.bf16.msra.mxu0 %v406
    %914 = vmatprep.subr.bf16.mxu0 0
    %915 = vmatpush1.bf16.msra.mxu0 %v407
    %916 = vmatprep.subr.bf16.mxu0 0
    %917 = vmatpush1.bf16.msra.mxu0 %v408
    %918 = vmatprep.subr.bf16.mxu0 0
    %919 = vmatpush1.bf16.msra.mxu0 %v409
    %920 = vmatprep.subr.bf16.mxu0 0
    %921 = vmatpush1.bf16.msra.mxu0 %v410
    %922 = vmatprep.subr.bf16.mxu0 0
    %923 = vmatpush1.bf16.msra.mxu0 %v411
    %924 = vmatprep.subr.bf16.mxu0 0
    %925 = vmatpush1.bf16.msra.mxu0 %v412
    %926 = vmatprep.subr.bf16.mxu0 0
    %927 = vmatpush1.bf16.msra.mxu0 %v413
    %928 = vmatprep.subr.bf16.mxu0 0
    %929 = vmatpush1.bf16.msra.mxu0 0
    %930 = vmatprep.subr.bf16.mxu0 0
    %931 = vmatpush1.bf16.msra.mxu0 0
    %932 = vmatprep.subr.bf16.mxu0 0
    %933 = vmatpush1.bf16.msra.mxu0 0
    %934 = vmatprep.subr.bf16.mxu0 0
    %935 = vmatpush1.bf16.msra.mxu0 0
    %936 = vmatprep.subr.bf16.mxu0 0
    %937 = vmatpush1.bf16.msra.mxu0 0
    %938 = vmatprep.subr.bf16.mxu0 0
    %939 = vmatpush1.bf16.msra.mxu0 0
    %940 = vmatprep.subr.bf16.mxu0 0
    %941 = vmatpush1.bf16.msra.mxu0 0
    %942 = vmatprep.subr.bf16.mxu0 0
    %943 = vmatpush1.bf16.msra.mxu0 0
    %944 = vmatprep.mubr.bf16.mxu0 0
    %945 = vmatmul.mubr.bf16.gmra.mrb[0].mxu0 %v911
    %v946 = vpop.f32.mrb[0].mxu0
    %v947 = vadd.f32 %v372, %v946
    %v948 = vpop.f32.mrb[0].mxu0
    %v949 = vpop.f32.mrb[0].mxu0
    %v950 = vpop.f32.mrb[0].mxu0
    %951 = vdwg.mxu0
    %v952 = vadd.f32 %v347, %v947
    %v953 = vxor.u32 %v952, 2147483648
    %v954 = vmul.f32 %v953, 1.442695
    %v955 = vpow.pop %v954
    %v956 = vadd.f32 %v955, 1.0
    %v957 = vrcp.pop %v956
    %v958 = vmul.f32 1.0, %v957
    %959 = vrot.lane.b32.xlu0 %v958, 64
    %v960 = vpop.permute.xlu0 %959
    %v961 = vmul.f32 %v960, %v947
    %v962 = vadd.f32 %v347, %v961
    %v963 = vtanh.pop %v962
    %964 = vrot.lane.b32.xlu0 %v958, 96
    %v965 = vpop.permute.xlu0 %964
    %966 = vrot.lane.b32.xlu0 %v963, 64
    %v967 = vpop.permute.xlu0 %966
    %v968 = vsub.f32 1.0, %v965
    %v969 = vmul.f32 %v968, %v967
    %v970 = vmul.f32 %v965, %v909
    %v971 = vadd.f32 %v969, %v970
    %vm972 = vcmp.gt.s32.totalorder %v134, 7
    %v973 = vsel %vm972, 1, 0
    %974 = vset.pattern.permute.xlu0 0
    %975 = vperm.xlu0 %974, %v973
    %v976 = vpop.permute.xlu0 %975
    %vm977 = vcmp.eq.s32.totalorder %v976, 1
    %vm978 = vmand %vm137, %vm977
    %v979 = vsel %vm978, %v971, %v909
    %980 = vst [vmem:[#allocation2 + $0x70] sm:$0xff] %v979
    %v981 = vld [vmem:[#allocation3] sm:$0xf]
    %v982 = vld [vmem:[#allocation3 + $0x4] sm:$0xf]
    %v983 = vld [vmem:[#allocation3 + $0x8] sm:$0xf]
    %v984 = vld [vmem:[#allocation3 + $0xc] sm:$0xf]
    %v985 = vld [vmem:[#allocation3 + $0x10] sm:$0xf]
    %v986 = vld [vmem:[#allocation3 + $0x14] sm:$0xf]
    %v987 = vld [vmem:[#allocation3 + $0x18] sm:$0xf]
    %v988 = vld [vmem:[#allocation3 + $0x1c] sm:$0xf]
    %v989 = vld [vmem:[#allocation3 + $0x20] sm:$0xf]
    %v990 = vld [vmem:[#allocation3 + $0x24] sm:$0xf]
    %v991 = vld [vmem:[#allocation3 + $0x28] sm:$0xf]
    %v992 = vld [vmem:[#allocation3 + $0x2c] sm:$0xf]
    %v993 = vld [vmem:[#allocation3 + $0x30] sm:$0xf]
    %v994 = vld [vmem:[#allocation3 + $0x34] sm:$0xf]
    %v995 = vld [vmem:[#allocation3 + $0x38] sm:$0xf]
    %v996 = vld [vmem:[#allocation3 + $0x3c] sm:$0xf]
    %v997 = vld [vmem:[%s7] sm:$0x1]
    %v999 = vlaneseq
    %v1000 = vshrl.u32 %v999, 7
    %v1001 = vsub.s32 0, %v1000
    %v1002 = vrot.slane %v997, %v1001
    %v1020 = vunpack.c.l.b16 %v981
    %v1021 = vunpack.c.l.b16 %v982
    %v1022 = vunpack.c.l.b16 %v983
    %v1023 = vunpack.c.l.b16 %v984
    %v1024 = vunpack.c.l.b16 %v985
    %v1025 = vunpack.c.l.b16 %v986
    %v1026 = vunpack.c.l.b16 %v987
    %v1027 = vunpack.c.l.b16 %v988
    %v1028 = vunpack.c.l.b16 %v989
    %v1029 = vunpack.c.l.b16 %v990
    %v1030 = vunpack.c.l.b16 %v991
    %v1031 = vunpack.c.l.b16 %v992
    %v1032 = vunpack.c.l.b16 %v993
    %v1033 = vunpack.c.l.b16 %v994
    %v1034 = vunpack.c.l.b16 %v995
    %v1035 = vunpack.c.l.b16 %v996
    %v1036 = vpack.c.b16 %v1021, %v1020
    %v1037 = vpack.c.b16 %v1023, %v1022
    %v1038 = vpack.c.b16 %v1025, %v1024
    %v1039 = vpack.c.b16 %v1027, %v1026
    %v1040 = vpack.c.b16 %v1029, %v1028
    %v1041 = vpack.c.b16 %v1031, %v1030
    %v1042 = vpack.c.b16 %v1033, %v1032
    %v1043 = vpack.c.b16 %v1035, %v1034
    %1052 = vmatprep.subr.bf16.mxu0 0
    %1053 = vmatpush1.bf16.msra.mxu0 %v1036
    %1054 = vmatprep.subr.bf16.mxu0 0
    %1055 = vmatpush1.bf16.msra.mxu0 %v1037
    %1056 = vmatprep.subr.bf16.mxu0 0
    %1057 = vmatpush1.bf16.msra.mxu0 %v1038
    %1058 = vmatprep.subr.bf16.mxu0 0
    %1059 = vmatpush1.bf16.msra.mxu0 %v1039
    %1060 = vmatprep.subr.bf16.mxu0 0
    %1061 = vmatpush1.bf16.msra.mxu0 %v1040
    %1062 = vmatprep.subr.bf16.mxu0 0
    %1063 = vmatpush1.bf16.msra.mxu0 %v1041
    %1064 = vmatprep.subr.bf16.mxu0 0
    %1065 = vmatpush1.bf16.msra.mxu0 %v1042
    %1066 = vmatprep.subr.bf16.mxu0 0
    %1067 = vmatpush1.bf16.msra.mxu0 %v1043
    %1068 = vmatprep.subr.bf16.mxu0 0
    %1069 = vmatpush1.bf16.msra.mxu0 0
    %1070 = vmatprep.subr.bf16.mxu0 0
    %1071 = vmatpush1.bf16.msra.mxu0 0
    %1072 = vmatprep.subr.bf16.mxu0 0
    %1073 = vmatpush1.bf16.msra.mxu0 0
    %1074 = vmatprep.subr.bf16.mxu0 0
    %1075 = vmatpush1.bf16.msra.mxu0 0
    %1076 = vmatprep.subr.bf16.mxu0 0
    %1077 = vmatpush1.bf16.msra.mxu0 0
    %1078 = vmatprep.subr.bf16.mxu0 0
    %1079 = vmatpush1.bf16.msra.mxu0 0
    %1080 = vmatprep.subr.bf16.mxu0 0
    %1081 = vmatpush1.bf16.msra.mxu0 0
    %1082 = vmatprep.subr.bf16.mxu0 0
    %1083 = vmatpush1.bf16.msra.mxu0 0
    %1084 = vmatprep.mubr.bf16.mxu0 0
    %1085 = vmatmul.mubr.bf16.gmra.mrb[0].mxu0 0
    %v1086 = vpop.f32.mrb[0].mxu0
    %v1087 = vadd.f32 %v1002, %v1086
    %v1088 = vpop.f32.mrb[0].mxu0
    %v1089 = vpop.f32.mrb[0].mxu0
    %v1090 = vpop.f32.mrb[0].mxu0
    %1091 = vdwg.mxu0
    %v1092 = vadd.f32 %v349, %v1087
    %v1093 = vxor.u32 %v1092, 2147483648
    %v1094 = vmul.f32 %v1093, 1.442695
    %v1095 = vpow.pop %v1094
    %v1096 = vadd.f32 %v1095, 1.0
    %v1097 = vrcp.pop %v1096
    %v1098 = vmul.f32 1.0, %v1097
    %1099 = vrot.lane.b32.xlu0 %v1098, 64
    %v1100 = vpop.permute.xlu0 %1099
    %v1101 = vmul.f32 %v1100, %v1087
    %v1102 = vadd.f32 %v349, %v1101
    %v1103 = vtanh.pop %v1102
    %1104 = vrot.lane.b32.xlu0 %v1098, 96
    %v1105 = vpop.permute.xlu0 %1104
    %1106 = vrot.lane.b32.xlu0 %v1103, 64
    %v1107 = vpop.permute.xlu0 %1106
    %v1108 = vsub.f32 1.0, %v1105
    %v1109 = vmul.f32 %v1108, %v1107
    %v1110 = vmul.f32 %v1105, 0.0
    %v1111 = vadd.f32 %v1109, %v1110
    %v1112 = vsel %vm978, %v1111, 0.0
    %1113 = vst [vmem:[#allocation2 + $0x78] sm:$0xff] %v1112
    %v1114 = vpack.c.bf16 %v1112, %v1112
    %1115 = vmatprep.subr.bf16.mxu0 0
    %1116 = vmatpush1.bf16.msra.mxu0 %v1036
    %1117 = vmatprep.subr.bf16.mxu0 0
    %1118 = vmatpush1.bf16.msra.mxu0 %v1037
    %1119 = vmatprep.subr.bf16.mxu0 0
    %1120 = vmatpush1.bf16.msra.mxu0 %v1038
    %1121 = vmatprep.subr.bf16.mxu0 0
    %1122 = vmatpush1.bf16.msra.mxu0 %v1039
    %1123 = vmatprep.subr.bf16.mxu0 0
    %1124 = vmatpush1.bf16.msra.mxu0 %v1040
    %1125 = vmatprep.subr.bf16.mxu0 0
    %1126 = vmatpush1.bf16.msra.mxu0 %v1041
    %1127 = vmatprep.subr.bf16.mxu0 0
    %1128 = vmatpush1.bf16.msra.mxu0 %v1042
    %1129 = vmatprep.subr.bf16.mxu0 0
    %1130 = vmatpush1.bf16.msra.mxu0 %v1043
    %1131 = vmatprep.subr.bf16.mxu0 0
    %1132 = vmatpush1.bf16.msra.mxu0 0
    %1133 = vmatprep.subr.bf16.mxu0 0
    %1134 = vmatpush1.bf16.msra.mxu0 0
    %1135 = vmatprep.subr.bf16.mxu0 0
    %1136 = vmatpush1.bf16.msra.mxu0 0
    %1137 = vmatprep.subr.bf16.mxu0 0
    %1138 = vmatpush1.bf16.msra.mxu0 0
    %1139 = vmatprep.subr.bf16.mxu0 0
    %1140 = vmatpush1.bf16.msra.mxu0 0
    %1141 = vmatprep.subr.bf16.mxu0 0
    %1142 = vmatpush1.bf16.msra.mxu0 0
    %1143 = vmatprep.subr.bf16.mxu0 0
    %1144 = vmatpush1.bf16.msra.mxu0 0
    %1145 = vmatprep.subr.bf16.mxu0 0
    %1146 = vmatpush1.bf16.msra.mxu0 0
    %1147 = vmatprep.mubr.bf16.mxu0 0
    %1148 = vmatmul.mubr.bf16.gmra.mrb[0].mxu0 %v1114
    %v1149 = vpop.f32.mrb[0].mxu0
    %v1150 = vadd.f32 %v1002, %v1149
    %v1151 = vpop.f32.mrb[0].mxu0
    %v1152 = vpop.f32.mrb[0].mxu0
    %v1153 = vpop.f32.mrb[0].mxu0
    %1154 = vdwg.mxu0
    %v1155 = vadd.f32 %v345, %v1150
    %v1156 = vxor.u32 %v1155, 2147483648
    %v1157 = vmul.f32 %v1156, 1.442695
    %v1158 = vpow.pop %v1157
    %v1159 = vadd.f32 %v1158, 1.0
    %v1160 = vrcp.pop %v1159
    %v1161 = vmul.f32 1.0, %v1160
    %1162 = vrot.lane.b32.xlu0 %v1161, 64
    %v1163 = vpop.permute.xlu0 %1162
    %v1164 = vmul.f32 %v1163, %v1150
    %v1165 = vadd.f32 %v345, %v1164
    %v1166 = vtanh.pop %v1165
    %1167 = vrot.lane.b32.xlu0 %v1161, 96
    %v1168 = vpop.permute.xlu0 %1167
    %1169 = vrot.lane.b32.xlu0 %v1166, 64
    %v1170 = vpop.permute.xlu0 %1169
    %v1171 = vsub.f32 1.0, %v1168
    %v1172 = vmul.f32 %v1171, %v1170
    %v1173 = vmul.f32 %v1168, %v1112
    %v1174 = vadd.f32 %v1172, %v1173
    %v1175 = vsel %vm908, %v1174, %v1112
    %1176 = vst [vmem:[#allocation2 + $0x68] sm:$0xff] %v1175
    %v1177 = vpack.c.bf16 %v1175, %v1175
    %1178 = vmatprep.subr.bf16.mxu0 0
    %1179 = vmatpush1.bf16.msra.mxu0 %v1036
    %1180 = vmatprep.subr.bf16.mxu0 0
    %1181 = vmatpush1.bf16.msra.mxu0 %v1037
    %1182 = vmatprep.subr.bf16.mxu0 0
    %1183 = vmatpush1.bf16.msra.mxu0 %v1038
    %1184 = vmatprep.subr.bf16.mxu0 0
    %1185 = vmatpush1.bf16.msra.mxu0 %v1039
    %1186 = vmatprep.subr.bf16.mxu0 0
    %1187 = vmatpush1.bf16.msra.mxu0 %v1040
    %1188 = vmatprep.subr.bf16.mxu0 0
    %1189 = vmatpush1.bf16.msra.mxu0 %v1041
    %1190 = vmatprep.subr.bf16.mxu0 0
    %1191 = vmatpush1.bf16.msra.mxu0 %v1042
    %1192 = vmatprep.subr.bf16.mxu0 0
    %1193 = vmatpush1.bf16.msra.mxu0 %v1043
    %1194 = vmatprep.subr.bf16.mxu0 0
    %1195 = vmatpush1.bf16.msra.mxu0 0
    %1196 = vmatprep.subr.bf16.mxu0 0
    %1197 = vmatpush1.bf16.msra.mxu0 0
    %1198 = vmatprep.subr.bf16.mxu0 0
    %1199 = vmatpush1.bf16.msra.mxu0 0
    %1200 = vmatprep.subr.bf16.mxu0 0
    %1201 = vmatpush1.bf16.msra.mxu0 0
    %1202 = vmatprep.subr.bf16.mxu0 0
    %1203 = vmatpush1.bf16.msra.mxu0 0
    %1204 = vmatprep.subr.bf16.mxu0 0
    %1205 = vmatpush1.bf16.msra.mxu0 0
    %1206 = vmatprep.subr.bf16.mxu0 0
    %1207 = vmatpush1.bf16.msra.mxu0 0
    %1208 = vmatprep.subr.bf16.mxu0 0
    %1209 = vmatpush1.bf16.msra.mxu0 0
    %1210 = vmatprep.mubr.bf16.mxu0 0
    %1211 = vmatmul.mubr.bf16.gmra.mrb[0].mxu0 %v1177
    %v1212 = vpop.f32.mrb[0].mxu0
    %v1213 = vadd.f32 %v1002, %v1212
    %v1214 = vpop.f32.mrb[0].mxu0
    %v1215 = vpop.f32.mrb[0].mxu0
    %v1216 = vpop.f32.mrb[0].mxu0
    %1217 = vdwg.mxu0
    %v1218 = vadd.f32 %v339, %v1213
    %v1219 = vxor.u32 %v1218, 2147483648
    %v1220 = vmul.f32 %v1219, 1.442695
    %v1221 = vpow.pop %v1220
    %v1222 = vadd.f32 %v1221, 1.0
    %v1223 = vrcp.pop %v1222
    %v1224 = vmul.f32 1.0, %v1223
    %1225 = vrot.lane.b32.xlu0 %v1224, 64
    %v1226 = vpop.permute.xlu0 %1225
    %v1227 = vmul.f32 %v1226, %v1213
    %v1228 = vadd.f32 %v339, %v1227
    %v1229 = vtanh.pop %v1228
    %1230 = vrot.lane.b32.xlu0 %v1224, 96
    %v1231 = vpop.permute.xlu0 %1230
    %1232 = vrot.lane.b32.xlu0 %v1229, 64
    %v1233 = vpop.permute.xlu0 %1232
    %v1234 = vsub.f32 1.0, %v1231
    %v1235 = vmul.f32 %v1234, %v1233
    %v1236 = vmul.f32 %v1231, %v1175
    %v1237 = vadd.f32 %v1235, %v1236
    %v1238 = vsel %vm838, %v1237, %v1175
    %1239 = vst [vmem:[#allocation2 + $0x58] sm:$0xff] %v1238
    %v1240 = vpack.c.bf16 %v1238, %v1238
    %1241 = vmatprep.subr.bf16.mxu0 0
    %1242 = vmatpush1.bf16.msra.mxu0 %v1036
    %1243 = vmatprep.subr.bf16.mxu0 0
    %1244 = vmatpush1.bf16.msra.mxu0 %v1037
    %1245 = vmatprep.subr.bf16.mxu0 0
    %1246 = vmatpush1.bf16.msra.mxu0 %v1038
    %1247 = vmatprep.subr.bf16.mxu0 0
    %1248 = vmatpush1.bf16.msra.mxu0 %v1039
    %1249 = vmatprep.subr.bf16.mxu0 0
    %1250 = vmatpush1.bf16.msra.mxu0 %v1040
    %1251 = vmatprep.subr.bf16.mxu0 0
    %1252 = vmatpush1.bf16.msra.mxu0 %v1041
    %1253 = vmatprep.subr.bf16.mxu0 0
    %1254 = vmatpush1.bf16.msra.mxu0 %v1042
    %1255 = vmatprep.subr.bf16.mxu0 0
    %1256 = vmatpush1.bf16.msra.mxu0 %v1043
    %1257 = vmatprep.subr.bf16.mxu0 0
    %1258 = vmatpush1.bf16.msra.mxu0 0
    %1259 = vmatprep.subr.bf16.mxu0 0
    %1260 = vmatpush1.bf16.msra.mxu0 0
    %1261 = vmatprep.subr.bf16.mxu0 0
    %1262 = vmatpush1.bf16.msra.mxu0 0
    %1263 = vmatprep.subr.bf16.mxu0 0
    %1264 = vmatpush1.bf16.msra.mxu0 0
    %1265 = vmatprep.subr.bf16.mxu0 0
    %1266 = vmatpush1.bf16.msra.mxu0 0
    %1267 = vmatprep.subr.bf16.mxu0 0
    %1268 = vmatpush1.bf16.msra.mxu0 0
    %1269 = vmatprep.subr.bf16.mxu0 0
    %1270 = vmatpush1.bf16.msra.mxu0 0
    %1271 = vmatprep.subr.bf16.mxu0 0
    %1272 = vmatpush1.bf16.msra.mxu0 0
    %1273 = vmatprep.mubr.bf16.mxu0 0
    %1274 = vmatmul.mubr.bf16.gmra.mrb[0].mxu0 %v1240
    %v1275 = vpop.f32.mrb[0].mxu0
    %v1276 = vadd.f32 %v1002, %v1275
    %v1277 = vpop.f32.mrb[0].mxu0
    %v1278 = vpop.f32.mrb[0].mxu0
    %v1279 = vpop.f32.mrb[0].mxu0
    %1280 = vdwg.mxu0
    %v1281 = vadd.f32 %v335, %v1276
    %v1282 = vxor.u32 %v1281, 2147483648
    %v1283 = vmul.f32 %v1282, 1.442695
    %v1284 = vpow.pop %v1283
    %v1285 = vadd.f32 %v1284, 1.0
    %v1286 = vrcp.pop %v1285
    %v1287 = vmul.f32 1.0, %v1286
    %1288 = vrot.lane.b32.xlu0 %v1287, 64
    %v1289 = vpop.permute.xlu0 %1288
    %v1290 = vmul.f32 %v1289, %v1276
    %v1291 = vadd.f32 %v335, %v1290
    %v1292 = vtanh.pop %v1291
    %1293 = vrot.lane.b32.xlu0 %v1287, 96
    %v1294 = vpop.permute.xlu0 %1293
    %1295 = vrot.lane.b32.xlu0 %v1292, 64
    %v1296 = vpop.permute.xlu0 %1295
    %v1297 = vsub.f32 1.0, %v1294
    %v1298 = vmul.f32 %v1297, %v1296
    %v1299 = vmul.f32 %v1294, %v1238
    %v1300 = vadd.f32 %v1298, %v1299
    %v1301 = vsel %vm768, %v1300, %v1238
    %1302 = vst [vmem:[#allocation2 + $0x48] sm:$0xff] %v1301
    %v1303 = vpack.c.bf16 %v1301, %v1301
    %1304 = vmatprep.subr.bf16.mxu0 0
    %1305 = vmatpush1.bf16.msra.mxu0 %v1036
    %1306 = vmatprep.subr.bf16.mxu0 0
    %1307 = vmatpush1.bf16.msra.mxu0 %v1037
    %1308 = vmatprep.subr.bf16.mxu0 0
    %1309 = vmatpush1.bf16.msra.mxu0 %v1038
    %1310 = vmatprep.subr.bf16.mxu0 0
    %1311 = vmatpush1.bf16.msra.mxu0 %v1039
    %1312 = vmatprep.subr.bf16.mxu0 0
    %1313 = vmatpush1.bf16.msra.mxu0 %v1040
    %1314 = vmatprep.subr.bf16.mxu0 0
    %1315 = vmatpush1.bf16.msra.mxu0 %v1041
    %1316 = vmatprep.subr.bf16.mxu0 0
    %1317 = vmatpush1.bf16.msra.mxu0 %v1042
    %1318 = vmatprep.subr.bf16.mxu0 0
    %1319 = vmatpush1.bf16.msra.mxu0 %v1043
    %1320 = vmatprep.subr.bf16.mxu0 0
    %1321 = vmatpush1.bf16.msra.mxu0 0
    %1322 = vmatprep.subr.bf16.mxu0 0
    %1323 = vmatpush1.bf16.msra.mxu0 0
    %1324 = vmatprep.subr.bf16.mxu0 0
    %1325 = vmatpush1.bf16.msra.mxu0 0
    %1326 = vmatprep.subr.bf16.mxu0 0
    %1327 = vmatpush1.bf16.msra.mxu0 0
    %1328 = vmatprep.subr.bf16.mxu0 0
    %1329 = vmatpush1.bf16.msra.mxu0 0
    %1330 = vmatprep.subr.bf16.mxu0 0
    %1331 = vmatpush1.bf16.msra.mxu0 0
    %1332 = vmatprep.subr.bf16.mxu0 0
    %1333 = vmatpush1.bf16.msra.mxu0 0
    %1334 = vmatprep.subr.bf16.mxu0 0
    %1335 = vmatpush1.bf16.msra.mxu0 0
    %1336 = vmatprep.mubr.bf16.mxu0 0
    %1337 = vmatmul.mubr.bf16.gmra.mrb[0].mxu0 %v1303
    %v1338 = vpop.f32.mrb[0].mxu0
    %v1339 = vadd.f32 %v1002, %v1338
    %v1340 = vpop.f32.mrb[0].mxu0
    %v1341 = vpop.f32.mrb[0].mxu0
    %v1342 = vpop.f32.mrb[0].mxu0
    %1343 = vdwg.mxu0
    %v1344 = vadd.f32 %v329, %v1339
    %v1345 = vxor.u32 %v1344, 2147483648
    %v1346 = vmul.f32 %v1345, 1.442695
    %v1347 = vpow.pop %v1346
    %v1348 = vadd.f32 %v1347, 1.0
    %v1349 = vrcp.pop %v1348
    %v1350 = vmul.f32 1.0, %v1349
    %1351 = vrot.lane.b32.xlu0 %v1350, 64
    %v1352 = vpop.permute.xlu0 %1351
    %v1353 = vmul.f32 %v1352, %v1339
    %v1354 = vadd.f32 %v329, %v1353
    %v1355 = vtanh.pop %v1354
    %1356 = vrot.lane.b32.xlu0 %v1350, 96
    %v1357 = vpop.permute.xlu0 %1356
    %1358 = vrot.lane.b32.xlu0 %v1355, 64
    %v1359 = vpop.permute.xlu0 %1358
    %v1360 = vsub.f32 1.0, %v1357
    %v1361 = vmul.f32 %v1360, %v1359
    %v1362 = vmul.f32 %v1357, %v1301
    %v1363 = vadd.f32 %v1361, %v1362
    %v1364 = vsel %vm698, %v1363, %v1301
    %1365 = vst [vmem:[#allocation2 + $0x38] sm:$0xff] %v1364
    %v1366 = vpack.c.bf16 %v1364, %v1364
    %1367 = vmatprep.subr.bf16.mxu0 0
    %1368 = vmatpush1.bf16.msra.mxu0 %v1036
    %1369 = vmatprep.subr.bf16.mxu0 0
    %1370 = vmatpush1.bf16.msra.mxu0 %v1037
    %1371 = vmatprep.subr.bf16.mxu0 0
    %1372 = vmatpush1.bf16.msra.mxu0 %v1038
    %1373 = vmatprep.subr.bf16.mxu0 0
    %1374 = vmatpush1.bf16.msra.mxu0 %v1039
    %1375 = vmatprep.subr.bf16.mxu0 0
    %1376 = vmatpush1.bf16.msra.mxu0 %v1040
    %1377 = vmatprep.subr.bf16.mxu0 0
    %1378 = vmatpush1.bf16.msra.mxu0 %v1041
    %1379 = vmatprep.subr.bf16.mxu0 0
    %1380 = vmatpush1.bf16.msra.mxu0 %v1042
    %1381 = vmatprep.subr.bf16.mxu0 0
    %1382 = vmatpush1.bf16.msra.mxu0 %v1043
    %1383 = vmatprep.subr.bf16.mxu0 0
    %1384 = vmatpush1.bf16.msra.mxu0 0
    %1385 = vmatprep.subr.bf16.mxu0 0
    %1386 = vmatpush1.bf16.msra.mxu0 0
    %1387 = vmatprep.subr.bf16.mxu0 0
    %1388 = vmatpush1.bf16.msra.mxu0 0
    %1389 = vmatprep.subr.bf16.mxu0 0
    %1390 = vmatpush1.bf16.msra.mxu0 0
    %1391 = vmatprep.subr.bf16.mxu0 0
    %1392 = vmatpush1.bf16.msra.mxu0 0
    %1393 = vmatprep.subr.bf16.mxu0 0
    %1394 = vmatpush1.bf16.msra.mxu0 0
    %1395 = vmatprep.subr.bf16.mxu0 0
    %1396 = vmatpush1.bf16.msra.mxu0 0
    %1397 = vmatprep.subr.bf16.mxu0 0
    %1398 = vmatpush1.bf16.msra.mxu0 0
    %1399 = vmatprep.mubr.bf16.mxu0 0
    %1400 = vmatmul.mubr.bf16.gmra.mrb[0].mxu0 %v1366
    %v1401 = vpop.f32.mrb[0].mxu0
    %v1402 = vadd.f32 %v1002, %v1401
    %v1403 = vpop.f32.mrb[0].mxu0
    %v1404 = vpop.f32.mrb[0].mxu0
    %v1405 = vpop.f32.mrb[0].mxu0
    %1406 = vdwg.mxu0
    %v1407 = vadd.f32 %v325, %v1402
    %v1408 = vxor.u32 %v1407, 2147483648
    %v1409 = vmul.f32 %v1408, 1.442695
    %v1410 = vpow.pop %v1409
    %v1411 = vadd.f32 %v1410, 1.0
    %v1412 = vrcp.pop %v1411
    %v1413 = vmul.f32 1.0, %v1412
    %1414 = vrot.lane.b32.xlu0 %v1413, 64
    %v1415 = vpop.permute.xlu0 %1414
    %v1416 = vmul.f32 %v1415, %v1402
    %v1417 = vadd.f32 %v325, %v1416
    %v1418 = vtanh.pop %v1417
    %1419 = vrot.lane.b32.xlu0 %v1413, 96
    %v1420 = vpop.permute.xlu0 %1419
    %1421 = vrot.lane.b32.xlu0 %v1418, 64
    %v1422 = vpop.permute.xlu0 %1421
    %v1423 = vsub.f32 1.0, %v1420
    %v1424 = vmul.f32 %v1423, %v1422
    %v1425 = vmul.f32 %v1420, %v1364
    %v1426 = vadd.f32 %v1424, %v1425
    %v1427 = vsel %vm628, %v1426, %v1364
    %1428 = vst [vmem:[#allocation2 + $0x28] sm:$0xff] %v1427
    %v1429 = vpack.c.bf16 %v1427, %v1427
    %1430 = vmatprep.subr.bf16.mxu0 0
    %1431 = vmatpush1.bf16.msra.mxu0 %v1036
    %1432 = vmatprep.subr.bf16.mxu0 0
    %1433 = vmatpush1.bf16.msra.mxu0 %v1037
    %1434 = vmatprep.subr.bf16.mxu0 0
    %1435 = vmatpush1.bf16.msra.mxu0 %v1038
    %1436 = vmatprep.subr.bf16.mxu0 0
    %1437 = vmatpush1.bf16.msra.mxu0 %v1039
    %1438 = vmatprep.subr.bf16.mxu0 0
    %1439 = vmatpush1.bf16.msra.mxu0 %v1040
    %1440 = vmatprep.subr.bf16.mxu0 0
    %1441 = vmatpush1.bf16.msra.mxu0 %v1041
    %1442 = vmatprep.subr.bf16.mxu0 0
    %1443 = vmatpush1.bf16.msra.mxu0 %v1042
    %1444 = vmatprep.subr.bf16.mxu0 0
    %1445 = vmatpush1.bf16.msra.mxu0 %v1043
    %1446 = vmatprep.subr.bf16.mxu0 0
    %1447 = vmatpush1.bf16.msra.mxu0 0
    %1448 = vmatprep.subr.bf16.mxu0 0
    %1449 = vmatpush1.bf16.msra.mxu0 0
    %1450 = vmatprep.subr.bf16.mxu0 0
    %1451 = vmatpush1.bf16.msra.mxu0 0
    %1452 = vmatprep.subr.bf16.mxu0 0
    %1453 = vmatpush1.bf16.msra.mxu0 0
    %1454 = vmatprep.subr.bf16.mxu0 0
    %1455 = vmatpush1.bf16.msra.mxu0 0
    %1456 = vmatprep.subr.bf16.mxu0 0
    %1457 = vmatpush1.bf16.msra.mxu0 0
    %1458 = vmatprep.subr.bf16.mxu0 0
    %1459 = vmatpush1.bf16.msra.mxu0 0
    %1460 = vmatprep.subr.bf16.mxu0 0
    %1461 = vmatpush1.bf16.msra.mxu0 0
    %1462 = vmatprep.mubr.bf16.mxu0 0
    %1463 = vmatmul.mubr.bf16.gmra.mrb[0].mxu0 %v1429
    %v1464 = vpop.f32.mrb[0].mxu0
    %v1465 = vadd.f32 %v1002, %v1464
    %v1466 = vpop.f32.mrb[0].mxu0
    %v1467 = vpop.f32.mrb[0].mxu0
    %v1468 = vpop.f32.mrb[0].mxu0
    %1469 = vdwg.mxu0
    %v1470 = vadd.f32 %v319, %v1465
    %v1471 = vxor.u32 %v1470, 2147483648
    %v1472 = vmul.f32 %v1471, 1.442695
    %v1473 = vpow.pop %v1472
    %v1474 = vadd.f32 %v1473, 1.0
    %v1475 = vrcp.pop %v1474
    %v1476 = vmul.f32 1.0, %v1475
    %1477 = vrot.lane.b32.xlu0 %v1476, 64
    %v1478 = vpop.permute.xlu0 %1477
    %v1479 = vmul.f32 %v1478, %v1465
    %v1480 = vadd.f32 %v319, %v1479
    %v1481 = vtanh.pop %v1480
    %1482 = vrot.lane.b32.xlu0 %v1476, 96
    %v1483 = vpop.permute.xlu0 %1482
    %1484 = vrot.lane.b32.xlu0 %v1481, 64
    %v1485 = vpop.permute.xlu0 %1484
    %v1486 = vsub.f32 1.0, %v1483
    %v1487 = vmul.f32 %v1486, %v1485
    %v1488 = vmul.f32 %v1483, %v1427
    %v1489 = vadd.f32 %v1487, %v1488
    %v1490 = vsel %vm558, %v1489, %v1427
    %1491 = vst [vmem:[#allocation2 + $0x18] sm:$0xff] %v1490
    %v1492 = vpack.c.bf16 %v1490, %v1490
    %1493 = vmatprep.subr.bf16.mxu0 0
    %1494 = vmatpush1.bf16.msra.mxu0 %v1036
    %1495 = vmatprep.subr.bf16.mxu0 0
    %1496 = vmatpush1.bf16.msra.mxu0 %v1037
    %1497 = vmatprep.subr.bf16.mxu0 0
    %1498 = vmatpush1.bf16.msra.mxu0 %v1038
    %1499 = vmatprep.subr.bf16.mxu0 0
    %1500 = vmatpush1.bf16.msra.mxu0 %v1039
    %1501 = vmatprep.subr.bf16.mxu0 0
    %1502 = vmatpush1.bf16.msra.mxu0 %v1040
    %1503 = vmatprep.subr.bf16.mxu0 0
    %1504 = vmatpush1.bf16.msra.mxu0 %v1041
    %1505 = vmatprep.subr.bf16.mxu0 0
    %1506 = vmatpush1.bf16.msra.mxu0 %v1042
    %1507 = vmatprep.subr.bf16.mxu0 0
    %1508 = vmatpush1.bf16.msra.mxu0 %v1043
    %1509 = vmatprep.subr.bf16.mxu0 0
    %1510 = vmatpush1.bf16.msra.mxu0 0
    %1511 = vmatprep.subr.bf16.mxu0 0
    %1512 = vmatpush1.bf16.msra.mxu0 0
    %1513 = vmatprep.subr.bf16.mxu0 0
    %1514 = vmatpush1.bf16.msra.mxu0 0
    %1515 = vmatprep.subr.bf16.mxu0 0
    %1516 = vmatpush1.bf16.msra.mxu0 0
    %1517 = vmatprep.subr.bf16.mxu0 0
    %1518 = vmatpush1.bf16.msra.mxu0 0
    %1519 = vmatprep.subr.bf16.mxu0 0
    %1520 = vmatpush1.bf16.msra.mxu0 0
    %1521 = vmatprep.subr.bf16.mxu0 0
    %1522 = vmatpush1.bf16.msra.mxu0 0
    %1523 = vmatprep.subr.bf16.mxu0 0
    %1524 = vmatpush1.bf16.msra.mxu0 0
    %1525 = vmatprep.mubr.bf16.mxu0 0
    %1526 = vmatmul.mubr.bf16.gmra.mrb[0].mxu0 %v1492
    %v1527 = vpop.f32.mrb[0].mxu0
    %v1528 = vadd.f32 %v1002, %v1527
    %v1529 = vpop.f32.mrb[0].mxu0
    %v1530 = vpop.f32.mrb[0].mxu0
    %v1531 = vpop.f32.mrb[0].mxu0
    %1532 = vdwg.mxu0
    %v1533 = vadd.f32 %v315, %v1528
    %v1534 = vxor.u32 %v1533, 2147483648
    %v1535 = vmul.f32 %v1534, 1.442695
    %v1536 = vpow.pop %v1535
    %v1537 = vadd.f32 %v1536, 1.0
    %v1538 = vrcp.pop %v1537
    %v1539 = vmul.f32 1.0, %v1538
    %1540 = vrot.lane.b32.xlu0 %v1539, 64
    %v1541 = vpop.permute.xlu0 %1540
    %v1542 = vmul.f32 %v1541, %v1528
    %v1543 = vadd.f32 %v315, %v1542
    %v1544 = vtanh.pop %v1543
    %1545 = vrot.lane.b32.xlu0 %v1539, 96
    %v1546 = vpop.permute.xlu0 %1545
    %1547 = vrot.lane.b32.xlu0 %v1544, 64
    %v1548 = vpop.permute.xlu0 %1547
    %v1549 = vsub.f32 1.0, %v1546
    %v1550 = vmul.f32 %v1549, %v1548
    %v1551 = vmul.f32 %v1546, %v1490
    %v1552 = vadd.f32 %v1550, %v1551
    %v1553 = vsel %vm488, %v1552, %v1490
    %1554 = vst [vmem:[#allocation2 + $0x8] sm:$0xff] %v1553
    %v1555 = vld [vmem:[#allocation2] sm:$0xff]
    %v1556 = vld [vmem:[#allocation2 + $0x8] sm:$0xff]
    %v1557 = vld [vmem:[#allocation2 + $0x10] sm:$0xff]
    %v1558 = vld [vmem:[#allocation2 + $0x18] sm:$0xff]
    %v1559 = vld [vmem:[#allocation2 + $0x20] sm:$0xff]
    %v1560 = vld [vmem:[#allocation2 + $0x28] sm:$0xff]
    %v1561 = vld [vmem:[#allocation2 + $0x30] sm:$0xff]
    %v1562 = vld [vmem:[#allocation2 + $0x38] sm:$0xff]
    %v1563 = vld [vmem:[#allocation2 + $0x40] sm:$0xff]
    %v1564 = vld [vmem:[#allocation2 + $0x48] sm:$0xff]
    %v1565 = vld [vmem:[#allocation2 + $0x50] sm:$0xff]
    %v1566 = vld [vmem:[#allocation2 + $0x58] sm:$0xff]
    %v1567 = vld [vmem:[#allocation2 + $0x60] sm:$0xff]
    %v1568 = vld [vmem:[#allocation2 + $0x68] sm:$0xff]
    %v1569 = vld [vmem:[#allocation2 + $0x70] sm:$0xff]
    %v1570 = vld [vmem:[#allocation2 + $0x78] sm:$0xff]
    %v1571 = vpack.c.bf16 %v1557, %v1555
    %v1572 = vpack.c.bf16 %v1558, %v1556
    %v1573 = vpack.c.bf16 %v1561, %v1559
    %v1574 = vpack.c.bf16 %v1562, %v1560
    %v1575 = vpack.c.bf16 %v1565, %v1563
    %v1576 = vpack.c.bf16 %v1566, %v1564
    %v1577 = vpack.c.bf16 %v1569, %v1567
    %v1578 = vpack.c.bf16 %v1570, %v1568
    %v1579 = vld [vmem:[#allocation5] sm:$0xff]
    %v1580 = vld [vmem:[#allocation5 + $0x8] sm:$0xff]
    %v1581 = vld [vmem:[#allocation5 + $0x10] sm:$0xff]
    %v1582 = vld [vmem:[#allocation5 + $0x18] sm:$0xff]
    %v1583 = vld [vmem:[#allocation5 + $0x20] sm:$0xff]
    %v1584 = vld [vmem:[#allocation5 + $0x28] sm:$0xff]
    %v1585 = vld [vmem:[#allocation5 + $0x30] sm:$0xff]
    %v1586 = vld [vmem:[#allocation5 + $0x38] sm:$0xff]
    %v1587 = vld [vmem:[#allocation5 + $0x40] sm:$0xff]
    %v1588 = vld [vmem:[#allocation5 + $0x48] sm:$0xff]
    %v1589 = vld [vmem:[#allocation5 + $0x50] sm:$0xff]
    %v1590 = vld [vmem:[#allocation5 + $0x58] sm:$0xff]
    %v1591 = vld [vmem:[#allocation5 + $0x60] sm:$0xff]
    %v1592 = vld [vmem:[#allocation5 + $0x68] sm:$0xff]
    %v1593 = vld [vmem:[#allocation5 + $0x70] sm:$0xff]
    %v1594 = vld [vmem:[#allocation5 + $0x78] sm:$0xff]
    %v1595 = vld [vmem:[#allocation5 + $0x80] sm:$0xff]
    %v1596 = vld [vmem:[#allocation5 + $0x88] sm:$0xff]
    %v1597 = vld [vmem:[#allocation5 + $0x90] sm:$0xff]
    %v1598 = vld [vmem:[#allocation5 + $0x98] sm:$0xff]
    %v1599 = vld [vmem:[#allocation5 + $0xa0] sm:$0xff]
    %v1600 = vld [vmem:[#allocation5 + $0xa8] sm:$0xff]
    %v1601 = vld [vmem:[#allocation5 + $0xb0] sm:$0xff]
    %v1602 = vld [vmem:[#allocation5 + $0xb8] sm:$0xff]
    %v1603 = vld [vmem:[#allocation5 + $0xc0] sm:$0xff]
    %v1604 = vld [vmem:[#allocation5 + $0xc8] sm:$0xff]
    %v1605 = vld [vmem:[#allocation5 + $0xd0] sm:$0xff]
    %v1606 = vld [vmem:[#allocation5 + $0xd8] sm:$0xff]
    %v1607 = vld [vmem:[#allocation5 + $0xe0] sm:$0xff]
    %v1608 = vld [vmem:[#allocation5 + $0xe8] sm:$0xff]
    %v1609 = vld [vmem:[#allocation5 + $0xf0] sm:$0xff]
    %v1610 = vld [vmem:[#allocation5 + $0xf8] sm:$0xff]
    %v1611 = vld [vmem:[%s9] sm:$0x3]
    %v1613 = vlaneseq
    %v1614 = vshrl.u32 %v1613, 7
    %v1615 = vsub.s32 0, %v1614
    %v1616 = vrot.slane %v1611, %v1615
    %v1617 = vlaneseq
    %v1618 = vshrl.u32 %v1617, 7
    %v1619 = vsub.s32 1, %v1618
    %v1620 = vrot.slane %v1611, %v1619
    %v1655 = vunpack.c.l.b16 %v1579
    %v1656 = vunpack.c.h.b16 %v1579
    %v1657 = vunpack.c.l.b16 %v1580
    %v1658 = vunpack.c.h.b16 %v1580
    %v1659 = vunpack.c.l.b16 %v1581
    %v1660 = vunpack.c.h.b16 %v1581
    %v1661 = vunpack.c.l.b16 %v1582
    %v1662 = vunpack.c.h.b16 %v1582
    %v1663 = vunpack.c.l.b16 %v1583
    %v1664 = vunpack.c.h.b16 %v1583
    %v1665 = vunpack.c.l.b16 %v1584
    %v1666 = vunpack.c.h.b16 %v1584
    %v1667 = vunpack.c.l.b16 %v1585
    %v1668 = vunpack.c.h.b16 %v1585
    %v1669 = vunpack.c.l.b16 %v1586
    %v1670 = vunpack.c.h.b16 %v1586
    %v1671 = vunpack.c.l.b16 %v1587
    %v1672 = vunpack.c.h.b16 %v1587
    %v1673 = vunpack.c.l.b16 %v1588
    %v1674 = vunpack.c.h.b16 %v1588
    %v1675 = vunpack.c.l.b16 %v1589
    %v1676 = vunpack.c.h.b16 %v1589
    %v1677 = vunpack.c.l.b16 %v1590
    %v1678 = vunpack.c.h.b16 %v1590
    %v1679 = vunpack.c.l.b16 %v1591
    %v1680 = vunpack.c.h.b16 %v1591
    %v1681 = vunpack.c.l.b16 %v1592
    %v1682 = vunpack.c.h.b16 %v1592
    %v1683 = vunpack.c.l.b16 %v1593
    %v1684 = vunpack.c.h.b16 %v1593
    %v1685 = vunpack.c.l.b16 %v1594
    %v1686 = vunpack.c.h.b16 %v1594
    %v1687 = vunpack.c.l.b16 %v1595
    %v1688 = vunpack.c.h.b16 %v1595
    %v1689 = vunpack.c.l.b16 %v1596
    %v1690 = vunpack.c.h.b16 %v1596
    %v1691 = vunpack.c.l.b16 %v1597
    %v1692 = vunpack.c.h.b16 %v1597
    %v1693 = vunpack.c.l.b16 %v1598
    %v1694 = vunpack.c.h.b16 %v1598
    %v1695 = vunpack.c.l.b16 %v1599
    %v1696 = vunpack.c.h.b16 %v1599
    %v1697 = vunpack.c.l.b16 %v1600
    %v1698 = vunpack.c.h.b16 %v1600
    %v1699 = vunpack.c.l.b16 %v1601
    %v1700 = vunpack.c.h.b16 %v1601
    %v1701 = vunpack.c.l.b16 %v1602
    %v1702 = vunpack.c.h.b16 %v1602
    %v1703 = vunpack.c.l.b16 %v1603
    %v1704 = vunpack.c.h.b16 %v1603
    %v1705 = vunpack.c.l.b16 %v1604
    %v1706 = vunpack.c.h.b16 %v1604
    %v1707 = vunpack.c.l.b16 %v1605
    %v1708 = vunpack.c.h.b16 %v1605
    %v1709 = vunpack.c.l.b16 %v1606
    %v1710 = vunpack.c.h.b16 %v1606
    %v1711 = vunpack.c.l.b16 %v1607
    %v1712 = vunpack.c.h.b16 %v1607
    %v1713 = vunpack.c.l.b16 %v1608
    %v1714 = vunpack.c.h.b16 %v1608
    %v1715 = vunpack.c.l.b16 %v1609
    %v1716 = vunpack.c.h.b16 %v1609
    %v1717 = vunpack.c.l.b16 %v1610
    %v1718 = vunpack.c.h.b16 %v1610
    %v1719 = vpack.c.b16 %v1657, %v1655
    %v1720 = vpack.c.b16 %v1658, %v1656
    %v1721 = vpack.c.b16 %v1661, %v1659
    %v1722 = vpack.c.b16 %v1662, %v1660
    %v1723 = vpack.c.b16 %v1665, %v1663
    %v1724 = vpack.c.b16 %v1666, %v1664
    %v1725 = vpack.c.b16 %v1669, %v1667
    %v1726 = vpack.c.b16 %v1670, %v1668
    %v1727 = vpack.c.b16 %v1673, %v1671
    %v1728 = vpack.c.b16 %v1674, %v1672
    %v1729 = vpack.c.b16 %v1677, %v1675
    %v1730 = vpack.c.b16 %v1678, %v1676
    %v1731 = vpack.c.b16 %v1681, %v1679
    %v1732 = vpack.c.b16 %v1682, %v1680
    %v1733 = vpack.c.b16 %v1685, %v1683
    %v1734 = vpack.c.b16 %v1686, %v1684
    %v1735 = vpack.c.b16 %v1689, %v1687
    %v1736 = vpack.c.b16 %v1690, %v1688
    %v1737 = vpack.c.b16 %v1693, %v1691
    %v1738 = vpack.c.b16 %v1694, %v1692
    %v1739 = vpack.c.b16 %v1697, %v1695
    %v1740 = vpack.c.b16 %v1698, %v1696
    %v1741 = vpack.c.b16 %v1701, %v1699
    %v1742 = vpack.c.b16 %v1702, %v1700
    %v1743 = vpack.c.b16 %v1705, %v1703
    %v1744 = vpack.c.b16 %v1706, %v1704
    %v1745 = vpack.c.b16 %v1709, %v1707
    %v1746 = vpack.c.b16 %v1710, %v1708
    %v1747 = vpack.c.b16 %v1713, %v1711
    %v1748 = vpack.c.b16 %v1714, %v1712
    %v1749 = vpack.c.b16 %v1717, %v1715
    %v1750 = vpack.c.b16 %v1718, %v1716
    %1783 = vmatprep.subr.bf16.mxu0 %v1720
    %1784 = vmatpush1.bf16.msra.mxu0 %v1719
    %1785 = vmatprep.subr.bf16.mxu0 %v1722
    %1786 = vmatpush1.bf16.msra.mxu0 %v1721
    %1787 = vmatprep.subr.bf16.mxu0 %v1724
    %1788 = vmatpush1.bf16.msra.mxu0 %v1723
    %1789 = vmatprep.subr.bf16.mxu0 %v1726
    %1790 = vmatpush1.bf16.msra.mxu0 %v1725
    %1791 = vmatprep.subr.bf16.mxu0 %v1728
    %1792 = vmatpush1.bf16.msra.mxu0 %v1727
    %1793 = vmatprep.subr.bf16.mxu0 %v1730
    %1794 = vmatpush1.bf16.msra.mxu0 %v1729
    %1795 = vmatprep.subr.bf16.mxu0 %v1732
    %1796 = vmatpush1.bf16.msra.mxu0 %v1731
    %1797 = vmatprep.subr.bf16.mxu0 %v1734
    %1798 = vmatpush1.bf16.msra.mxu0 %v1733
    %1799 = vmatprep.subr.bf16.mxu0 %v1736
    %1800 = vmatpush1.bf16.msra.mxu0 %v1735
    %1801 = vmatprep.subr.bf16.mxu0 %v1738
    %1802 = vmatpush1.bf16.msra.mxu0 %v1737
    %1803 = vmatprep.subr.bf16.mxu0 %v1740
    %1804 = vmatpush1.bf16.msra.mxu0 %v1739
    %1805 = vmatprep.subr.bf16.mxu0 %v1742
    %1806 = vmatpush1.bf16.msra.mxu0 %v1741
    %1807 = vmatprep.subr.bf16.mxu0 %v1744
    %1808 = vmatpush1.bf16.msra.mxu0 %v1743
    %1809 = vmatprep.subr.bf16.mxu0 %v1746
    %1810 = vmatpush1.bf16.msra.mxu0 %v1745
    %1811 = vmatprep.subr.bf16.mxu0 %v1748
    %1812 = vmatpush1.bf16.msra.mxu0 %v1747
    %1813 = vmatprep.subr.bf16.mxu0 %v1750
    %1814 = vmatpush1.bf16.msra.mxu0 %v1749
    %1815 = vmatprep.mubr.bf16.mxu0 %v1572
    %1816 = vmatmul.mubr.bf16.gmra.mrb[0].mxu0 %v1571
    %v1817 = vpop.f32.mrb[0].mxu0
    %v1818 = vadd.f32 %v1616, %v1817
    %v1819 = vpop.f32.mrb[0].mxu0
    %v1820 = vadd.f32 %v1620, %v1819
    %v1821 = vpop.f32.mrb[0].mxu0
    %v1822 = vadd.f32 %v1616, %v1821
    %v1823 = vpop.f32.mrb[0].mxu0
    %v1824 = vadd.f32 %v1620, %v1823
    %1825 = vmatprep.mubr.bf16.mxu0 %v1574
    %1826 = vmatmul.mubr.bf16.gmra.mrb[0].mxu0 %v1573
    %v1827 = vpop.f32.mrb[0].mxu0
    %v1828 = vadd.f32 %v1616, %v1827
    %v1829 = vpop.f32.mrb[0].mxu0
    %v1830 = vadd.f32 %v1620, %v1829
    %v1831 = vpop.f32.mrb[0].mxu0
    %v1832 = vadd.f32 %v1616, %v1831
    %v1833 = vpop.f32.mrb[0].mxu0
    %v1834 = vadd.f32 %v1620, %v1833
    %1835 = vmatprep.mubr.bf16.mxu0 %v1576
    %1836 = vmatmul.mubr.bf16.gmra.mrb[0].mxu0 %v1575
    %v1837 = vpop.f32.mrb[0].mxu0
    %v1838 = vadd.f32 %v1616, %v1837
    %v1839 = vpop.f32.mrb[0].mxu0
    %v1840 = vadd.f32 %v1620, %v1839
    %v1841 = vpop.f32.mrb[0].mxu0
    %v1842 = vadd.f32 %v1616, %v1841
    %v1843 = vpop.f32.mrb[0].mxu0
    %v1844 = vadd.f32 %v1620, %v1843
    %1845 = vmatprep.mubr.bf16.mxu0 %v1578
    %1846 = vmatmul.mubr.bf16.gmra.mrb[0].mxu0 %v1577
    %v1847 = vpop.f32.mrb[0].mxu0
    %v1848 = vadd.f32 %v1616, %v1847
    %v1849 = vpop.f32.mrb[0].mxu0
    %v1850 = vadd.f32 %v1620, %v1849
    %v1851 = vpop.f32.mrb[0].mxu0
    %v1852 = vadd.f32 %v1616, %v1851
    %v1853 = vpop.f32.mrb[0].mxu0
    %v1854 = vadd.f32 %v1620, %v1853
    %1855 = vdwg.mxu0
    %v1856 = vld [vmem:[#allocation7] sm:$0xf]
    %v1857 = vld [vmem:[#allocation7 + $0x4] sm:$0xf]
    %v1858 = vld [vmem:[#allocation7 + $0x8] sm:$0xf]
    %v1859 = vld [vmem:[#allocation7 + $0xc] sm:$0xf]
    %v1860 = vld [vmem:[#allocation7 + $0x10] sm:$0xf]
    %v1861 = vld [vmem:[#allocation7 + $0x14] sm:$0xf]
    %v1862 = vld [vmem:[#allocation7 + $0x18] sm:$0xf]
    %v1863 = vld [vmem:[#allocation7 + $0x1c] sm:$0xf]
    %v1864 = vld [vmem:[#allocation7 + $0x20] sm:$0xf]
    %v1865 = vld [vmem:[#allocation7 + $0x24] sm:$0xf]
    %v1866 = vld [vmem:[#allocation7 + $0x28] sm:$0xf]
    %v1867 = vld [vmem:[#allocation7 + $0x2c] sm:$0xf]
    %v1868 = vld [vmem:[#allocation7 + $0x30] sm:$0xf]
    %v1869 = vld [vmem:[#allocation7 + $0x34] sm:$0xf]
    %v1870 = vld [vmem:[#allocation7 + $0x38] sm:$0xf]
    %v1871 = vld [vmem:[#allocation7 + $0x3c] sm:$0xf]
    %v1872 = vld [vmem:[%s12] sm:$0x1]
    %v1874 = vlaneseq
    %v1875 = vshrl.u32 %v1874, 7
    %v1876 = vsub.s32 0, %v1875
    %v1877 = vrot.slane %v1872, %v1876
    %v1895 = vunpack.c.l.b16 %v1856
    %v1896 = vunpack.c.l.b16 %v1857
    %v1897 = vunpack.c.l.b16 %v1858
    %v1898 = vunpack.c.l.b16 %v1859
    %v1899 = vunpack.c.l.b16 %v1860
    %v1900 = vunpack.c.l.b16 %v1861
    %v1901 = vunpack.c.l.b16 %v1862
    %v1902 = vunpack.c.l.b16 %v1863
    %v1903 = vunpack.c.l.b16 %v1864
    %v1904 = vunpack.c.l.b16 %v1865
    %v1905 = vunpack.c.l.b16 %v1866
    %v1906 = vunpack.c.l.b16 %v1867
    %v1907 = vunpack.c.l.b16 %v1868
    %v1908 = vunpack.c.l.b16 %v1869
    %v1909 = vunpack.c.l.b16 %v1870
    %v1910 = vunpack.c.l.b16 %v1871
    %v1911 = vpack.c.b16 %v1896, %v1895
    %v1912 = vpack.c.b16 %v1898, %v1897
    %v1913 = vpack.c.b16 %v1900, %v1899
    %v1914 = vpack.c.b16 %v1902, %v1901
    %v1915 = vpack.c.b16 %v1904, %v1903
    %v1916 = vpack.c.b16 %v1906, %v1905
    %v1917 = vpack.c.b16 %v1908, %v1907
    %v1918 = vpack.c.b16 %v1910, %v1909
    %1927 = vmatprep.subr.bf16.mxu0 0
    %1928 = vmatpush1.bf16.msra.mxu0 %v1911
    %1929 = vmatprep.subr.bf16.mxu0 0
    %1930 = vmatpush1.bf16.msra.mxu0 %v1912
    %1931 = vmatprep.subr.bf16.mxu0 0
    %1932 = vmatpush1.bf16.msra.mxu0 %v1913
    %1933 = vmatprep.subr.bf16.mxu0 0
    %1934 = vmatpush1.bf16.msra.mxu0 %v1914
    %1935 = vmatprep.subr.bf16.mxu0 0
    %1936 = vmatpush1.bf16.msra.mxu0 %v1915
    %1937 = vmatprep.subr.bf16.mxu0 0
    %1938 = vmatpush1.bf16.msra.mxu0 %v1916
    %1939 = vmatprep.subr.bf16.mxu0 0
    %1940 = vmatpush1.bf16.msra.mxu0 %v1917
    %1941 = vmatprep.subr.bf16.mxu0 0
    %1942 = vmatpush1.bf16.msra.mxu0 %v1918
    %1943 = vmatprep.subr.bf16.mxu0 0
    %1944 = vmatpush1.bf16.msra.mxu0 0
    %1945 = vmatprep.subr.bf16.mxu0 0
    %1946 = vmatpush1.bf16.msra.mxu0 0
    %1947 = vmatprep.subr.bf16.mxu0 0
    %1948 = vmatpush1.bf16.msra.mxu0 0
    %1949 = vmatprep.subr.bf16.mxu0 0
    %1950 = vmatpush1.bf16.msra.mxu0 0
    %1951 = vmatprep.subr.bf16.mxu0 0
    %1952 = vmatpush1.bf16.msra.mxu0 0
    %1953 = vmatprep.subr.bf16.mxu0 0
    %1954 = vmatpush1.bf16.msra.mxu0 0
    %1955 = vmatprep.subr.bf16.mxu0 0
    %1956 = vmatpush1.bf16.msra.mxu0 0
    %1957 = vmatprep.subr.bf16.mxu0 0
    %1958 = vmatpush1.bf16.msra.mxu0 0
    %1959 = vmatprep.mubr.bf16.mxu0 0
    %1960 = vmatmul.mubr.bf16.gmra.mrb[0].mxu0 0
    %v1961 = vpop.f32.mrb[0].mxu0
    %v1962 = vadd.f32 %v1877, %v1961
    %v1963 = vpop.f32.mrb[0].mxu0
    %v1964 = vpop.f32.mrb[0].mxu0
    %v1965 = vpop.f32.mrb[0].mxu0
    %1966 = vdwg.mxu0
    %v1967 = vadd.f32 %v1818, %v1962
    %v1968 = vxor.u32 %v1967, 2147483648
    %v1969 = vmul.f32 %v1968, 1.442695
    %v1970 = vpow.pop %v1969
    %v1971 = vadd.f32 %v1970, 1.0
    %v1972 = vrcp.pop %v1971
    %v1973 = vmul.f32 1.0, %v1972
    %1974 = vrot.lane.b32.xlu0 %v1973, 64
    %v1975 = vpop.permute.xlu0 %1974
    %v1976 = vmul.f32 %v1975, %v1962
    %v1977 = vadd.f32 %v1818, %v1976
    %v1978 = vtanh.pop %v1977
    %1979 = vrot.lane.b32.xlu0 %v1973, 96
    %v1980 = vpop.permute.xlu0 %1979
    %1981 = vrot.lane.b32.xlu0 %v1978, 64
    %v1982 = vpop.permute.xlu0 %1981
    %v1983 = vsub.f32 1.0, %v1980
    %v1984 = vmul.f32 %v1983, %v1982
    %v1985 = vmul.f32 %v1980, 0.0
    %v1986 = vadd.f32 %v1984, %v1985
    %v1987 = vsel %vm488, %v1986, 0.0
    %v1988 = vpack.c.bf16 %v1987, %v1987
    %1989 = vmatprep.subr.bf16.mxu0 0
    %1990 = vmatpush1.bf16.msra.mxu0 %v1911
    %1991 = vmatprep.subr.bf16.mxu0 0
    %1992 = vmatpush1.bf16.msra.mxu0 %v1912
    %1993 = vmatprep.subr.bf16.mxu0 0
    %1994 = vmatpush1.bf16.msra.mxu0 %v1913
    %1995 = vmatprep.subr.bf16.mxu0 0
    %1996 = vmatpush1.bf16.msra.mxu0 %v1914
    %1997 = vmatprep.subr.bf16.mxu0 0
    %1998 = vmatpush1.bf16.msra.mxu0 %v1915
    %1999 = vmatprep.subr.bf16.mxu0 0
    %2000 = vmatpush1.bf16.msra.mxu0 %v1916
    %2001 = vmatprep.subr.bf16.mxu0 0
    %2002 = vmatpush1.bf16.msra.mxu0 %v1917
    %2003 = vmatprep.subr.bf16.mxu0 0
    %2004 = vmatpush1.bf16.msra.mxu0 %v1918
    %2005 = vmatprep.subr.bf16.mxu0 0
    %2006 = vmatpush1.bf16.msra.mxu0 0
    %2007 = vmatprep.subr.bf16.mxu0 0
    %2008 = vmatpush1.bf16.msra.mxu0 0
    %2009 = vmatprep.subr.bf16.mxu0 0
    %2010 = vmatpush1.bf16.msra.mxu0 0
    %2011 = vmatprep.subr.bf16.mxu0 0
    %2012 = vmatpush1.bf16.msra.mxu0 0
    %2013 = vmatprep.subr.bf16.mxu0 0
    %2014 = vmatpush1.bf16.msra.mxu0 0
    %2015 = vmatprep.subr.bf16.mxu0 0
    %2016 = vmatpush1.bf16.msra.mxu0 0
    %2017 = vmatprep.subr.bf16.mxu0 0
    %2018 = vmatpush1.bf16.msra.mxu0 0
    %2019 = vmatprep.subr.bf16.mxu0 0
    %2020 = vmatpush1.bf16.msra.mxu0 0
    %2021 = vmatprep.mubr.bf16.mxu0 0
    %2022 = vmatmul.mubr.bf16.gmra.mrb[0].mxu0 %v1988
    %v2023 = vpop.f32.mrb[0].mxu0
    %v2024 = vadd.f32 %v1877, %v2023
    %v2025 = vpop.f32.mrb[0].mxu0
    %v2026 = vpop.f32.mrb[0].mxu0
    %v2027 = vpop.f32.mrb[0].mxu0
    %2028 = vdwg.mxu0
    %v2029 = vadd.f32 %v1822, %v2024
    %v2030 = vxor.u32 %v2029, 2147483648
    %v2031 = vmul.f32 %v2030, 1.442695
    %v2032 = vpow.pop %v2031
    %v2033 = vadd.f32 %v2032, 1.0
    %v2034 = vrcp.pop %v2033
    %v2035 = vmul.f32 1.0, %v2034
    %2036 = vrot.lane.b32.xlu0 %v2035, 64
    %v2037 = vpop.permute.xlu0 %2036
    %v2038 = vmul.f32 %v2037, %v2024
    %v2039 = vadd.f32 %v1822, %v2038
    %v2040 = vtanh.pop %v2039
    %2041 = vrot.lane.b32.xlu0 %v2035, 96
    %v2042 = vpop.permute.xlu0 %2041
    %2043 = vrot.lane.b32.xlu0 %v2040, 64
    %v2044 = vpop.permute.xlu0 %2043
    %v2045 = vsub.f32 1.0, %v2042
    %v2046 = vmul.f32 %v2045, %v2044
    %v2047 = vmul.f32 %v2042, %v1987
    %v2048 = vadd.f32 %v2046, %v2047
    %v2049 = vsel %vm558, %v2048, %v1987
    %v2050 = vpack.c.bf16 %v2049, %v2049
    %2051 = vmatprep.subr.bf16.mxu0 0
    %2052 = vmatpush1.bf16.msra.mxu0 %v1911
    %2053 = vmatprep.subr.bf16.mxu0 0
    %2054 = vmatpush1.bf16.msra.mxu0 %v1912
    %2055 = vmatprep.subr.bf16.mxu0 0
    %2056 = vmatpush1.bf16.msra.mxu0 %v1913
    %2057 = vmatprep.subr.bf16.mxu0 0
    %2058 = vmatpush1.bf16.msra.mxu0 %v1914
    %2059 = vmatprep.subr.bf16.mxu0 0
    %2060 = vmatpush1.bf16.msra.mxu0 %v1915
    %2061 = vmatprep.subr.bf16.mxu0 0
    %2062 = vmatpush1.bf16.msra.mxu0 %v1916
    %2063 = vmatprep.subr.bf16.mxu0 0
    %2064 = vmatpush1.bf16.msra.mxu0 %v1917
    %2065 = vmatprep.subr.bf16.mxu0 0
    %2066 = vmatpush1.bf16.msra.mxu0 %v1918
    %2067 = vmatprep.subr.bf16.mxu0 0
    %2068 = vmatpush1.bf16.msra.mxu0 0
    %2069 = vmatprep.subr.bf16.mxu0 0
    %2070 = vmatpush1.bf16.msra.mxu0 0
    %2071 = vmatprep.subr.bf16.mxu0 0
    %2072 = vmatpush1.bf16.msra.mxu0 0
    %2073 = vmatprep.subr.bf16.mxu0 0
    %2074 = vmatpush1.bf16.msra.mxu0 0
    %2075 = vmatprep.subr.bf16.mxu0 0
    %2076 = vmatpush1.bf16.msra.mxu0 0
    %2077 = vmatprep.subr.bf16.mxu0 0
    %2078 = vmatpush1.bf16.msra.mxu0 0
    %2079 = vmatprep.subr.bf16.mxu0 0
    %2080 = vmatpush1.bf16.msra.mxu0 0
    %2081 = vmatprep.subr.bf16.mxu0 0
    %2082 = vmatpush1.bf16.msra.mxu0 0
    %2083 = vmatprep.mubr.bf16.mxu0 0
    %2084 = vmatmul.mubr.bf16.gmra.mrb[0].mxu0 %v2050
    %v2085 = vpop.f32.mrb[0].mxu0
    %v2086 = vadd.f32 %v1877, %v2085
    %v2087 = vpop.f32.mrb[0].mxu0
    %v2088 = vpop.f32.mrb[0].mxu0
    %v2089 = vpop.f32.mrb[0].mxu0
    %2090 = vdwg.mxu0
    %v2091 = vadd.f32 %v1828, %v2086
    %v2092 = vxor.u32 %v2091, 2147483648
    %v2093 = vmul.f32 %v2092, 1.442695
    %v2094 = vpow.pop %v2093
    %v2095 = vadd.f32 %v2094, 1.0
    %v2096 = vrcp.pop %v2095
    %v2097 = vmul.f32 1.0, %v2096
    %2098 = vrot.lane.b32.xlu0 %v2097, 64
    %v2099 = vpop.permute.xlu0 %2098
    %v2100 = vmul.f32 %v2099, %v2086
    %v2101 = vadd.f32 %v1828, %v2100
    %v2102 = vtanh.pop %v2101
    %2103 = vrot.lane.b32.xlu0 %v2097, 96
    %v2104 = vpop.permute.xlu0 %2103
    %2105 = vrot.lane.b32.xlu0 %v2102, 64
    %v2106 = vpop.permute.xlu0 %2105
    %v2107 = vsub.f32 1.0, %v2104
    %v2108 = vmul.f32 %v2107, %v2106
    %v2109 = vmul.f32 %v2104, %v2049
    %v2110 = vadd.f32 %v2108, %v2109
    %v2111 = vsel %vm628, %v2110, %v2049
    %v2112 = vpack.c.bf16 %v2111, %v2111
    %2113 = vmatprep.subr.bf16.mxu0 0
    %2114 = vmatpush1.bf16.msra.mxu0 %v1911
    %2115 = vmatprep.subr.bf16.mxu0 0
    %2116 = vmatpush1.bf16.msra.mxu0 %v1912
    %2117 = vmatprep.subr.bf16.mxu0 0
    %2118 = vmatpush1.bf16.msra.mxu0 %v1913
    %2119 = vmatprep.subr.bf16.mxu0 0
    %2120 = vmatpush1.bf16.msra.mxu0 %v1914
    %2121 = vmatprep.subr.bf16.mxu0 0
    %2122 = vmatpush1.bf16.msra.mxu0 %v1915
    %2123 = vmatprep.subr.bf16.mxu0 0
    %2124 = vmatpush1.bf16.msra.mxu0 %v1916
    %2125 = vmatprep.subr.bf16.mxu0 0
    %2126 = vmatpush1.bf16.msra.mxu0 %v1917
    %2127 = vmatprep.subr.bf16.mxu0 0
    %2128 = vmatpush1.bf16.msra.mxu0 %v1918
    %2129 = vmatprep.subr.bf16.mxu0 0
    %2130 = vmatpush1.bf16.msra.mxu0 0
    %2131 = vmatprep.subr.bf16.mxu0 0
    %2132 = vmatpush1.bf16.msra.mxu0 0
    %2133 = vmatprep.subr.bf16.mxu0 0
    %2134 = vmatpush1.bf16.msra.mxu0 0
    %2135 = vmatprep.subr.bf16.mxu0 0
    %2136 = vmatpush1.bf16.msra.mxu0 0
    %2137 = vmatprep.subr.bf16.mxu0 0
    %2138 = vmatpush1.bf16.msra.mxu0 0
    %2139 = vmatprep.subr.bf16.mxu0 0
    %2140 = vmatpush1.bf16.msra.mxu0 0
    %2141 = vmatprep.subr.bf16.mxu0 0
    %2142 = vmatpush1.bf16.msra.mxu0 0
    %2143 = vmatprep.subr.bf16.mxu0 0
    %2144 = vmatpush1.bf16.msra.mxu0 0
    %2145 = vmatprep.mubr.bf16.mxu0 0
    %2146 = vmatmul.mubr.bf16.gmra.mrb[0].mxu0 %v2112
    %v2147 = vpop.f32.mrb[0].mxu0
    %v2148 = vadd.f32 %v1877, %v2147
    %v2149 = vpop.f32.mrb[0].mxu0
    %v2150 = vpop.f32.mrb[0].mxu0
    %v2151 = vpop.f32.mrb[0].mxu0
    %2152 = vdwg.mxu0
    %v2153 = vadd.f32 %v1832, %v2148
    %v2154 = vxor.u32 %v2153, 2147483648
    %v2155 = vmul.f32 %v2154, 1.442695
    %v2156 = vpow.pop %v2155
    %v2157 = vadd.f32 %v2156, 1.0
    %v2158 = vrcp.pop %v2157
    %v2159 = vmul.f32 1.0, %v2158
    %2160 = vrot.lane.b32.xlu0 %v2159, 64
    %v2161 = vpop.permute.xlu0 %2160
    %v2162 = vmul.f32 %v2161, %v2148
    %v2163 = vadd.f32 %v1832, %v2162
    %v2164 = vtanh.pop %v2163
    %2165 = vrot.lane.b32.xlu0 %v2159, 96
    %v2166 = vpop.permute.xlu0 %2165
    %2167 = vrot.lane.b32.xlu0 %v2164, 64
    %v2168 = vpop.permute.xlu0 %2167
    %v2169 = vsub.f32 1.0, %v2166
    %v2170 = vmul.f32 %v2169, %v2168
    %v2171 = vmul.f32 %v2166, %v2111
    %v2172 = vadd.f32 %v2170, %v2171
    %v2173 = vsel %vm698, %v2172, %v2111
    %v2174 = vpack.c.bf16 %v2173, %v2173
    %2175 = vmatprep.subr.bf16.mxu0 0
    %2176 = vmatpush1.bf16.msra.mxu0 %v1911
    %2177 = vmatprep.subr.bf16.mxu0 0
    %2178 = vmatpush1.bf16.msra.mxu0 %v1912
    %2179 = vmatprep.subr.bf16.mxu0 0
    %2180 = vmatpush1.bf16.msra.mxu0 %v1913
    %2181 = vmatprep.subr.bf16.mxu0 0
    %2182 = vmatpush1.bf16.msra.mxu0 %v1914
    %2183 = vmatprep.subr.bf16.mxu0 0
    %2184 = vmatpush1.bf16.msra.mxu0 %v1915
    %2185 = vmatprep.subr.bf16.mxu0 0
    %2186 = vmatpush1.bf16.msra.mxu0 %v1916
    %2187 = vmatprep.subr.bf16.mxu0 0
    %2188 = vmatpush1.bf16.msra.mxu0 %v1917
    %2189 = vmatprep.subr.bf16.mxu0 0
    %2190 = vmatpush1.bf16.msra.mxu0 %v1918
    %2191 = vmatprep.subr.bf16.mxu0 0
    %2192 = vmatpush1.bf16.msra.mxu0 0
    %2193 = vmatprep.subr.bf16.mxu0 0
    %2194 = vmatpush1.bf16.msra.mxu0 0
    %2195 = vmatprep.subr.bf16.mxu0 0
    %2196 = vmatpush1.bf16.msra.mxu0 0
    %2197 = vmatprep.subr.bf16.mxu0 0
    %2198 = vmatpush1.bf16.msra.mxu0 0
    %2199 = vmatprep.subr.bf16.mxu0 0
    %2200 = vmatpush1.bf16.msra.mxu0 0
    %2201 = vmatprep.subr.bf16.mxu0 0
    %2202 = vmatpush1.bf16.msra.mxu0 0
    %2203 = vmatprep.subr.bf16.mxu0 0
    %2204 = vmatpush1.bf16.msra.mxu0 0
    %2205 = vmatprep.subr.bf16.mxu0 0
    %2206 = vmatpush1.bf16.msra.mxu0 0
    %2207 = vmatprep.mubr.bf16.mxu0 0
    %2208 = vmatmul.mubr.bf16.gmra.mrb[0].mxu0 %v2174
    %v2209 = vpop.f32.mrb[0].mxu0
    %v2210 = vadd.f32 %v1877, %v2209
    %v2211 = vpop.f32.mrb[0].mxu0
    %v2212 = vpop.f32.mrb[0].mxu0
    %v2213 = vpop.f32.mrb[0].mxu0
    %2214 = vdwg.mxu0
    %v2215 = vadd.f32 %v1838, %v2210
    %v2216 = vxor.u32 %v2215, 2147483648
    %v2217 = vmul.f32 %v2216, 1.442695
    %v2218 = vpow.pop %v2217
    %v2219 = vadd.f32 %v2218, 1.0
    %v2220 = vrcp.pop %v2219
    %v2221 = vmul.f32 1.0, %v2220
    %2222 = vrot.lane.b32.xlu0 %v2221, 64
    %v2223 = vpop.permute.xlu0 %2222
    %v2224 = vmul.f32 %v2223, %v2210
    %v2225 = vadd.f32 %v1838, %v2224
    %v2226 = vtanh.pop %v2225
    %2227 = vrot.lane.b32.xlu0 %v2221, 96
    %v2228 = vpop.permute.xlu0 %2227
    %2229 = vrot.lane.b32.xlu0 %v2226, 64
    %v2230 = vpop.permute.xlu0 %2229
    %v2231 = vsub.f32 1.0, %v2228
    %v2232 = vmul.f32 %v2231, %v2230
    %v2233 = vmul.f32 %v2228, %v2173
    %v2234 = vadd.f32 %v2232, %v2233
    %v2235 = vsel %vm768, %v2234, %v2173
    %v2236 = vpack.c.bf16 %v2235, %v2235
    %2237 = vmatprep.subr.bf16.mxu0 0
    %2238 = vmatpush1.bf16.msra.mxu0 %v1911
    %2239 = vmatprep.subr.bf16.mxu0 0
    %2240 = vmatpush1.bf16.msra.mxu0 %v1912
    %2241 = vmatprep.subr.bf16.mxu0 0
    %2242 = vmatpush1.bf16.msra.mxu0 %v1913
    %2243 = vmatprep.subr.bf16.mxu0 0
    %2244 = vmatpush1.bf16.msra.mxu0 %v1914
    %2245 = vmatprep.subr.bf16.mxu0 0
    %2246 = vmatpush1.bf16.msra.mxu0 %v1915
    %2247 = vmatprep.subr.bf16.mxu0 0
    %2248 = vmatpush1.bf16.msra.mxu0 %v1916
    %2249 = vmatprep.subr.bf16.mxu0 0
    %2250 = vmatpush1.bf16.msra.mxu0 %v1917
    %2251 = vmatprep.subr.bf16.mxu0 0
    %2252 = vmatpush1.bf16.msra.mxu0 %v1918
    %2253 = vmatprep.subr.bf16.mxu0 0
    %2254 = vmatpush1.bf16.msra.mxu0 0
    %2255 = vmatprep.subr.bf16.mxu0 0
    %2256 = vmatpush1.bf16.msra.mxu0 0
    %2257 = vmatprep.subr.bf16.mxu0 0
    %2258 = vmatpush1.bf16.msra.mxu0 0
    %2259 = vmatprep.subr.bf16.mxu0 0
    %2260 = vmatpush1.bf16.msra.mxu0 0
    %2261 = vmatprep.subr.bf16.mxu0 0
    %2262 = vmatpush1.bf16.msra.mxu0 0
    %2263 = vmatprep.subr.bf16.mxu0 0
    %2264 = vmatpush1.bf16.msra.mxu0 0
    %2265 = vmatprep.subr.bf16.mxu0 0
    %2266 = vmatpush1.bf16.msra.mxu0 0
    %2267 = vmatprep.subr.bf16.mxu0 0
    %2268 = vmatpush1.bf16.msra.mxu0 0
    %2269 = vmatprep.mubr.bf16.mxu0 0
    %2270 = vmatmul.mubr.bf16.gmra.mrb[0].mxu0 %v2236
    %v2271 = vpop.f32.mrb[0].mxu0
    %v2272 = vadd.f32 %v1877, %v2271
    %v2273 = vpop.f32.mrb[0].mxu0
    %v2274 = vpop.f32.mrb[0].mxu0
    %v2275 = vpop.f32.mrb[0].mxu0
    %2276 = vdwg.mxu0
    %v2277 = vadd.f32 %v1842, %v2272
    %v2278 = vxor.u32 %v2277, 2147483648
    %v2279 = vmul.f32 %v2278, 1.442695
    %v2280 = vpow.pop %v2279
    %v2281 = vadd.f32 %v2280, 1.0
    %v2282 = vrcp.pop %v2281
    %v2283 = vmul.f32 1.0, %v2282
    %2284 = vrot.lane.b32.xlu0 %v2283, 64
    %v2285 = vpop.permute.xlu0 %2284
    %v2286 = vmul.f32 %v2285, %v2272
    %v2287 = vadd.f32 %v1842, %v2286
    %v2288 = vtanh.pop %v2287
    %2289 = vrot.lane.b32.xlu0 %v2283, 96
    %v2290 = vpop.permute.xlu0 %2289
    %2291 = vrot.lane.b32.xlu0 %v2288, 64
    %v2292 = vpop.permute.xlu0 %2291
    %v2293 = vsub.f32 1.0, %v2290
    %v2294 = vmul.f32 %v2293, %v2292
    %v2295 = vmul.f32 %v2290, %v2235
    %v2296 = vadd.f32 %v2294, %v2295
    %v2297 = vsel %vm838, %v2296, %v2235
    %v2298 = vpack.c.bf16 %v2297, %v2297
    %2299 = vmatprep.subr.bf16.mxu0 0
    %2300 = vmatpush1.bf16.msra.mxu0 %v1911
    %2301 = vmatprep.subr.bf16.mxu0 0
    %2302 = vmatpush1.bf16.msra.mxu0 %v1912
    %2303 = vmatprep.subr.bf16.mxu0 0
    %2304 = vmatpush1.bf16.msra.mxu0 %v1913
    %2305 = vmatprep.subr.bf16.mxu0 0
    %2306 = vmatpush1.bf16.msra.mxu0 %v1914
    %2307 = vmatprep.subr.bf16.mxu0 0
    %2308 = vmatpush1.bf16.msra.mxu0 %v1915
    %2309 = vmatprep.subr.bf16.mxu0 0
    %2310 = vmatpush1.bf16.msra.mxu0 %v1916
    %2311 = vmatprep.subr.bf16.mxu0 0
    %2312 = vmatpush1.bf16.msra.mxu0 %v1917
    %2313 = vmatprep.subr.bf16.mxu0 0
    %2314 = vmatpush1.bf16.msra.mxu0 %v1918
    %2315 = vmatprep.subr.bf16.mxu0 0
    %2316 = vmatpush1.bf16.msra.mxu0 0
    %2317 = vmatprep.subr.bf16.mxu0 0
    %2318 = vmatpush1.bf16.msra.mxu0 0
    %2319 = vmatprep.subr.bf16.mxu0 0
    %2320 = vmatpush1.bf16.msra.mxu0 0
    %2321 = vmatprep.subr.bf16.mxu0 0
    %2322 = vmatpush1.bf16.msra.mxu0 0
    %2323 = vmatprep.subr.bf16.mxu0 0
    %2324 = vmatpush1.bf16.msra.mxu0 0
    %2325 = vmatprep.subr.bf16.mxu0 0
    %2326 = vmatpush1.bf16.msra.mxu0 0
    %2327 = vmatprep.subr.bf16.mxu0 0
    %2328 = vmatpush1.bf16.msra.mxu0 0
    %2329 = vmatprep.subr.bf16.mxu0 0
    %2330 = vmatpush1.bf16.msra.mxu0 0
    %2331 = vmatprep.mubr.bf16.mxu0 0
    %2332 = vmatmul.mubr.bf16.gmra.mrb[0].mxu0 %v2298
    %v2333 = vpop.f32.mrb[0].mxu0
    %v2334 = vadd.f32 %v1877, %v2333
    %v2335 = vpop.f32.mrb[0].mxu0
    %v2336 = vpop.f32.mrb[0].mxu0
    %v2337 = vpop.f32.mrb[0].mxu0
    %2338 = vdwg.mxu0
    %v2339 = vadd.f32 %v1848, %v2334
    %v2340 = vxor.u32 %v2339, 2147483648
    %v2341 = vmul.f32 %v2340, 1.442695
    %v2342 = vpow.pop %v2341
    %v2343 = vadd.f32 %v2342, 1.0
    %v2344 = vrcp.pop %v2343
    %v2345 = vmul.f32 1.0, %v2344
    %2346 = vrot.lane.b32.xlu0 %v2345, 64
    %v2347 = vpop.permute.xlu0 %2346
    %v2348 = vmul.f32 %v2347, %v2334
    %v2349 = vadd.f32 %v1848, %v2348
    %v2350 = vtanh.pop %v2349
    %2351 = vrot.lane.b32.xlu0 %v2345, 96
    %v2352 = vpop.permute.xlu0 %2351
    %2353 = vrot.lane.b32.xlu0 %v2350, 64
    %v2354 = vpop.permute.xlu0 %2353
    %v2355 = vsub.f32 1.0, %v2352
    %v2356 = vmul.f32 %v2355, %v2354
    %v2357 = vmul.f32 %v2352, %v2297
    %v2358 = vadd.f32 %v2356, %v2357
    %v2359 = vsel %vm908, %v2358, %v2297
    %v2360 = vpack.c.bf16 %v2359, %v2359
    %2361 = vmatprep.subr.bf16.mxu0 0
    %2362 = vmatpush1.bf16.msra.mxu0 %v1911
    %2363 = vmatprep.subr.bf16.mxu0 0
    %2364 = vmatpush1.bf16.msra.mxu0 %v1912
    %2365 = vmatprep.subr.bf16.mxu0 0
    %2366 = vmatpush1.bf16.msra.mxu0 %v1913
    %2367 = vmatprep.subr.bf16.mxu0 0
    %2368 = vmatpush1.bf16.msra.mxu0 %v1914
    %2369 = vmatprep.subr.bf16.mxu0 0
    %2370 = vmatpush1.bf16.msra.mxu0 %v1915
    %2371 = vmatprep.subr.bf16.mxu0 0
    %2372 = vmatpush1.bf16.msra.mxu0 %v1916
    %2373 = vmatprep.subr.bf16.mxu0 0
    %2374 = vmatpush1.bf16.msra.mxu0 %v1917
    %2375 = vmatprep.subr.bf16.mxu0 0
    %2376 = vmatpush1.bf16.msra.mxu0 %v1918
    %2377 = vmatprep.subr.bf16.mxu0 0
    %2378 = vmatpush1.bf16.msra.mxu0 0
    %2379 = vmatprep.subr.bf16.mxu0 0
    %2380 = vmatpush1.bf16.msra.mxu0 0
    %2381 = vmatprep.subr.bf16.mxu0 0
    %2382 = vmatpush1.bf16.msra.mxu0 0
    %2383 = vmatprep.subr.bf16.mxu0 0
    %2384 = vmatpush1.bf16.msra.mxu0 0
    %2385 = vmatprep.subr.bf16.mxu0 0
    %2386 = vmatpush1.bf16.msra.mxu0 0
    %2387 = vmatprep.subr.bf16.mxu0 0
    %2388 = vmatpush1.bf16.msra.mxu0 0
    %2389 = vmatprep.subr.bf16.mxu0 0
    %2390 = vmatpush1.bf16.msra.mxu0 0
    %2391 = vmatprep.subr.bf16.mxu0 0
    %2392 = vmatpush1.bf16.msra.mxu0 0
    %2393 = vmatprep.mubr.bf16.mxu0 0
    %2394 = vmatmul.mubr.bf16.gmra.mrb[0].mxu0 %v2360
    %v2395 = vpop.f32.mrb[0].mxu0
    %v2396 = vadd.f32 %v1877, %v2395
    %v2397 = vpop.f32.mrb[0].mxu0
    %v2398 = vpop.f32.mrb[0].mxu0
    %v2399 = vpop.f32.mrb[0].mxu0
    %2400 = vdwg.mxu0
    %v2401 = vadd.f32 %v1852, %v2396
    %v2402 = vxor.u32 %v2401, 2147483648
    %v2403 = vmul.f32 %v2402, 1.442695
    %v2404 = vpow.pop %v2403
    %v2405 = vadd.f32 %v2404, 1.0
    %v2406 = vrcp.pop %v2405
    %v2407 = vmul.f32 1.0, %v2406
    %2408 = vrot.lane.b32.xlu0 %v2407, 64
    %v2409 = vpop.permute.xlu0 %2408
    %v2410 = vmul.f32 %v2409, %v2396
    %v2411 = vadd.f32 %v1852, %v2410
    %v2412 = vtanh.pop %v2411
    %2413 = vrot.lane.b32.xlu0 %v2407, 96
    %v2414 = vpop.permute.xlu0 %2413
    %2415 = vrot.lane.b32.xlu0 %v2412, 64
    %v2416 = vpop.permute.xlu0 %2415
    %v2417 = vsub.f32 1.0, %v2414
    %v2418 = vmul.f32 %v2417, %v2416
    %v2419 = vmul.f32 %v2414, %v2359
    %v2420 = vadd.f32 %v2418, %v2419
    %v2421 = vsel %vm978, %v2420, %v2359
    %v2422 = vld [vmem:[#allocation8] sm:$0xf]
    %v2423 = vld [vmem:[#allocation8 + $0x4] sm:$0xf]
    %v2424 = vld [vmem:[#allocation8 + $0x8] sm:$0xf]
    %v2425 = vld [vmem:[#allocation8 + $0xc] sm:$0xf]
    %v2426 = vld [vmem:[#allocation8 + $0x10] sm:$0xf]
    %v2427 = vld [vmem:[#allocation8 + $0x14] sm:$0xf]
    %v2428 = vld [vmem:[#allocation8 + $0x18] sm:$0xf]
    %v2429 = vld [vmem:[#allocation8 + $0x1c] sm:$0xf]
    %v2430 = vld [vmem:[#allocation8 + $0x20] sm:$0xf]
    %v2431 = vld [vmem:[#allocation8 + $0x24] sm:$0xf]
    %v2432 = vld [vmem:[#allocation8 + $0x28] sm:$0xf]
    %v2433 = vld [vmem:[#allocation8 + $0x2c] sm:$0xf]
    %v2434 = vld [vmem:[#allocation8 + $0x30] sm:$0xf]
    %v2435 = vld [vmem:[#allocation8 + $0x34] sm:$0xf]
    %v2436 = vld [vmem:[#allocation8 + $0x38] sm:$0xf]
    %v2437 = vld [vmem:[#allocation8 + $0x3c] sm:$0xf]
    %v2438 = vld [vmem:[%s13] sm:$0x1]
    %v2440 = vlaneseq
    %v2441 = vshrl.u32 %v2440, 7
    %v2442 = vsub.s32 0, %v2441
    %v2443 = vrot.slane %v2438, %v2442
    %v2461 = vunpack.c.l.b16 %v2422
    %v2462 = vunpack.c.l.b16 %v2423
    %v2463 = vunpack.c.l.b16 %v2424
    %v2464 = vunpack.c.l.b16 %v2425
    %v2465 = vunpack.c.l.b16 %v2426
    %v2466 = vunpack.c.l.b16 %v2427
    %v2467 = vunpack.c.l.b16 %v2428
    %v2468 = vunpack.c.l.b16 %v2429
    %v2469 = vunpack.c.l.b16 %v2430
    %v2470 = vunpack.c.l.b16 %v2431
    %v2471 = vunpack.c.l.b16 %v2432
    %v2472 = vunpack.c.l.b16 %v2433
    %v2473 = vunpack.c.l.b16 %v2434
    %v2474 = vunpack.c.l.b16 %v2435
    %v2475 = vunpack.c.l.b16 %v2436
    %v2476 = vunpack.c.l.b16 %v2437
    %v2477 = vpack.c.b16 %v2462, %v2461
    %v2478 = vpack.c.b16 %v2464, %v2463
    %v2479 = vpack.c.b16 %v2466, %v2465
    %v2480 = vpack.c.b16 %v2468, %v2467
    %v2481 = vpack.c.b16 %v2470, %v2469
    %v2482 = vpack.c.b16 %v2472, %v2471
    %v2483 = vpack.c.b16 %v2474, %v2473
    %v2484 = vpack.c.b16 %v2476, %v2475
    %2493 = vmatprep.subr.bf16.mxu0 0
    %2494 = vmatpush1.bf16.msra.mxu0 %v2477
    %2495 = vmatprep.subr.bf16.mxu0 0
    %2496 = vmatpush1.bf16.msra.mxu0 %v2478
    %2497 = vmatprep.subr.bf16.mxu0 0
    %2498 = vmatpush1.bf16.msra.mxu0 %v2479
    %2499 = vmatprep.subr.bf16.mxu0 0
    %2500 = vmatpush1.bf16.msra.mxu0 %v2480
    %2501 = vmatprep.subr.bf16.mxu0 0
    %2502 = vmatpush1.bf16.msra.mxu0 %v2481
    %2503 = vmatprep.subr.bf16.mxu0 0
    %2504 = vmatpush1.bf16.msra.mxu0 %v2482
    %2505 = vmatprep.subr.bf16.mxu0 0
    %2506 = vmatpush1.bf16.msra.mxu0 %v2483
    %2507 = vmatprep.subr.bf16.mxu0 0
    %2508 = vmatpush1.bf16.msra.mxu0 %v2484
    %2509 = vmatprep.subr.bf16.mxu0 0
    %2510 = vmatpush1.bf16.msra.mxu0 0
    %2511 = vmatprep.subr.bf16.mxu0 0
    %2512 = vmatpush1.bf16.msra.mxu0 0
    %2513 = vmatprep.subr.bf16.mxu0 0
    %2514 = vmatpush1.bf16.msra.mxu0 0
    %2515 = vmatprep.subr.bf16.mxu0 0
    %2516 = vmatpush1.bf16.msra.mxu0 0
    %2517 = vmatprep.subr.bf16.mxu0 0
    %2518 = vmatpush1.bf16.msra.mxu0 0
    %2519 = vmatprep.subr.bf16.mxu0 0
    %2520 = vmatpush1.bf16.msra.mxu0 0
    %2521 = vmatprep.subr.bf16.mxu0 0
    %2522 = vmatpush1.bf16.msra.mxu0 0
    %2523 = vmatprep.subr.bf16.mxu0 0
    %2524 = vmatpush1.bf16.msra.mxu0 0
    %2525 = vmatprep.mubr.bf16.mxu0 0
    %2526 = vmatmul.mubr.bf16.gmra.mrb[0].mxu0 0
    %v2527 = vpop.f32.mrb[0].mxu0
    %v2528 = vadd.f32 %v2443, %v2527
    %v2529 = vpop.f32.mrb[0].mxu0
    %v2530 = vpop.f32.mrb[0].mxu0
    %v2531 = vpop.f32.mrb[0].mxu0
    %2532 = vdwg.mxu0
    %v2533 = vadd.f32 %v1854, %v2528
    %v2534 = vxor.u32 %v2533, 2147483648
    %v2535 = vmul.f32 %v2534, 1.442695
    %v2536 = vpow.pop %v2535
    %v2537 = vadd.f32 %v2536, 1.0
    %v2538 = vrcp.pop %v2537
    %v2539 = vmul.f32 1.0, %v2538
    %2540 = vrot.lane.b32.xlu0 %v2539, 64
    %v2541 = vpop.permute.xlu0 %2540
    %v2542 = vmul.f32 %v2541, %v2528
    %v2543 = vadd.f32 %v1854, %v2542
    %v2544 = vtanh.pop %v2543
    %2545 = vrot.lane.b32.xlu0 %v2539, 96
    %v2546 = vpop.permute.xlu0 %2545
    %2547 = vrot.lane.b32.xlu0 %v2544, 64
    %v2548 = vpop.permute.xlu0 %2547
    %v2549 = vsub.f32 1.0, %v2546
    %v2550 = vmul.f32 %v2549, %v2548
    %v2551 = vmul.f32 %v2546, 0.0
    %v2552 = vadd.f32 %v2550, %v2551
    %v2553 = vsel %vm978, %v2552, 0.0
    %v2554 = vpack.c.bf16 %v2553, %v2553
    %2555 = vmatprep.subr.bf16.mxu0 0
    %2556 = vmatpush1.bf16.msra.mxu0 %v2477
    %2557 = vmatprep.subr.bf16.mxu0 0
    %2558 = vmatpush1.bf16.msra.mxu0 %v2478
    %2559 = vmatprep.subr.bf16.mxu0 0
    %2560 = vmatpush1.bf16.msra.mxu0 %v2479
    %2561 = vmatprep.subr.bf16.mxu0 0
    %2562 = vmatpush1.bf16.msra.mxu0 %v2480
    %2563 = vmatprep.subr.bf16.mxu0 0
    %2564 = vmatpush1.bf16.msra.mxu0 %v2481
    %2565 = vmatprep.subr.bf16.mxu0 0
    %2566 = vmatpush1.bf16.msra.mxu0 %v2482
    %2567 = vmatprep.subr.bf16.mxu0 0
    %2568 = vmatpush1.bf16.msra.mxu0 %v2483
    %2569 = vmatprep.subr.bf16.mxu0 0
    %2570 = vmatpush1.bf16.msra.mxu0 %v2484
    %2571 = vmatprep.subr.bf16.mxu0 0
    %2572 = vmatpush1.bf16.msra.mxu0 0
    %2573 = vmatprep.subr.bf16.mxu0 0
    %2574 = vmatpush1.bf16.msra.mxu0 0
    %2575 = vmatprep.subr.bf16.mxu0 0
    %2576 = vmatpush1.bf16.msra.mxu0 0
    %2577 = vmatprep.subr.bf16.mxu0 0
    %2578 = vmatpush1.bf16.msra.mxu0 0
    %2579 = vmatprep.subr.bf16.mxu0 0
    %2580 = vmatpush1.bf16.msra.mxu0 0
    %2581 = vmatprep.subr.bf16.mxu0 0
    %2582 = vmatpush1.bf16.msra.mxu0 0
    %2583 = vmatprep.subr.bf16.mxu0 0
    %2584 = vmatpush1.bf16.msra.mxu0 0
    %2585 = vmatprep.subr.bf16.mxu0 0
    %2586 = vmatpush1.bf16.msra.mxu0 0
    %2587 = vmatprep.mubr.bf16.mxu0 0
    %2588 = vmatmul.mubr.bf16.gmra.mrb[0].mxu0 %v2554
    %v2589 = vpop.f32.mrb[0].mxu0
    %v2590 = vadd.f32 %v2443, %v2589
    %v2591 = vpop.f32.mrb[0].mxu0
    %v2592 = vpop.f32.mrb[0].mxu0
    %v2593 = vpop.f32.mrb[0].mxu0
    %2594 = vdwg.mxu0
    %v2595 = vadd.f32 %v1850, %v2590
    %v2596 = vxor.u32 %v2595, 2147483648
    %v2597 = vmul.f32 %v2596, 1.442695
    %v2598 = vpow.pop %v2597
    %v2599 = vadd.f32 %v2598, 1.0
    %v2600 = vrcp.pop %v2599
    %v2601 = vmul.f32 1.0, %v2600
    %2602 = vrot.lane.b32.xlu0 %v2601, 64
    %v2603 = vpop.permute.xlu0 %2602
    %v2604 = vmul.f32 %v2603, %v2590
    %v2605 = vadd.f32 %v1850, %v2604
    %v2606 = vtanh.pop %v2605
    %2607 = vrot.lane.b32.xlu0 %v2601, 96
    %v2608 = vpop.permute.xlu0 %2607
    %2609 = vrot.lane.b32.xlu0 %v2606, 64
    %v2610 = vpop.permute.xlu0 %2609
    %v2611 = vsub.f32 1.0, %v2608
    %v2612 = vmul.f32 %v2611, %v2610
    %v2613 = vmul.f32 %v2608, %v2553
    %v2614 = vadd.f32 %v2612, %v2613
    %v2615 = vsel %vm908, %v2614, %v2553
    %v2616 = vpack.c.bf16 %v2615, %v2615
    %2617 = vmatprep.subr.bf16.mxu0 0
    %2618 = vmatpush1.bf16.msra.mxu0 %v2477
    %2619 = vmatprep.subr.bf16.mxu0 0
    %2620 = vmatpush1.bf16.msra.mxu0 %v2478
    %2621 = vmatprep.subr.bf16.mxu0 0
    %2622 = vmatpush1.bf16.msra.mxu0 %v2479
    %2623 = vmatprep.subr.bf16.mxu0 0
    %2624 = vmatpush1.bf16.msra.mxu0 %v2480
    %2625 = vmatprep.subr.bf16.mxu0 0
    %2626 = vmatpush1.bf16.msra.mxu0 %v2481
    %2627 = vmatprep.subr.bf16.mxu0 0
    %2628 = vmatpush1.bf16.msra.mxu0 %v2482
    %2629 = vmatprep.subr.bf16.mxu0 0
    %2630 = vmatpush1.bf16.msra.mxu0 %v2483
    %2631 = vmatprep.subr.bf16.mxu0 0
    %2632 = vmatpush1.bf16.msra.mxu0 %v2484
    %2633 = vmatprep.subr.bf16.mxu0 0
    %2634 = vmatpush1.bf16.msra.mxu0 0
    %2635 = vmatprep.subr.bf16.mxu0 0
    %2636 = vmatpush1.bf16.msra.mxu0 0
    %2637 = vmatprep.subr.bf16.mxu0 0
    %2638 = vmatpush1.bf16.msra.mxu0 0
    %2639 = vmatprep.subr.bf16.mxu0 0
    %2640 = vmatpush1.bf16.msra.mxu0 0
    %2641 = vmatprep.subr.bf16.mxu0 0
    %2642 = vmatpush1.bf16.msra.mxu0 0
    %2643 = vmatprep.subr.bf16.mxu0 0
    %2644 = vmatpush1.bf16.msra.mxu0 0
    %2645 = vmatprep.subr.bf16.mxu0 0
    %2646 = vmatpush1.bf16.msra.mxu0 0
    %2647 = vmatprep.subr.bf16.mxu0 0
    %2648 = vmatpush1.bf16.msra.mxu0 0
    %2649 = vmatprep.mubr.bf16.mxu0 0
    %2650 = vmatmul.mubr.bf16.gmra.mrb[0].mxu0 %v2616
    %v2651 = vpop.f32.mrb[0].mxu0
    %v2652 = vadd.f32 %v2443, %v2651
    %v2653 = vpop.f32.mrb[0].mxu0
    %v2654 = vpop.f32.mrb[0].mxu0
    %v2655 = vpop.f32.mrb[0].mxu0
    %2656 = vdwg.mxu0
    %v2657 = vadd.f32 %v1844, %v2652
    %v2658 = vxor.u32 %v2657, 2147483648
    %v2659 = vmul.f32 %v2658, 1.442695
    %v2660 = vpow.pop %v2659
    %v2661 = vadd.f32 %v2660, 1.0
    %v2662 = vrcp.pop %v2661
    %v2663 = vmul.f32 1.0, %v2662
    %2664 = vrot.lane.b32.xlu0 %v2663, 64
    %v2665 = vpop.permute.xlu0 %2664
    %v2666 = vmul.f32 %v2665, %v2652
    %v2667 = vadd.f32 %v1844, %v2666
    %v2668 = vtanh.pop %v2667
    %2669 = vrot.lane.b32.xlu0 %v2663, 96
    %v2670 = vpop.permute.xlu0 %2669
    %2671 = vrot.lane.b32.xlu0 %v2668, 64
    %v2672 = vpop.permute.xlu0 %2671
    %v2673 = vsub.f32 1.0, %v2670
    %v2674 = vmul.f32 %v2673, %v2672
    %v2675 = vmul.f32 %v2670, %v2615
    %v2676 = vadd.f32 %v2674, %v2675
    %v2677 = vsel %vm838, %v2676, %v2615
    %v2678 = vpack.c.bf16 %v2677, %v2677
    %2679 = vmatprep.subr.bf16.mxu0 0
    %2680 = vmatpush1.bf16.msra.mxu0 %v2477
    %2681 = vmatprep.subr.bf16.mxu0 0
    %2682 = vmatpush1.bf16.msra.mxu0 %v2478
    %2683 = vmatprep.subr.bf16.mxu0 0
    %2684 = vmatpush1.bf16.msra.mxu0 %v2479
    %2685 = vmatprep.subr.bf16.mxu0 0
    %2686 = vmatpush1.bf16.msra.mxu0 %v2480
    %2687 = vmatprep.subr.bf16.mxu0 0
    %2688 = vmatpush1.bf16.msra.mxu0 %v2481
    %2689 = vmatprep.subr.bf16.mxu0 0
    %2690 = vmatpush1.bf16.msra.mxu0 %v2482
    %2691 = vmatprep.subr.bf16.mxu0 0
    %2692 = vmatpush1.bf16.msra.mxu0 %v2483
    %2693 = vmatprep.subr.bf16.mxu0 0
    %2694 = vmatpush1.bf16.msra.mxu0 %v2484
    %2695 = vmatprep.subr.bf16.mxu0 0
    %2696 = vmatpush1.bf16.msra.mxu0 0
    %2697 = vmatprep.subr.bf16.mxu0 0
    %2698 = vmatpush1.bf16.msra.mxu0 0
    %2699 = vmatprep.subr.bf16.mxu0 0
    %2700 = vmatpush1.bf16.msra.mxu0 0
    %2701 = vmatprep.subr.bf16.mxu0 0
    %2702 = vmatpush1.bf16.msra.mxu0 0
    %2703 = vmatprep.subr.bf16.mxu0 0
    %2704 = vmatpush1.bf16.msra.mxu0 0
    %2705 = vmatprep.subr.bf16.mxu0 0
    %2706 = vmatpush1.bf16.msra.mxu0 0
    %2707 = vmatprep.subr.bf16.mxu0 0
    %2708 = vmatpush1.bf16.msra.mxu0 0
    %2709 = vmatprep.subr.bf16.mxu0 0
    %2710 = vmatpush1.bf16.msra.mxu0 0
    %2711 = vmatprep.mubr.bf16.mxu0 0
    %2712 = vmatmul.mubr.bf16.gmra.mrb[0].mxu0 %v2678
    %v2713 = vpop.f32.mrb[0].mxu0
    %v2714 = vadd.f32 %v2443, %v2713
    %v2715 = vpop.f32.mrb[0].mxu0
    %v2716 = vpop.f32.mrb[0].mxu0
    %v2717 = vpop.f32.mrb[0].mxu0
    %2718 = vdwg.mxu0
    %v2719 = vadd.f32 %v1840, %v2714
    %v2720 = vxor.u32 %v2719, 2147483648
    %v2721 = vmul.f32 %v2720, 1.442695
    %v2722 = vpow.pop %v2721
    %v2723 = vadd.f32 %v2722, 1.0
    %v2724 = vrcp.pop %v2723
    %v2725 = vmul.f32 1.0, %v2724
    %2726 = vrot.lane.b32.xlu0 %v2725, 64
    %v2727 = vpop.permute.xlu0 %2726
    %v2728 = vmul.f32 %v2727, %v2714
    %v2729 = vadd.f32 %v1840, %v2728
    %v2730 = vtanh.pop %v2729
    %2731 = vrot.lane.b32.xlu0 %v2725, 96
    %v2732 = vpop.permute.xlu0 %2731
    %2733 = vrot.lane.b32.xlu0 %v2730, 64
    %v2734 = vpop.permute.xlu0 %2733
    %v2735 = vsub.f32 1.0, %v2732
    %v2736 = vmul.f32 %v2735, %v2734
    %v2737 = vmul.f32 %v2732, %v2677
    %v2738 = vadd.f32 %v2736, %v2737
    %v2739 = vsel %vm768, %v2738, %v2677
    %v2740 = vpack.c.bf16 %v2739, %v2739
    %2741 = vmatprep.subr.bf16.mxu0 0
    %2742 = vmatpush1.bf16.msra.mxu0 %v2477
    %2743 = vmatprep.subr.bf16.mxu0 0
    %2744 = vmatpush1.bf16.msra.mxu0 %v2478
    %2745 = vmatprep.subr.bf16.mxu0 0
    %2746 = vmatpush1.bf16.msra.mxu0 %v2479
    %2747 = vmatprep.subr.bf16.mxu0 0
    %2748 = vmatpush1.bf16.msra.mxu0 %v2480
    %2749 = vmatprep.subr.bf16.mxu0 0
    %2750 = vmatpush1.bf16.msra.mxu0 %v2481
    %2751 = vmatprep.subr.bf16.mxu0 0
    %2752 = vmatpush1.bf16.msra.mxu0 %v2482
    %2753 = vmatprep.subr.bf16.mxu0 0
    %2754 = vmatpush1.bf16.msra.mxu0 %v2483
    %2755 = vmatprep.subr.bf16.mxu0 0
    %2756 = vmatpush1.bf16.msra.mxu0 %v2484
    %2757 = vmatprep.subr.bf16.mxu0 0
    %2758 = vmatpush1.bf16.msra.mxu0 0
    %2759 = vmatprep.subr.bf16.mxu0 0
    %2760 = vmatpush1.bf16.msra.mxu0 0
    %2761 = vmatprep.subr.bf16.mxu0 0
    %2762 = vmatpush1.bf16.msra.mxu0 0
    %2763 = vmatprep.subr.bf16.mxu0 0
    %2764 = vmatpush1.bf16.msra.mxu0 0
    %2765 = vmatprep.subr.bf16.mxu0 0
    %2766 = vmatpush1.bf16.msra.mxu0 0
    %2767 = vmatprep.subr.bf16.mxu0 0
    %2768 = vmatpush1.bf16.msra.mxu0 0
    %2769 = vmatprep.subr.bf16.mxu0 0
    %2770 = vmatpush1.bf16.msra.mxu0 0
    %2771 = vmatprep.subr.bf16.mxu0 0
    %2772 = vmatpush1.bf16.msra.mxu0 0
    %2773 = vmatprep.mubr.bf16.mxu0 0
    %2774 = vmatmul.mubr.bf16.gmra.mrb[0].mxu0 %v2740
    %v2775 = vpop.f32.mrb[0].mxu0
    %v2776 = vadd.f32 %v2443, %v2775
    %v2777 = vpop.f32.mrb[0].mxu0
    %v2778 = vpop.f32.mrb[0].mxu0
    %v2779 = vpop.f32.mrb[0].mxu0
    %2780 = vdwg.mxu0
    %v2781 = vadd.f32 %v1834, %v2776
    %v2782 = vxor.u32 %v2781, 2147483648
    %v2783 = vmul.f32 %v2782, 1.442695
    %v2784 = vpow.pop %v2783
    %v2785 = vadd.f32 %v2784, 1.0
    %v2786 = vrcp.pop %v2785
    %v2787 = vmul.f32 1.0, %v2786
    %2788 = vrot.lane.b32.xlu0 %v2787, 64
    %v2789 = vpop.permute.xlu0 %2788
    %v2790 = vmul.f32 %v2789, %v2776
    %v2791 = vadd.f32 %v1834, %v2790
    %v2792 = vtanh.pop %v2791
    %2793 = vrot.lane.b32.xlu0 %v2787, 96
    %v2794 = vpop.permute.xlu0 %2793
    %2795 = vrot.lane.b32.xlu0 %v2792, 64
    %v2796 = vpop.permute.xlu0 %2795
    %v2797 = vsub.f32 1.0, %v2794
    %v2798 = vmul.f32 %v2797, %v2796
    %v2799 = vmul.f32 %v2794, %v2739
    %v2800 = vadd.f32 %v2798, %v2799
    %v2801 = vsel %vm698, %v2800, %v2739
    %v2802 = vpack.c.bf16 %v2801, %v2801
    %2803 = vmatprep.subr.bf16.mxu0 0
    %2804 = vmatpush1.bf16.msra.mxu0 %v2477
    %2805 = vmatprep.subr.bf16.mxu0 0
    %2806 = vmatpush1.bf16.msra.mxu0 %v2478
    %2807 = vmatprep.subr.bf16.mxu0 0
    %2808 = vmatpush1.bf16.msra.mxu0 %v2479
    %2809 = vmatprep.subr.bf16.mxu0 0
    %2810 = vmatpush1.bf16.msra.mxu0 %v2480
    %2811 = vmatprep.subr.bf16.mxu0 0
    %2812 = vmatpush1.bf16.msra.mxu0 %v2481
    %2813 = vmatprep.subr.bf16.mxu0 0
    %2814 = vmatpush1.bf16.msra.mxu0 %v2482
    %2815 = vmatprep.subr.bf16.mxu0 0
    %2816 = vmatpush1.bf16.msra.mxu0 %v2483
    %2817 = vmatprep.subr.bf16.mxu0 0
    %2818 = vmatpush1.bf16.msra.mxu0 %v2484
    %2819 = vmatprep.subr.bf16.mxu0 0
    %2820 = vmatpush1.bf16.msra.mxu0 0
    %2821 = vmatprep.subr.bf16.mxu0 0
    %2822 = vmatpush1.bf16.msra.mxu0 0
    %2823 = vmatprep.subr.bf16.mxu0 0
    %2824 = vmatpush1.bf16.msra.mxu0 0
    %2825 = vmatprep.subr.bf16.mxu0 0
    %2826 = vmatpush1.bf16.msra.mxu0 0
    %2827 = vmatprep.subr.bf16.mxu0 0
    %2828 = vmatpush1.bf16.msra.mxu0 0
    %2829 = vmatprep.subr.bf16.mxu0 0
    %2830 = vmatpush1.bf16.msra.mxu0 0
    %2831 = vmatprep.subr.bf16.mxu0 0
    %2832 = vmatpush1.bf16.msra.mxu0 0
    %2833 = vmatprep.subr.bf16.mxu0 0
    %2834 = vmatpush1.bf16.msra.mxu0 0
    %2835 = vmatprep.mubr.bf16.mxu0 0
    %2836 = vmatmul.mubr.bf16.gmra.mrb[0].mxu0 %v2802
    %v2837 = vpop.f32.mrb[0].mxu0
    %v2838 = vadd.f32 %v2443, %v2837
    %v2839 = vpop.f32.mrb[0].mxu0
    %v2840 = vpop.f32.mrb[0].mxu0
    %v2841 = vpop.f32.mrb[0].mxu0
    %2842 = vdwg.mxu0
    %v2843 = vadd.f32 %v1830, %v2838
    %v2844 = vxor.u32 %v2843, 2147483648
    %v2845 = vmul.f32 %v2844, 1.442695
    %v2846 = vpow.pop %v2845
    %v2847 = vadd.f32 %v2846, 1.0
    %v2848 = vrcp.pop %v2847
    %v2849 = vmul.f32 1.0, %v2848
    %2850 = vrot.lane.b32.xlu0 %v2849, 64
    %v2851 = vpop.permute.xlu0 %2850
    %v2852 = vmul.f32 %v2851, %v2838
    %v2853 = vadd.f32 %v1830, %v2852
    %v2854 = vtanh.pop %v2853
    %2855 = vrot.lane.b32.xlu0 %v2849, 96
    %v2856 = vpop.permute.xlu0 %2855
    %2857 = vrot.lane.b32.xlu0 %v2854, 64
    %v2858 = vpop.permute.xlu0 %2857
    %v2859 = vsub.f32 1.0, %v2856
    %v2860 = vmul.f32 %v2859, %v2858
    %v2861 = vmul.f32 %v2856, %v2801
    %v2862 = vadd.f32 %v2860, %v2861
    %v2863 = vsel %vm628, %v2862, %v2801
    %v2864 = vpack.c.bf16 %v2863, %v2863
    %2865 = vmatprep.subr.bf16.mxu0 0
    %2866 = vmatpush1.bf16.msra.mxu0 %v2477
    %2867 = vmatprep.subr.bf16.mxu0 0
    %2868 = vmatpush1.bf16.msra.mxu0 %v2478
    %2869 = vmatprep.subr.bf16.mxu0 0
    %2870 = vmatpush1.bf16.msra.mxu0 %v2479
    %2871 = vmatprep.subr.bf16.mxu0 0
    %2872 = vmatpush1.bf16.msra.mxu0 %v2480
    %2873 = vmatprep.subr.bf16.mxu0 0
    %2874 = vmatpush1.bf16.msra.mxu0 %v2481
    %2875 = vmatprep.subr.bf16.mxu0 0
    %2876 = vmatpush1.bf16.msra.mxu0 %v2482
    %2877 = vmatprep.subr.bf16.mxu0 0
    %2878 = vmatpush1.bf16.msra.mxu0 %v2483
    %2879 = vmatprep.subr.bf16.mxu0 0
    %2880 = vmatpush1.bf16.msra.mxu0 %v2484
    %2881 = vmatprep.subr.bf16.mxu0 0
    %2882 = vmatpush1.bf16.msra.mxu0 0
    %2883 = vmatprep.subr.bf16.mxu0 0
    %2884 = vmatpush1.bf16.msra.mxu0 0
    %2885 = vmatprep.subr.bf16.mxu0 0
    %2886 = vmatpush1.bf16.msra.mxu0 0
    %2887 = vmatprep.subr.bf16.mxu0 0
    %2888 = vmatpush1.bf16.msra.mxu0 0
    %2889 = vmatprep.subr.bf16.mxu0 0
    %2890 = vmatpush1.bf16.msra.mxu0 0
    %2891 = vmatprep.subr.bf16.mxu0 0
    %2892 = vmatpush1.bf16.msra.mxu0 0
    %2893 = vmatprep.subr.bf16.mxu0 0
    %2894 = vmatpush1.bf16.msra.mxu0 0
    %2895 = vmatprep.subr.bf16.mxu0 0
    %2896 = vmatpush1.bf16.msra.mxu0 0
    %2897 = vmatprep.mubr.bf16.mxu0 0
    %2898 = vmatmul.mubr.bf16.gmra.mrb[0].mxu0 %v2864
    %v2899 = vpop.f32.mrb[0].mxu0
    %v2900 = vadd.f32 %v2443, %v2899
    %v2901 = vpop.f32.mrb[0].mxu0
    %v2902 = vpop.f32.mrb[0].mxu0
    %v2903 = vpop.f32.mrb[0].mxu0
    %2904 = vdwg.mxu0
    %v2905 = vadd.f32 %v1824, %v2900
    %v2906 = vxor.u32 %v2905, 2147483648
    %v2907 = vmul.f32 %v2906, 1.442695
    %v2908 = vpow.pop %v2907
    %v2909 = vadd.f32 %v2908, 1.0
    %v2910 = vrcp.pop %v2909
    %v2911 = vmul.f32 1.0, %v2910
    %2912 = vrot.lane.b32.xlu0 %v2911, 64
    %v2913 = vpop.permute.xlu0 %2912
    %v2914 = vmul.f32 %v2913, %v2900
    %v2915 = vadd.f32 %v1824, %v2914
    %v2916 = vtanh.pop %v2915
    %2917 = vrot.lane.b32.xlu0 %v2911, 96
    %v2918 = vpop.permute.xlu0 %2917
    %2919 = vrot.lane.b32.xlu0 %v2916, 64
    %v2920 = vpop.permute.xlu0 %2919
    %v2921 = vsub.f32 1.0, %v2918
    %v2922 = vmul.f32 %v2921, %v2920
    %v2923 = vmul.f32 %v2918, %v2863
    %v2924 = vadd.f32 %v2922, %v2923
    %v2925 = vsel %vm558, %v2924, %v2863
    %v2926 = vpack.c.bf16 %v2925, %v2925
    %2927 = vmatprep.subr.bf16.mxu0 0
    %2928 = vmatpush1.bf16.msra.mxu0 %v2477
    %2929 = vmatprep.subr.bf16.mxu0 0
    %2930 = vmatpush1.bf16.msra.mxu0 %v2478
    %2931 = vmatprep.subr.bf16.mxu0 0
    %2932 = vmatpush1.bf16.msra.mxu0 %v2479
    %2933 = vmatprep.subr.bf16.mxu0 0
    %2934 = vmatpush1.bf16.msra.mxu0 %v2480
    %2935 = vmatprep.subr.bf16.mxu0 0
    %2936 = vmatpush1.bf16.msra.mxu0 %v2481
    %2937 = vmatprep.subr.bf16.mxu0 0
    %2938 = vmatpush1.bf16.msra.mxu0 %v2482
    %2939 = vmatprep.subr.bf16.mxu0 0
    %2940 = vmatpush1.bf16.msra.mxu0 %v2483
    %2941 = vmatprep.subr.bf16.mxu0 0
    %2942 = vmatpush1.bf16.msra.mxu0 %v2484
    %2943 = vmatprep.subr.bf16.mxu0 0
    %2944 = vmatpush1.bf16.msra.mxu0 0
    %2945 = vmatprep.subr.bf16.mxu0 0
    %2946 = vmatpush1.bf16.msra.mxu0 0
    %2947 = vmatprep.subr.bf16.mxu0 0
    %2948 = vmatpush1.bf16.msra.mxu0 0
    %2949 = vmatprep.subr.bf16.mxu0 0
    %2950 = vmatpush1.bf16.msra.mxu0 0
    %2951 = vmatprep.subr.bf16.mxu0 0
    %2952 = vmatpush1.bf16.msra.mxu0 0
    %2953 = vmatprep.subr.bf16.mxu0 0
    %2954 = vmatpush1.bf16.msra.mxu0 0
    %2955 = vmatprep.subr.bf16.mxu0 0
    %2956 = vmatpush1.bf16.msra.mxu0 0
    %2957 = vmatprep.subr.bf16.mxu0 0
    %2958 = vmatpush1.bf16.msra.mxu0 0
    %2959 = vmatprep.mubr.bf16.mxu0 0
    %2960 = vmatmul.mubr.bf16.gmra.mrb[0].mxu0 %v2926
    %v2961 = vpop.f32.mrb[0].mxu0
    %v2962 = vadd.f32 %v2443, %v2961
    %v2963 = vpop.f32.mrb[0].mxu0
    %v2964 = vpop.f32.mrb[0].mxu0
    %v2965 = vpop.f32.mrb[0].mxu0
    %2966 = vdwg.mxu0
    %v2967 = vadd.f32 %v1820, %v2962
    %v2968 = vxor.u32 %v2967, 2147483648
    %v2969 = vmul.f32 %v2968, 1.442695
    %v2970 = vpow.pop %v2969
    %v2971 = vadd.f32 %v2970, 1.0
    %v2972 = vrcp.pop %v2971
    %v2973 = vmul.f32 1.0, %v2972
    %2974 = vrot.lane.b32.xlu0 %v2973, 64
    %v2975 = vpop.permute.xlu0 %2974
    %v2976 = vmul.f32 %v2975, %v2962
    %v2977 = vadd.f32 %v1820, %v2976
    %v2978 = vtanh.pop %v2977
    %2979 = vrot.lane.b32.xlu0 %v2973, 96
    %v2980 = vpop.permute.xlu0 %2979
    %2981 = vrot.lane.b32.xlu0 %v2978, 64
    %v2982 = vpop.permute.xlu0 %2981
    %v2983 = vsub.f32 1.0, %v2980
    %v2984 = vmul.f32 %v2983, %v2982
    %v2985 = vmul.f32 %v2980, %v2925
    %v2986 = vadd.f32 %v2984, %v2985
    %v2987 = vsel %vm488, %v2986, %v2925
    %v2988 = vld [vmem:[#allocation11] sm:$0x1]
    %v2990 = vlaneseq
    %v2991 = vshrl.u32 %v2990, 7
    %v2992 = vsub.s32 0, %v2991
    %v2993 = vrot.slane %v2988, %v2992
    %v2995 = vpack.c.bf16 %v2421, %v2421
    %v2996 = vld [vmem:[#allocation10] sm:$0xf]
    %v2997 = vld [vmem:[#allocation10 + $0x4] sm:$0xf]
    %v2998 = vld [vmem:[#allocation10 + $0x8] sm:$0xf]
    %v2999 = vld [vmem:[#allocation10 + $0xc] sm:$0xf]
    %v3000 = vld [vmem:[#allocation10 + $0x10] sm:$0xf]
    %v3001 = vld [vmem:[#allocation10 + $0x14] sm:$0xf]
    %v3002 = vld [vmem:[#allocation10 + $0x18] sm:$0xf]
    %v3003 = vld [vmem:[#allocation10 + $0x1c] sm:$0xf]
    %v3004 = vld [vmem:[#allocation10 + $0x20] sm:$0xf]
    %v3005 = vld [vmem:[#allocation10 + $0x24] sm:$0xf]
    %v3006 = vld [vmem:[#allocation10 + $0x28] sm:$0xf]
    %v3007 = vld [vmem:[#allocation10 + $0x2c] sm:$0xf]
    %v3008 = vld [vmem:[#allocation10 + $0x30] sm:$0xf]
    %v3009 = vld [vmem:[#allocation10 + $0x34] sm:$0xf]
    %v3010 = vld [vmem:[#allocation10 + $0x38] sm:$0xf]
    %v3011 = vld [vmem:[#allocation10 + $0x3c] sm:$0xf]
    %v3028 = vunpack.c.l.b16 %v2996
    %v3029 = vunpack.c.l.b16 %v2997
    %v3030 = vunpack.c.l.b16 %v2998
    %v3031 = vunpack.c.l.b16 %v2999
    %v3032 = vunpack.c.l.b16 %v3000
    %v3033 = vunpack.c.l.b16 %v3001
    %v3034 = vunpack.c.l.b16 %v3002
    %v3035 = vunpack.c.l.b16 %v3003
    %v3036 = vunpack.c.l.b16 %v3004
    %v3037 = vunpack.c.l.b16 %v3005
    %v3038 = vunpack.c.l.b16 %v3006
    %v3039 = vunpack.c.l.b16 %v3007
    %v3040 = vunpack.c.l.b16 %v3008
    %v3041 = vunpack.c.l.b16 %v3009
    %v3042 = vunpack.c.l.b16 %v3010
    %v3043 = vunpack.c.l.b16 %v3011
    %v3044 = vpack.c.b16 %v3029, %v3028
    %v3045 = vpack.c.b16 %v3031, %v3030
    %v3046 = vpack.c.b16 %v3033, %v3032
    %v3047 = vpack.c.b16 %v3035, %v3034
    %v3048 = vpack.c.b16 %v3037, %v3036
    %v3049 = vpack.c.b16 %v3039, %v3038
    %v3050 = vpack.c.b16 %v3041, %v3040
    %v3051 = vpack.c.b16 %v3043, %v3042
    %3060 = vmatprep.subr.bf16.mxu0 0
    %3061 = vmatpush1.bf16.msra.mxu0 %v3044
    %3062 = vmatprep.subr.bf16.mxu0 0
    %3063 = vmatpush1.bf16.msra.mxu0 %v3045
    %3064 = vmatprep.subr.bf16.mxu0 0
    %3065 = vmatpush1.bf16.msra.mxu0 %v3046
    %3066 = vmatprep.subr.bf16.mxu0 0
    %3067 = vmatpush1.bf16.msra.mxu0 %v3047
    %3068 = vmatprep.subr.bf16.mxu0 0
    %3069 = vmatpush1.bf16.msra.mxu0 %v3048
    %3070 = vmatprep.subr.bf16.mxu0 0
    %3071 = vmatpush1.bf16.msra.mxu0 %v3049
    %3072 = vmatprep.subr.bf16.mxu0 0
    %3073 = vmatpush1.bf16.msra.mxu0 %v3050
    %3074 = vmatprep.subr.bf16.mxu0 0
    %3075 = vmatpush1.bf16.msra.mxu0 %v3051
    %3076 = vmatprep.subr.bf16.mxu0 0
    %3077 = vmatpush1.bf16.msra.mxu0 0
    %3078 = vmatprep.subr.bf16.mxu0 0
    %3079 = vmatpush1.bf16.msra.mxu0 0
    %3080 = vmatprep.subr.bf16.mxu0 0
    %3081 = vmatpush1.bf16.msra.mxu0 0
    %3082 = vmatprep.subr.bf16.mxu0 0
    %3083 = vmatpush1.bf16.msra.mxu0 0
    %3084 = vmatprep.subr.bf16.mxu0 0
    %3085 = vmatpush1.bf16.msra.mxu0 0
    %3086 = vmatprep.subr.bf16.mxu0 0
    %3087 = vmatpush1.bf16.msra.mxu0 0
    %3088 = vmatprep.subr.bf16.mxu0 0
    %3089 = vmatpush1.bf16.msra.mxu0 0
    %3090 = vmatprep.subr.bf16.mxu0 0
    %3091 = vmatpush1.bf16.msra.mxu0 0
    %3092 = vmatprep.mubr.bf16.mxu0 0
    %3093 = vmatmul.mubr.bf16.gmra.mrb[0].mxu0 %v2995
    %v3094 = vpop.f32.mrb[0].mxu0
    %v3095 = vadd.f32 0.0, %v3094
    %v3096 = vpop.f32.mrb[0].mxu0
    %v3097 = vpop.f32.mrb[0].mxu0
    %v3098 = vpop.f32.mrb[0].mxu0
    %3099 = vdwg.mxu0
    %v3100 = vadd.f32 %v2993, %v3095
    %v3101 = vpack.c.bf16 %v2987, %v2987
    %v3102 = vld [vmem:[#allocation10 + $0x40] sm:$0xf]
    %v3103 = vld [vmem:[#allocation10 + $0x44] sm:$0xf]
    %v3104 = vld [vmem:[#allocation10 + $0x48] sm:$0xf]
    %v3105 = vld [vmem:[#allocation10 + $0x4c] sm:$0xf]
    %v3106 = vld [vmem:[#allocation10 + $0x50] sm:$0xf]
    %v3107 = vld [vmem:[#allocation10 + $0x54] sm:$0xf]
    %v3108 = vld [vmem:[#allocation10 + $0x58] sm:$0xf]
    %v3109 = vld [vmem:[#allocation10 + $0x5c] sm:$0xf]
    %v3110 = vld [vmem:[#allocation10 + $0x60] sm:$0xf]
    %v3111 = vld [vmem:[#allocation10 + $0x64] sm:$0xf]
    %v3112 = vld [vmem:[#allocation10 + $0x68] sm:$0xf]
    %v3113 = vld [vmem:[#allocation10 + $0x6c] sm:$0xf]
    %v3114 = vld [vmem:[#allocation10 + $0x70] sm:$0xf]
    %v3115 = vld [vmem:[#allocation10 + $0x74] sm:$0xf]
    %v3116 = vld [vmem:[#allocation10 + $0x78] sm:$0xf]
    %v3117 = vld [vmem:[#allocation10 + $0x7c] sm:$0xf]
    %v3134 = vunpack.c.l.b16 %v3102
    %v3135 = vunpack.c.l.b16 %v3103
    %v3136 = vunpack.c.l.b16 %v3104
    %v3137 = vunpack.c.l.b16 %v3105
    %v3138 = vunpack.c.l.b16 %v3106
    %v3139 = vunpack.c.l.b16 %v3107
    %v3140 = vunpack.c.l.b16 %v3108
    %v3141 = vunpack.c.l.b16 %v3109
    %v3142 = vunpack.c.l.b16 %v3110
    %v3143 = vunpack.c.l.b16 %v3111
    %v3144 = vunpack.c.l.b16 %v3112
    %v3145 = vunpack.c.l.b16 %v3113
    %v3146 = vunpack.c.l.b16 %v3114
    %v3147 = vunpack.c.l.b16 %v3115
    %v3148 = vunpack.c.l.b16 %v3116
    %v3149 = vunpack.c.l.b16 %v3117
    %v3150 = vpack.c.b16 %v3135, %v3134
    %v3151 = vpack.c.b16 %v3137, %v3136
    %v3152 = vpack.c.b16 %v3139, %v3138
    %v3153 = vpack.c.b16 %v3141, %v3140
    %v3154 = vpack.c.b16 %v3143, %v3142
    %v3155 = vpack.c.b16 %v3145, %v3144
    %v3156 = vpack.c.b16 %v3147, %v3146
    %v3157 = vpack.c.b16 %v3149, %v3148
    %3166 = vmatprep.subr.bf16.mxu0 0
    %3167 = vmatpush1.bf16.msra.mxu0 %v3150
    %3168 = vmatprep.subr.bf16.mxu0 0
    %3169 = vmatpush1.bf16.msra.mxu0 %v3151
    %3170 = vmatprep.subr.bf16.mxu0 0
    %3171 = vmatpush1.bf16.msra.mxu0 %v3152
    %3172 = vmatprep.subr.bf16.mxu0 0
    %3173 = vmatpush1.bf16.msra.mxu0 %v3153
    %3174 = vmatprep.subr.bf16.mxu0 0
    %3175 = vmatpush1.bf16.msra.mxu0 %v3154
    %3176 = vmatprep.subr.bf16.mxu0 0
    %3177 = vmatpush1.bf16.msra.mxu0 %v3155
    %3178 = vmatprep.subr.bf16.mxu0 0
    %3179 = vmatpush1.bf16.msra.mxu0 %v3156
    %3180 = vmatprep.subr.bf16.mxu0 0
    %3181 = vmatpush1.bf16.msra.mxu0 %v3157
    %3182 = vmatprep.subr.bf16.mxu0 0
    %3183 = vmatpush1.bf16.msra.mxu0 0
    %3184 = vmatprep.subr.bf16.mxu0 0
    %3185 = vmatpush1.bf16.msra.mxu0 0
    %3186 = vmatprep.subr.bf16.mxu0 0
    %3187 = vmatpush1.bf16.msra.mxu0 0
    %3188 = vmatprep.subr.bf16.mxu0 0
    %3189 = vmatpush1.bf16.msra.mxu0 0
    %3190 = vmatprep.subr.bf16.mxu0 0
    %3191 = vmatpush1.bf16.msra.mxu0 0
    %3192 = vmatprep.subr.bf16.mxu0 0
    %3193 = vmatpush1.bf16.msra.mxu0 0
    %3194 = vmatprep.subr.bf16.mxu0 0
    %3195 = vmatpush1.bf16.msra.mxu0 0
    %3196 = vmatprep.subr.bf16.mxu0 0
    %3197 = vmatpush1.bf16.msra.mxu0 0
    %3198 = vmatprep.mubr.bf16.mxu0 0
    %3199 = vmatmul.mubr.bf16.gmra.mrb[0].mxu0 %v3101
    %v3200 = vpop.f32.mrb[0].mxu0
    %v3201 = vadd.f32 0.0, %v3200
    %v3202 = vpop.f32.mrb[0].mxu0
    %v3203 = vpop.f32.mrb[0].mxu0
    %v3204 = vpop.f32.mrb[0].mxu0
    %3205 = vdwg.mxu0
    %v3206 = vadd.f32 %v3100, %v3201
    %3207 = vst [vmem:[%s16] sm:$0xff] %v3206
    // Predicated region
    $region90: #{gru_forward.1} parent=1 // pred_check
      _
    $region91: #{gru_forward.1} parent=1 // pred_check_branch
      %3209 = sbr.rel (0) target = $region93
    $region92: #{gru_forward.1} parent=1 // pred_region
      _
    $region93: #{gru_forward.1} parent=1 // pred_fallthru
      _
    // Predicated region
    $region94: #{gru_forward.1} parent=1 // pred_check
      _
    $region95: #{gru_forward.1} parent=1 // pred_check_branch
      %3211 = sbr.rel (0) target = $region97
    $region96: #{gru_forward.1} parent=1 // pred_region
      _
    $region97: #{gru_forward.1} parent=1 // pred_fallthru
      _
    %3212 = vsyncpa [#allocation4], 1
    %3213 = vsyncpa [#allocation6], 1
    %3214 = vsyncpa [#allocation9], 1
    %3215 = vsyncpa [#allocation12], 1

</llo_original>
